<compile_context>
chip_gen: v6e
topology: v6e:2x2x1
jax: 0.10.0
libtpu: 0.0.40
codegen_flags: <defaults>
</compile_context>

<pallas_src>
import functools
import math

import jax
import jax.numpy as jnp
from jax.experimental import pallas as pl
from jax.experimental.pallas import tpu as pltpu


# ---------------------------------------------------------------------------
# Pallas kernels
# ---------------------------------------------------------------------------

def _conv3x3_kernel(x_ref, w_ref, b_ref, *out_refs, H, Wp, mode):
    """Fused 3x3 conv (stride 1, pad 1) + bias (+ ReLU) for one image.

    x_ref : (1, (H+3)*Wp, Cin) bf16  -- padded image flattened row-major
                                        (Wp = W + 2; one extra zero pad row so
                                        every tap slice stays in bounds)
    w_ref : (9, Cin, Cout)      bf16 -- tap-major weights, t = ky*3 + kx
    b_ref : (1, Cout)           f32
    out_refs : blocks of shape (1, H*Wp, Cout) -- flat outputs on the
               padded-width grid (the 2 junk columns per row are sliced off by
               the wrapper, fusing with the next layer's pad/transpose):
      mode == "relu"   -> (post,)      bf16  ReLU(conv)
      mode == "linear" -> (pre,)       f32   conv only (final tapped layer)
      mode == "both"   -> (pre, post)  f32 tap + bf16 continuation
    """
    cin = x_ref.shape[-1]
    cout = w_ref.shape[-1]
    m = H * Wp
    acc = jnp.zeros((m, cout), jnp.float32)
    # In-kernel im2col: output flat index m' = h*Wp + w needs input flat index
    # m' + ky*Wp + kx for tap (ky, kx).  Only the 1x padded activation is
    # streamed from HBM; all 9 shifted views are VMEM slices.
    for ky in range(3):
        for kx in range(3):
            off = ky * Wp + kx
            patch = x_ref[0, off:off + m, :]                    # (m, Cin)
            acc = acc + jnp.dot(patch, w_ref[ky * 3 + kx],
                                preferred_element_type=jnp.float32)
    acc = acc + b_ref[...]
    if mode == "relu":
        out_refs[0][0] = jnp.maximum(acc, 0.0).astype(out_refs[0].dtype)
    elif mode == "linear":
        out_refs[0][0] = acc.astype(out_refs[0].dtype)
    else:  # "both": pre-ReLU tap (f32) + post-ReLU continuation (bf16)
        out_refs[0][0] = acc.astype(out_refs[0].dtype)
        out_refs[1][0] = jnp.maximum(acc, 0.0).astype(out_refs[1].dtype)


def _pool2x2_kernel(x_ref, o_ref, *, avg):
    """2x2 stride-2 pooling on a tile of output rows.

    x_ref : (1, th, 2, Wh, 2*C)  -- rows grouped in pairs, adjacent columns
                                    folded into the lane axis (free reshape)
    o_ref : (1, th, Wh, C)
    """
    C = o_ref.shape[-1]
    r0 = x_ref[0, :, 0]                      # (th, Wh, 2C)  even rows
    r1 = x_ref[0, :, 1]                      # (th, Wh, 2C)  odd rows
    a, b = r0[..., :C], r0[..., C:]          # even / odd columns
    c, d = r1[..., :C], r1[..., C:]
    if avg:
        s = (a.astype(jnp.float32) + b.astype(jnp.float32)
             + c.astype(jnp.float32) + d.astype(jnp.float32)) * 0.25
        o_ref[0] = s.astype(o_ref.dtype)
    else:
        o_ref[0] = jnp.maximum(jnp.maximum(a, b), jnp.maximum(c, d))


# ---------------------------------------------------------------------------
# Wrappers (layout-only glue around the kernels)
# ---------------------------------------------------------------------------

def _largest_divisor_leq(n, cap):
    cap = max(1, min(n, cap))
    for d in range(cap, 0, -1):
        if n % d == 0:
            return d
    return 1


def conv3x3_same(x_nhwc, w9, b2, mode):
    """3x3 conv, stride 1, padding 1, fused bias (+ ReLU per `mode`).

    x_nhwc: (N, H, W, Cin) bf16;  w9: (9, Cin, Cout) bf16;  b2: (1, Cout) f32.
    mode: "relu"   -> bf16 ReLU(conv)
          "linear" -> f32 conv
          "both"   -> (f32 conv, bf16 ReLU(conv))
    """
    N, H, W, Cin = x_nhwc.shape
    Cout = w9.shape[-1]
    Wp = W + 2
    # Pad: 1 row top, 2 rows bottom (extra zero row keeps every in-kernel tap
    # slice in bounds), 1 col each side.  Flatten rows -> (N, (H+3)*Wp, Cin).
    xp = jnp.pad(x_nhwc, ((0, 0), (1, 2), (1, 1), (0, 0)))
    xf = xp.reshape(N, (H + 3) * Wp, Cin)          # free metadata reshape

    flat_spec = pl.BlockSpec((1, H * Wp, Cout), lambda n: (n, 0, 0))
    if mode == "relu":
        out_shape = jax.ShapeDtypeStruct((N, H * Wp, Cout), jnp.bfloat16)
        out_specs = flat_spec
    elif mode == "linear":
        out_shape = jax.ShapeDtypeStruct((N, H * Wp, Cout), jnp.float32)
        out_specs = flat_spec
    else:  # "both"
        out_shape = (jax.ShapeDtypeStruct((N, H * Wp, Cout), jnp.float32),
                     jax.ShapeDtypeStruct((N, H * Wp, Cout), jnp.bfloat16))
        out_specs = (flat_spec, flat_spec)

    outs = pl.pallas_call(
        functools.partial(_conv3x3_kernel, H=H, Wp=Wp, mode=mode),
        out_shape=out_shape,
        grid=(N,),
        in_specs=[
            # Whole (padded, flattened) image per grid step; weights and bias
            # have constant block indices so they are DMA'd once and stay
            # resident across the grid.
            pl.BlockSpec((1, (H + 3) * Wp, Cin), lambda n: (n, 0, 0)),
            pl.BlockSpec((9, Cin, Cout), lambda n: (0, 0, 0)),
            pl.BlockSpec((1, Cout), lambda n: (0, 0)),
        ],
        out_specs=out_specs,
        compiler_params=pltpu.CompilerParams(
            dimension_semantics=("parallel",),
            vmem_limit_bytes=32 * 1024 * 1024),
    )(xf, w9, b2)

    def unflatten(y):
        # (N, H*Wp, Cout) -> (N, H, Wp, Cout) [free] -> drop 2 junk columns.
        # The slice fuses with the next layer's pad / the tap transpose in XLA.
        return y.reshape(N, H, Wp, Cout)[:, :, :W, :]

    if mode == "both":
        pre, post = outs
        return unflatten(pre), unflatten(post)
    return unflatten(outs)


def pool2x2(x_nhwc, avg=False):
    """2x2 pooling, stride 2, no padding (matches nn.MaxPool2d/AvgPool2d(2,2))."""
    N, H, W, C = x_nhwc.shape
    Hh, Wh = H // 2, W // 2
    x_nhwc = x_nhwc[:, :Hh * 2, :Wh * 2, :]        # floor-mode crop (no-op if even)
    # Free row-major regroup: (N, H, W, C) -> (N, Hh, 2, Wh, 2*C).
    xr = x_nhwc.reshape(N, Hh, 2, Wh, 2 * C)
    # Bound the per-step input block to ~2 MiB of rows.
    bytes_per_row_pair = 2 * Wh * 2 * C * x_nhwc.dtype.itemsize
    th = _largest_divisor_leq(Hh, max(1, (2 * 1024 * 1024) // max(1, bytes_per_row_pair)))

    y = pl.pallas_call(
        functools.partial(_pool2x2_kernel, avg=avg),
        out_shape=jax.ShapeDtypeStruct((N, Hh, Wh, C), x_nhwc.dtype),
        grid=(N, Hh // th),
        in_specs=[pl.BlockSpec((1, th, 2, Wh, 2 * C),
                               lambda n, i: (n, i, 0, 0, 0))],
        out_specs=pl.BlockSpec((1, th, Wh, C), lambda n, i: (n, i, 0, 0)),
        compiler_params=pltpu.CompilerParams(
            dimension_semantics=("parallel", "parallel")),
    )(xr)
    return y


# ---------------------------------------------------------------------------
# VGGModel (JAX / Pallas)
# ---------------------------------------------------------------------------

# VGG19 `features` conv configuration ('M' = 2x2 pool, stride 2).
_VGG19_CFG = [64, 64, 'M', 128, 128, 'M', 256, 256, 256, 256, 'M',
              512, 512, 512, 512, 'M', 512, 512, 512, 512, 'M']


class VGGModelPallas:
    def __init__(self, style_conv, content_conv, avg_pool=False, key=None):
        style_conv = sorted(style_conv, key=lambda x: (x[0], x[1]))
        content_conv = sorted(content_conv, key=lambda x: (x[0], x[1]))
        max_val = max([style_conv[-1], content_conv[-1]], key=lambda x: (x[0], x[1]))
        final_conv = 'conv{}_{}'.format(max_val[0], max_val[1])
        self._style_str = {'conv{}_{}'.format(i[0], i[1]) for i in style_conv}
        self._content_str = {'conv{}_{}'.format(j[0], j[1]) for j in content_conv}
        self._avg_pool = avg_pool

        if key is None:
            key = jax.random.PRNGKey(0)

        # TODO(synk): torchvision's pretrained vgg19 weights cannot be fetched
        # here; deterministic synthetic weights with identical shapes are used.
        self._layers = []          # (name, kind, payload)
        in_ch = 3
        chunk, conv_i = 1, 1
        for v in _VGG19_CFG:
            if v == 'M':
                name = ('avgpool{}' if avg_pool else 'maxpool{}').format(chunk)
                self._layers.append((name, 'pool', None))
                chunk += 1
                conv_i = 1
            else:
                cname = 'conv{}_{}'.format(chunk, conv_i)
                conv_i += 1
                key, wk, bk = jax.random.split(key, 3)
                fan_in = 9 * in_ch
                # Synthetic HWIO weights (PyTorch OIHW would map via
                # w_torch.transpose(2, 3, 1, 0)).
                w = (jax.random.normal(wk, (3, 3, in_ch, v), jnp.float32)
                     * (1.0 / math.sqrt(fan_in)))
                b = jax.random.normal(bk, (v,), jnp.float32) * 0.01
                # Hoisted once: tap-major (9, Cin, Cout) bf16 weights, f32 bias.
                w9 = w.reshape(9, in_ch, v).astype(jnp.bfloat16)
                b2 = b.reshape(1, v).astype(jnp.float32)
                is_final = (cname == final_conv)
                # In VGG19 every conv is followed by a ReLU; the model stops
                # (inclusive) at final_conv, so only that conv skips the ReLU.
                self._layers.append((cname, 'conv', (w9, b2, not is_final)))
                in_ch = v
                if is_final:
                    break

    def __call__(self, x_nchw):
        # Accept NCHW (PyTorch convention); compute in NHWC bf16; taps are the
        # pre-ReLU conv outputs (as in the reference), returned as f32 NCHW.
        x = jnp.transpose(x_nchw, (0, 2, 3, 1)).astype(jnp.bfloat16)
        to_nchw = lambda t: jnp.transpose(t, (0, 3, 1, 2))
        style_list, content_list = [], []
        for name, kind, meta in self._layers:
            tap = None
            if kind == 'conv':
                w9, b2, has_relu = meta
                tapped = (name in self._style_str) or (name in self._content_str)
                if has_relu and not tapped:
                    x = conv3x3_same(x, w9, b2, mode="relu")
                elif has_relu and tapped:
                    tap, x = conv3x3_same(x, w9, b2, mode="both")
                else:  # final conv: no ReLU follows in the truncated model
                    tap = conv3x3_same(x, w9, b2, mode="linear")
                    x = tap
            else:
                x = pool2x2(x, avg=self._avg_pool)
            if tap is not None:
                t = to_nchw(tap.astype(jnp.float32))
                if name in self._style_str:
                    style_list.append(t)
                if name in self._content_str:
                    content_list.append(t)
        return style_list, content_list


# ---------------------------------------------------------------------------
# Main
# ---------------------------------------------------------------------------

if __name__ == "__main__":
    key = jax.random.PRNGKey(0)
    k_in, k_model = jax.random.split(key)

    # style taps at conv1_1, conv2_1; content tap at conv2_2 -> runs through
    # conv1_1, relu1_1(fused), conv1_2, relu1_2(fused), maxpool1,
    # conv2_1, relu2_1(fused), conv2_2.
    style_conv = [(1, 1), (2, 1)]
    content_conv = [(2, 2)]

    model = VGGModelPallas(style_conv, content_conv, avg_pool=False, key=k_model)

    x = jax.random.normal(k_in, (2, 3, 16, 16), jnp.float32)  # NCHW, like PyTorch
    style_list, content_list = model(x)

    for t in style_list + content_list:
        jax.block_until_ready(t)

    assert style_list[0].shape == (2, 64, 16, 16)
    assert style_list[1].shape == (2, 128, 8, 8)
    assert content_list[0].shape == (2, 128, 8, 8)

    print("KERNEL_OK")
</pallas_src>

<mosaic_0001>
module attributes {stable_mosaic.version = 11 : i64} {
  func.func @_conv3x3_kernel(%arg0: i32, %arg1: memref<1x342x3xbf16, #tpu.memory_space<vmem>>, %arg2: memref<9x3x64xbf16, #tpu.memory_space<vmem>>, %arg3: memref<1x64xf32, #tpu.memory_space<vmem>>, %arg4: memref<1x288x64xf32, #tpu.memory_space<vmem>>, %arg5: memref<1x288x64xbf16, #tpu.memory_space<vmem>>) attributes {dimension_semantics = [#tpu.dimension_semantics<parallel>], iteration_bounds = array<i64: 2>, scalar_prefetch = 0 : i64, scratch_operands = 0 : i64, tpu.core_type = #tpu.core_type<tc>, window_params = [{transform_indices = @transform_0, window_bounds = array<i64: 1, 342, 3>}, {pipeline_mode = #tpu.pipeline_mode<synchronous>, transform_indices = @transform_1, window_bounds = array<i64: 9, 3, 64>}, {pipeline_mode = #tpu.pipeline_mode<synchronous>, transform_indices = @transform_2, window_bounds = array<i64: 1, 64>}, {transform_indices = @transform_3, window_bounds = array<i64: 1, 288, 64>}, {transform_indices = @transform_4, window_bounds = array<i64: 1, 288, 64>}]} {
    %cst = arith.constant 0.000000e+00 : f32
    %0 = vector.broadcast %cst : f32 to vector<288x64xf32>
    %c0 = arith.constant 0 : index
    %c0_0 = arith.constant 0 : index
    %c0_1 = arith.constant 0 : index
    %1 = vector.load %arg1[%c0, %c0_0, %c0_1] : memref<1x342x3xbf16, #tpu.memory_space<vmem>>, vector<1x288x3xbf16>
    %2 = vector.shape_cast %1 : vector<1x288x3xbf16> to vector<288x3xbf16>
    %c0_2 = arith.constant 0 : index
    %c0_3 = arith.constant 0 : index
    %c0_4 = arith.constant 0 : index
    %3 = vector.load %arg2[%c0_2, %c0_3, %c0_4] : memref<9x3x64xbf16, #tpu.memory_space<vmem>>, vector<1x3x64xbf16>
    %4 = vector.shape_cast %3 : vector<1x3x64xbf16> to vector<3x64xbf16>
    %cst_5 = arith.constant dense<0.000000e+00> : vector<288x64xf32>
    %5 = tpu.matmul %2, %4, %cst_5 {dimension_numbers = #tpu.dot_dimension_numbers<[1], [0], [0], [1], [0, 0, 1, 1], [], []>} : vector<288x3xbf16>, vector<3x64xbf16>, vector<288x64xf32> -> vector<288x64xf32>
    %6 = arith.addf %0, %5 : vector<288x64xf32>
    %c0_6 = arith.constant 0 : index
    %c1 = arith.constant 1 : index
    %c0_7 = arith.constant 0 : index
    %7 = vector.load %arg1[%c0_6, %c1, %c0_7] : memref<1x342x3xbf16, #tpu.memory_space<vmem>>, vector<1x288x3xbf16>
    %8 = vector.shape_cast %7 : vector<1x288x3xbf16> to vector<288x3xbf16>
    %c1_8 = arith.constant 1 : index
    %c0_9 = arith.constant 0 : index
    %c0_10 = arith.constant 0 : index
    %9 = vector.load %arg2[%c1_8, %c0_9, %c0_10] : memref<9x3x64xbf16, #tpu.memory_space<vmem>>, vector<1x3x64xbf16>
    %10 = vector.shape_cast %9 : vector<1x3x64xbf16> to vector<3x64xbf16>
    %cst_11 = arith.constant dense<0.000000e+00> : vector<288x64xf32>
    %11 = tpu.matmul %8, %10, %cst_11 {dimension_numbers = #tpu.dot_dimension_numbers<[1], [0], [0], [1], [0, 0, 1, 1], [], []>} : vector<288x3xbf16>, vector<3x64xbf16>, vector<288x64xf32> -> vector<288x64xf32>
    %12 = arith.addf %6, %11 : vector<288x64xf32>
    %c0_12 = arith.constant 0 : index
    %c2 = arith.constant 2 : index
    %c0_13 = arith.constant 0 : index
    %13 = vector.load %arg1[%c0_12, %c2, %c0_13] : memref<1x342x3xbf16, #tpu.memory_space<vmem>>, vector<1x288x3xbf16>
    %14 = vector.shape_cast %13 : vector<1x288x3xbf16> to vector<288x3xbf16>
    %c2_14 = arith.constant 2 : index
    %c0_15 = arith.constant 0 : index
    %c0_16 = arith.constant 0 : index
    %15 = vector.load %arg2[%c2_14, %c0_15, %c0_16] : memref<9x3x64xbf16, #tpu.memory_space<vmem>>, vector<1x3x64xbf16>
    %16 = vector.shape_cast %15 : vector<1x3x64xbf16> to vector<3x64xbf16>
    %cst_17 = arith.constant dense<0.000000e+00> : vector<288x64xf32>
    %17 = tpu.matmul %14, %16, %cst_17 {dimension_numbers = #tpu.dot_dimension_numbers<[1], [0], [0], [1], [0, 0, 1, 1], [], []>} : vector<288x3xbf16>, vector<3x64xbf16>, vector<288x64xf32> -> vector<288x64xf32>
    %18 = arith.addf %12, %17 : vector<288x64xf32>
    %c0_18 = arith.constant 0 : index
    %c18 = arith.constant 18 : index
    %c0_19 = arith.constant 0 : index
    %19 = vector.load %arg1[%c0_18, %c18, %c0_19] : memref<1x342x3xbf16, #tpu.memory_space<vmem>>, vector<1x288x3xbf16>
    %20 = vector.shape_cast %19 : vector<1x288x3xbf16> to vector<288x3xbf16>
    %c3 = arith.constant 3 : index
    %c0_20 = arith.constant 0 : index
    %c0_21 = arith.constant 0 : index
    %21 = vector.load %arg2[%c3, %c0_20, %c0_21] : memref<9x3x64xbf16, #tpu.memory_space<vmem>>, vector<1x3x64xbf16>
    %22 = vector.shape_cast %21 : vector<1x3x64xbf16> to vector<3x64xbf16>
    %cst_22 = arith.constant dense<0.000000e+00> : vector<288x64xf32>
    %23 = tpu.matmul %20, %22, %cst_22 {dimension_numbers = #tpu.dot_dimension_numbers<[1], [0], [0], [1], [0, 0, 1, 1], [], []>} : vector<288x3xbf16>, vector<3x64xbf16>, vector<288x64xf32> -> vector<288x64xf32>
    %24 = arith.addf %18, %23 : vector<288x64xf32>
    %c0_23 = arith.constant 0 : index
    %c19 = arith.constant 19 : index
    %c0_24 = arith.constant 0 : index
    %25 = vector.load %arg1[%c0_23, %c19, %c0_24] : memref<1x342x3xbf16, #tpu.memory_space<vmem>>, vector<1x288x3xbf16>
    %26 = vector.shape_cast %25 : vector<1x288x3xbf16> to vector<288x3xbf16>
    %c4 = arith.constant 4 : index
    %c0_25 = arith.constant 0 : index
    %c0_26 = arith.constant 0 : index
    %27 = vector.load %arg2[%c4, %c0_25, %c0_26] : memref<9x3x64xbf16, #tpu.memory_space<vmem>>, vector<1x3x64xbf16>
    %28 = vector.shape_cast %27 : vector<1x3x64xbf16> to vector<3x64xbf16>
    %cst_27 = arith.constant dense<0.000000e+00> : vector<288x64xf32>
    %29 = tpu.matmul %26, %28, %cst_27 {dimension_numbers = #tpu.dot_dimension_numbers<[1], [0], [0], [1], [0, 0, 1, 1], [], []>} : vector<288x3xbf16>, vector<3x64xbf16>, vector<288x64xf32> -> vector<288x64xf32>
    %30 = arith.addf %24, %29 : vector<288x64xf32>
    %c0_28 = arith.constant 0 : index
    %c20 = arith.constant 20 : index
    %c0_29 = arith.constant 0 : index
    %31 = vector.load %arg1[%c0_28, %c20, %c0_29] : memref<1x342x3xbf16, #tpu.memory_space<vmem>>, vector<1x288x3xbf16>
    %32 = vector.shape_cast %31 : vector<1x288x3xbf16> to vector<288x3xbf16>
    %c5 = arith.constant 5 : index
    %c0_30 = arith.constant 0 : index
    %c0_31 = arith.constant 0 : index
    %33 = vector.load %arg2[%c5, %c0_30, %c0_31] : memref<9x3x64xbf16, #tpu.memory_space<vmem>>, vector<1x3x64xbf16>
    %34 = vector.shape_cast %33 : vector<1x3x64xbf16> to vector<3x64xbf16>
    %cst_32 = arith.constant dense<0.000000e+00> : vector<288x64xf32>
    %35 = tpu.matmul %32, %34, %cst_32 {dimension_numbers = #tpu.dot_dimension_numbers<[1], [0], [0], [1], [0, 0, 1, 1], [], []>} : vector<288x3xbf16>, vector<3x64xbf16>, vector<288x64xf32> -> vector<288x64xf32>
    %36 = arith.addf %30, %35 : vector<288x64xf32>
    %c0_33 = arith.constant 0 : index
    %c36 = arith.constant 36 : index
    %c0_34 = arith.constant 0 : index
    %37 = vector.load %arg1[%c0_33, %c36, %c0_34] : memref<1x342x3xbf16, #tpu.memory_space<vmem>>, vector<1x288x3xbf16>
    %38 = vector.shape_cast %37 : vector<1x288x3xbf16> to vector<288x3xbf16>
    %c6 = arith.constant 6 : index
    %c0_35 = arith.constant 0 : index
    %c0_36 = arith.constant 0 : index
    %39 = vector.load %arg2[%c6, %c0_35, %c0_36] : memref<9x3x64xbf16, #tpu.memory_space<vmem>>, vector<1x3x64xbf16>
    %40 = vector.shape_cast %39 : vector<1x3x64xbf16> to vector<3x64xbf16>
    %cst_37 = arith.constant dense<0.000000e+00> : vector<288x64xf32>
    %41 = tpu.matmul %38, %40, %cst_37 {dimension_numbers = #tpu.dot_dimension_numbers<[1], [0], [0], [1], [0, 0, 1, 1], [], []>} : vector<288x3xbf16>, vector<3x64xbf16>, vector<288x64xf32> -> vector<288x64xf32>
    %42 = arith.addf %36, %41 : vector<288x64xf32>
    %c0_38 = arith.constant 0 : index
    %c37 = arith.constant 37 : index
    %c0_39 = arith.constant 0 : index
    %43 = vector.load %arg1[%c0_38, %c37, %c0_39] : memref<1x342x3xbf16, #tpu.memory_space<vmem>>, vector<1x288x3xbf16>
    %44 = vector.shape_cast %43 : vector<1x288x3xbf16> to vector<288x3xbf16>
    %c7 = arith.constant 7 : index
    %c0_40 = arith.constant 0 : index
    %c0_41 = arith.constant 0 : index
    %45 = vector.load %arg2[%c7, %c0_40, %c0_41] : memref<9x3x64xbf16, #tpu.memory_space<vmem>>, vector<1x3x64xbf16>
    %46 = vector.shape_cast %45 : vector<1x3x64xbf16> to vector<3x64xbf16>
    %cst_42 = arith.constant dense<0.000000e+00> : vector<288x64xf32>
    %47 = tpu.matmul %44, %46, %cst_42 {dimension_numbers = #tpu.dot_dimension_numbers<[1], [0], [0], [1], [0, 0, 1, 1], [], []>} : vector<288x3xbf16>, vector<3x64xbf16>, vector<288x64xf32> -> vector<288x64xf32>
    %48 = arith.addf %42, %47 : vector<288x64xf32>
    %c0_43 = arith.constant 0 : index
    %c38 = arith.constant 38 : index
    %c0_44 = arith.constant 0 : index
    %49 = vector.load %arg1[%c0_43, %c38, %c0_44] : memref<1x342x3xbf16, #tpu.memory_space<vmem>>, vector<1x288x3xbf16>
    %50 = vector.shape_cast %49 : vector<1x288x3xbf16> to vector<288x3xbf16>
    %c8 = arith.constant 8 : index
    %c0_45 = arith.constant 0 : index
    %c0_46 = arith.constant 0 : index
    %51 = vector.load %arg2[%c8, %c0_45, %c0_46] : memref<9x3x64xbf16, #tpu.memory_space<vmem>>, vector<1x3x64xbf16>
    %52 = vector.shape_cast %51 : vector<1x3x64xbf16> to vector<3x64xbf16>
    %cst_47 = arith.constant dense<0.000000e+00> : vector<288x64xf32>
    %53 = tpu.matmul %50, %52, %cst_47 {dimension_numbers = #tpu.dot_dimension_numbers<[1], [0], [0], [1], [0, 0, 1, 1], [], []>} : vector<288x3xbf16>, vector<3x64xbf16>, vector<288x64xf32> -> vector<288x64xf32>
    %54 = arith.addf %48, %53 : vector<288x64xf32>
    %c0_48 = arith.constant 0 : index
    %c0_49 = arith.constant 0 : index
    %55 = vector.load %arg3[%c0_48, %c0_49] : memref<1x64xf32, #tpu.memory_space<vmem>>, vector<1x64xf32>
    %56 = vector.broadcast %55 : vector<1x64xf32> to vector<288x64xf32>
    %57 = arith.addf %54, %56 : vector<288x64xf32>
    %c0_50 = arith.constant 0 : index
    %c0_51 = arith.constant 0 : index
    %c0_52 = arith.constant 0 : index
    %58 = vector.load %arg4[%c0_50, %c0_51, %c0_52] : memref<1x288x64xf32, #tpu.memory_space<vmem>>, vector<1x288x64xf32>
    %59 = vector.shape_cast %58 : vector<1x288x64xf32> to vector<288x64xf32>
    %60 = vector.shape_cast %57 : vector<288x64xf32> to vector<1x288x64xf32>
    tpu.vector_store %arg4[%c0_50, %c0_51, %c0_52], %60 {strides = array<i32>} : memref<1x288x64xf32, #tpu.memory_space<vmem>>, vector<1x288x64xf32>,
    %cst_53 = arith.constant 0.000000e+00 : f32
    %61 = vector.broadcast %cst_53 : f32 to vector<288x64xf32>
    %62 = arith.maximumf %57, %61 : vector<288x64xf32>
    %63 = arith.truncf %62 : vector<288x64xf32> to vector<288x64xbf16>
    %c0_54 = arith.constant 0 : index
    %c0_55 = arith.constant 0 : index
    %c0_56 = arith.constant 0 : index
    %64 = vector.load %arg5[%c0_54, %c0_55, %c0_56] : memref<1x288x64xbf16, #tpu.memory_space<vmem>>, vector<1x288x64xbf16>
    %65 = vector.shape_cast %64 : vector<1x288x64xbf16> to vector<288x64xbf16>
    %66 = vector.shape_cast %63 : vector<288x64xbf16> to vector<1x288x64xbf16>
    tpu.vector_store %arg5[%c0_54, %c0_55, %c0_56], %66 {strides = array<i32>} : memref<1x288x64xbf16, #tpu.memory_space<vmem>>, vector<1x288x64xbf16>,
    return
  }
  func.func @transform_0(%arg0: i32) -> (i32, i32, i32) {
    %c0_i32 = arith.constant 0 : i32
    %c0_i32_0 = arith.constant 0 : i32
    %c0_i32_1 = arith.constant 0 : i32
    return %arg0, %c0_i32, %c0_i32_0 : i32, i32, i32
  }
  func.func @transform_1(%arg0: i32) -> (i32, i32, i32) {
    %c0_i32 = arith.constant 0 : i32
    %c0_i32_0 = arith.constant 0 : i32
    %c0_i32_1 = arith.constant 0 : i32
    %c0_i32_2 = arith.constant 0 : i32
    return %c0_i32, %c0_i32_0, %c0_i32_1 : i32, i32, i32
  }
  func.func @transform_2(%arg0: i32) -> (i32, i32) {
    %c0_i32 = arith.constant 0 : i32
    %c0_i32_0 = arith.constant 0 : i32
    %c0_i32_1 = arith.constant 0 : i32
    return %c0_i32, %c0_i32_0 : i32, i32
  }
  func.func @transform_3(%arg0: i32) -> (i32, i32, i32) {
    %c0_i32 = arith.constant 0 : i32
    %c0_i32_0 = arith.constant 0 : i32
    %c0_i32_1 = arith.constant 0 : i32
    return %arg0, %c0_i32, %c0_i32_0 : i32, i32, i32
  }
  func.func @transform_4(%arg0: i32) -> (i32, i32, i32) {
    %c0_i32 = arith.constant 0 : i32
    %c0_i32_0 = arith.constant 0 : i32
    %c0_i32_1 = arith.constant 0 : i32
    return %arg0, %c0_i32, %c0_i32_0 : i32, i32, i32
  }
}

</mosaic_0001>

<llo_original>
// kernel: tpu_custom_call.1
$region0: #{tpu_custom_call.1}
  #allocation0 [shape = 'u32[]', space=smem, size = 0x4, offset = 0x4, fixed_abs, tag = 'smem constant byte address 0x4 - core index']
  #allocation1 [shape = 'u32[144,128]{1,0:T(1,128)}', space=vmem, size = 0x12000, scoped, tag = 'internal scratch']
  %s0 = inlined_call_operand.vmem [shape: bf16[2,342,3], index: 0, kind: input, shape index: {}]
  %s1 = inlined_call_operand.vmem [shape: bf16[9,3,64], index: 1, kind: input, shape index: {}]
  %s2 = inlined_call_operand.vmem [shape: f32[1,64], index: 2, kind: input, shape index: {}]
  %s3 = inlined_call_operand.vmem [shape: f32[2,288,64], index: 3, kind: output, shape index: {0}]
  %s4 = inlined_call_operand.vmem [shape: bf16[2,288,64], index: 4, kind: output, shape index: {1}]
  %5 = xla_tuple %s3, %s4
  %s6 = sld [smem:[#allocation0]]
  $region53: #{tpu_custom_call.1} parent=0
    _
  %s8 = ssub.s32 1, %s6
  %s9 = scalar_select 0, %s8, %s6
  loop: start=0, step=1, limit=4
  $region2: #{tpu_custom_call.1} parent=0 // loop_pre_header
    _
  $region3: #{tpu_custom_call.1} parent=0 // loop_header
    %s11 = sphi 0, %s15
    %p12 = scmp.ge.s32.totalorder %s11, 4
    %s21 = sphi 0, %s23
    %s24 = sphi 0, %s21
    %s25 = sphi 0, %s24
    %s41 = sphi 0, %s25
    %s45 = sphi 0, %s45
    %s47 = sphi 0, %s45
    %s48 = sphi 0, %s47
    %s62 = sphi 0, %s48
    %s66 = sphi 0, %s66
    %s68 = sphi 0, %s66
    %s69 = sphi 0, %s68
    %s83 = sphi 0, %s69
    %s89 = sphi 0, %s91
    %s92 = sphi 0, %s89
    %s93 = sphi 0, %s92
    %s109 = sphi 0, %s93
    %s115 = sphi 0, %s117
    %s118 = sphi 0, %s115
    %s119 = sphi 0, %s118
    %s135 = sphi 0, %s119
  $region4: #{tpu_custom_call.1} parent=0 // loop_header_branch
    %14 = sbr.rel (%p12) target = $region8
  $region5: #{tpu_custom_call.1} parent=0 // loop_body
    %s16 = ssub.s32 %s11, 1
    %s17 = ssub.s32 %s11, 2
    %s18 = sadd.s32 %s11, 1
    %s19 = ssub.s32 %s11, %s18
    %p20 = scmp.eq.s32.totalorder %s19, 0
    %s22 = sadd.s32 %s21, 1
    %s23 = scalar_select %p20, %s21, %s22
    %p26 = pneg %p20
    %p27 = scmp.eq.s32.totalorder %s11, 1
    %p28 = por %p26, %p27
    %p29 = scmp.ne.s32.totalorder %s21, %s24
    %p30 = scmp.eq.s32.totalorder %s11, 0
    %p31 = por %p29, %p30
    %p32 = scmp.ne.s32.totalorder %s21, %s24
    %p33 = scmp.eq.s32.totalorder %s16, 1
    %p34 = por %p32, %p33
    %p35 = scmp.ne.s32.totalorder %s24, %s25
    %p36 = scmp.eq.s32.totalorder %s16, 0
    %p37 = por %p35, %p36
    %p38 = scmp.ne.s32.totalorder %s24, %s25
    %p39 = scmp.eq.s32.totalorder %s17, 1
    %p40 = por %p38, %p39
    %p42 = scmp.ne.s32.totalorder %s25, %s41
    %p43 = scmp.eq.s32.totalorder %s17, 0
    %p44 = por %p42, %p43
    %s46 = sadd.s32 %s45, 1
    %p49 = scmp.eq.s32.totalorder %s11, 1
    %p50 = scmp.ne.s32.totalorder %s45, %s47
    %p51 = scmp.eq.s32.totalorder %s11, 0
    %p52 = por %p50, %p51
    %p53 = scmp.ne.s32.totalorder %s45, %s47
    %p54 = scmp.eq.s32.totalorder %s16, 1
    %p55 = por %p53, %p54
    %p56 = scmp.ne.s32.totalorder %s47, %s48
    %p57 = scmp.eq.s32.totalorder %s16, 0
    %p58 = por %p56, %p57
    %p59 = scmp.ne.s32.totalorder %s47, %s48
    %p60 = scmp.eq.s32.totalorder %s17, 1
    %p61 = por %p59, %p60
    %p63 = scmp.ne.s32.totalorder %s48, %s62
    %p64 = scmp.eq.s32.totalorder %s17, 0
    %p65 = por %p63, %p64
    %s67 = sadd.s32 %s66, 1
    %p70 = scmp.eq.s32.totalorder %s11, 1
    %p71 = scmp.ne.s32.totalorder %s66, %s68
    %p72 = scmp.eq.s32.totalorder %s11, 0
    %p73 = por %p71, %p72
    %p74 = scmp.ne.s32.totalorder %s66, %s68
    %p75 = scmp.eq.s32.totalorder %s16, 1
    %p76 = por %p74, %p75
    %p77 = scmp.ne.s32.totalorder %s68, %s69
    %p78 = scmp.eq.s32.totalorder %s16, 0
    %p79 = por %p77, %p78
    %p80 = scmp.ne.s32.totalorder %s68, %s69
    %p81 = scmp.eq.s32.totalorder %s17, 1
    %p82 = por %p80, %p81
    %p84 = scmp.ne.s32.totalorder %s69, %s83
    %p85 = scmp.eq.s32.totalorder %s17, 0
    %p86 = por %p84, %p85
    %s87 = ssub.s32 %s11, %s18
    %p88 = scmp.eq.s32.totalorder %s87, 0
    %s90 = sadd.s32 %s89, 1
    %s91 = scalar_select %p88, %s89, %s90
    %p94 = pneg %p88
    %p95 = scmp.eq.s32.totalorder %s11, 1
    %p96 = por %p94, %p95
    %p97 = scmp.ne.s32.totalorder %s89, %s92
    %p98 = scmp.eq.s32.totalorder %s11, 0
    %p99 = por %p97, %p98
    %p100 = scmp.ne.s32.totalorder %s89, %s92
    %p101 = scmp.eq.s32.totalorder %s16, 1
    %p102 = por %p100, %p101
    %p103 = scmp.ne.s32.totalorder %s92, %s93
    %p104 = scmp.eq.s32.totalorder %s16, 0
    %p105 = por %p103, %p104
    %p106 = scmp.ne.s32.totalorder %s92, %s93
    %p107 = scmp.eq.s32.totalorder %s17, 1
    %p108 = por %p106, %p107
    %p110 = scmp.ne.s32.totalorder %s93, %s109
    %p111 = scmp.eq.s32.totalorder %s17, 0
    %p112 = por %p110, %p111
    %s113 = ssub.s32 %s11, %s18
    %p114 = scmp.eq.s32.totalorder %s113, 0
    %s116 = sadd.s32 %s115, 1
    %s117 = scalar_select %p114, %s115, %s116
    %p120 = pneg %p114
    %p121 = scmp.eq.s32.totalorder %s11, 1
    %p122 = por %p120, %p121
    %p123 = scmp.ne.s32.totalorder %s115, %s118
    %p124 = scmp.eq.s32.totalorder %s11, 0
    %p125 = por %p123, %p124
    %p126 = scmp.ne.s32.totalorder %s115, %s118
    %p127 = scmp.eq.s32.totalorder %s16, 1
    %p128 = por %p126, %p127
    %p129 = scmp.ne.s32.totalorder %s118, %s119
    %p130 = scmp.eq.s32.totalorder %s16, 0
    %p131 = por %p129, %p130
    %p132 = scmp.ne.s32.totalorder %s118, %s119
    %p133 = scmp.eq.s32.totalorder %s17, 1
    %p134 = por %p132, %p133
    %p136 = scmp.ne.s32.totalorder %s119, %s135
    %p137 = scmp.eq.s32.totalorder %s17, 0
    %p138 = por %p136, %p137
    %p139 = scmp.le.s32.totalorder 1, %s11
    %p140 = scmp.lt.s32.totalorder %s11, 3
    %p141 = pnand %p139, %p140
    %p142 = pneg %p141
    // Predicated region
    $region9: #{tpu_custom_call.1} parent=5 // pred_check
      _
    $region10: #{tpu_custom_call.1} parent=5 // pred_check_branch
      %144 = sbr.rel (%p141) target = $region12
    $region11: #{tpu_custom_call.1} parent=5 // pred_region
      %s145 = ssub.s32 %s11, 1
      // Predicated region
      $region13: #{tpu_custom_call.1} parent=11 // pred_check
        %p146 = pneg %p58
      $region14: #{tpu_custom_call.1} parent=11 // pred_check_branch
        %148 = sbr.rel (%p146) target = $region16
      $region15: #{tpu_custom_call.1} parent=11 // pred_region
        _
      $region16: #{tpu_custom_call.1} parent=11 // pred_fallthru
        _
      // Predicated region
      $region17: #{tpu_custom_call.1} parent=11 // pred_check
        %p149 = pneg %p79
      $region18: #{tpu_custom_call.1} parent=11 // pred_check_branch
        %151 = sbr.rel (%p149) target = $region20
      $region19: #{tpu_custom_call.1} parent=11 // pred_region
        _
      $region20: #{tpu_custom_call.1} parent=11 // pred_fallthru
        _
    $region12: #{tpu_custom_call.1} parent=5 // pred_fallthru
      _
    %p152 = scmp.lt.s32.totalorder %s11, 2
    // Predicated region
    $region21: #{tpu_custom_call.1} parent=5 // pred_check
      %p153 = pneg %p152
    $region22: #{tpu_custom_call.1} parent=5 // pred_check_branch
      %155 = sbr.rel (%p153) target = $region24
    $region23: #{tpu_custom_call.1} parent=5 // pred_region
      // Predicated region
      $region25: #{tpu_custom_call.1} parent=23 // pred_check
        %p156 = pneg %p31
      $region26: #{tpu_custom_call.1} parent=23 // pred_check_branch
        %158 = sbr.rel (%p156) target = $region28
      $region27: #{tpu_custom_call.1} parent=23 // pred_region
        %p159 = scmp.lt.s32.totalorder %s11, 1
        %s160 = scalar_select %p159, %s11, 1
        %s161 = smul.addr %s160, 43
        %s162 = smul.addr %s161, 4
        %s163 = scalar_lea.vmem %s0, %s162
      $region28: #{tpu_custom_call.1} parent=23 // pred_fallthru
        _
    $region24: #{tpu_custom_call.1} parent=5 // pred_fallthru
      _
    %p164 = scmp.le.s32.totalorder 1, %s11
    %p165 = scmp.lt.s32.totalorder %s11, 3
    %p166 = pnand %p164, %p165
    %p167 = pneg %p166
    // Predicated region
    $region29: #{tpu_custom_call.1} parent=5 // pred_check
      _
    $region30: #{tpu_custom_call.1} parent=5 // pred_check_branch
      %169 = sbr.rel (%p166) target = $region32
    $region31: #{tpu_custom_call.1} parent=5 // pred_region
      %s170 = ssub.s32 %s11, 1
      %p171 = scmp.lt.s32.totalorder %s16, 1
      %s172 = scalar_select %p171, %s16, 1
      %s173 = smul.addr %s172, 43
      %s174 = smul.addr %s173, 4
      %s175 = scalar_lea.vmem %s0, %s174
      %p176 = pneg %p37
      %p177 = pneg %p34
      %p178 = pneg %p58
      %p179 = pneg %p55
      %p180 = pneg %p79
      %p181 = pneg %p76
      %p182 = pneg %p105
      %p183 = pneg %p102
      %p184 = scmp.lt.s32.totalorder %s16, 1
      %s185 = scalar_select %p184, %s16, 1
      %s186 = smul.addr %s185, 36
      %s187 = smul.addr %s186, 8
      %s188 = scalar_lea.vmem %s3, %s187
      %p189 = pneg %p131
      %p190 = pneg %p128
      %p191 = scmp.lt.s32.totalorder %s16, 1
      %s192 = scalar_select %p191, %s16, 1
      %s193 = smul.addr %s192, 36
      %s194 = smul.addr %s193, 4
      %s195 = scalar_lea.vmem %s4, %s194
      %p196 = scmp.lt.s32.totalorder %s16, 1
      %s197 = scalar_select %p196, %s16, 1
      %s198 = smul.addr %s197, 43
      %s199 = smul.addr %s198, 4
      %s200 = scalar_lea.vmem %s0, %s199
      %p201 = scmp.lt.s32.totalorder %s16, 1
      %s202 = scalar_select %p201, %s16, 1
      %s203 = smul.addr %s202, 36
      %s204 = smul.addr %s203, 8
      %s205 = scalar_lea.vmem %s3, %s204
      %p206 = scmp.lt.s32.totalorder %s16, 1
      %s207 = scalar_select %p206, %s16, 1
      %s208 = smul.addr %s207, 36
      %s209 = smul.addr %s208, 4
      %s210 = scalar_lea.vmem %s4, %s209
      %v212 = vld [vmem:[%s200] sm:$0xf]
      %v213 = vld [vmem:[%s200 + $0x4] sm:$0xf]
      %v214 = vld [vmem:[%s200 + $0x8] sm:$0xf]
      %v215 = vld [vmem:[%s200 + $0xc] sm:$0xf]
      %v216 = vld [vmem:[%s200 + $0x10] sm:$0xf]
      %v217 = vld [vmem:[%s200 + $0x14] sm:$0xf]
      %v218 = vld [vmem:[%s200 + $0x18] sm:$0xf]
      %v219 = vld [vmem:[%s200 + $0x1c] sm:$0xf]
      %v220 = vld [vmem:[%s200 + $0x20] sm:$0xf]
      %v221 = vld [vmem:[%s200 + $0x24] sm:$0xf]
      %v222 = vld [vmem:[%s200 + $0x28] sm:$0xf]
      %v223 = vld [vmem:[%s200 + $0x2c] sm:$0xf]
      %v224 = vld [vmem:[%s200 + $0x30] sm:$0xf]
      %v225 = vld [vmem:[%s200 + $0x34] sm:$0xf]
      %v226 = vld [vmem:[%s200 + $0x38] sm:$0xf]
      %v227 = vld [vmem:[%s200 + $0x3c] sm:$0xf]
      %v228 = vld [vmem:[%s200 + $0x40] sm:$0xf]
      %v229 = vld [vmem:[%s200 + $0x44] sm:$0xf]
      %v230 = vld [vmem:[%s200 + $0x48] sm:$0xf]
      %v231 = vld [vmem:[%s200 + $0x4c] sm:$0xf]
      %v232 = vld [vmem:[%s200 + $0x50] sm:$0xf]
      %v233 = vld [vmem:[%s200 + $0x54] sm:$0xf]
      %v234 = vld [vmem:[%s200 + $0x58] sm:$0xf]
      %v235 = vld [vmem:[%s200 + $0x5c] sm:$0xf]
      %v236 = vld [vmem:[%s200 + $0x60] sm:$0xf]
      %v237 = vld [vmem:[%s200 + $0x64] sm:$0xf]
      %v238 = vld [vmem:[%s200 + $0x68] sm:$0xf]
      %v239 = vld [vmem:[%s200 + $0x6c] sm:$0xf]
      %v240 = vld [vmem:[%s200 + $0x70] sm:$0xf]
      %v241 = vld [vmem:[%s200 + $0x74] sm:$0xf]
      %v242 = vld [vmem:[%s200 + $0x78] sm:$0xf]
      %v243 = vld [vmem:[%s200 + $0x7c] sm:$0xf]
      %v244 = vld [vmem:[%s200 + $0x80] sm:$0xf]
      %v245 = vld [vmem:[%s200 + $0x84] sm:$0xf]
      %v246 = vld [vmem:[%s200 + $0x88] sm:$0xf]
      %v247 = vld [vmem:[%s200 + $0x8c] sm:$0xf]
      %v248 = vld [vmem:[%s1] sm:$0x3]
      %v249 = vld [vmem:[%s200 + $0x90] sm:$0x1]
      %s250 = scalar_lea.vmem %s1, 2
      %v251 = vld [vmem:[%s250] sm:$0x3]
      %v289 = vunpack.c.l.b16 %v212
      %v290 = vunpack.c.l.b16 %v213
      %v291 = vunpack.c.l.b16 %v214
      %v292 = vunpack.c.l.b16 %v215
      %v293 = vunpack.c.l.b16 %v216
      %v294 = vunpack.c.l.b16 %v217
      %v295 = vunpack.c.l.b16 %v218
      %v296 = vunpack.c.l.b16 %v219
      %v297 = vunpack.c.l.b16 %v220
      %v298 = vunpack.c.l.b16 %v221
      %v299 = vunpack.c.l.b16 %v222
      %v300 = vunpack.c.l.b16 %v223
      %v301 = vunpack.c.l.b16 %v224
      %v302 = vunpack.c.l.b16 %v225
      %v303 = vunpack.c.l.b16 %v226
      %v304 = vunpack.c.l.b16 %v227
      %v305 = vunpack.c.l.b16 %v228
      %v306 = vunpack.c.l.b16 %v229
      %v307 = vunpack.c.l.b16 %v230
      %v308 = vunpack.c.l.b16 %v231
      %v309 = vunpack.c.l.b16 %v232
      %v310 = vunpack.c.l.b16 %v233
      %v311 = vunpack.c.l.b16 %v234
      %v312 = vunpack.c.l.b16 %v235
      %v313 = vunpack.c.l.b16 %v236
      %v314 = vunpack.c.l.b16 %v237
      %v315 = vunpack.c.l.b16 %v238
      %v316 = vunpack.c.l.b16 %v239
      %v317 = vunpack.c.l.b16 %v240
      %v318 = vunpack.c.l.b16 %v241
      %v319 = vunpack.c.l.b16 %v242
      %v320 = vunpack.c.l.b16 %v243
      %v321 = vunpack.c.l.b16 %v244
      %v322 = vunpack.c.l.b16 %v245
      %v323 = vunpack.c.l.b16 %v246
      %v324 = vunpack.c.l.b16 %v247
      %v325 = vunpack.c.l.b16 %v249
      %v326 = vpack.c.b16 %v290, %v289
      %v327 = vpack.c.b16 %v292, %v291
      %v328 = vpack.c.b16 %v294, %v293
      %v329 = vpack.c.b16 %v296, %v295
      %v330 = vpack.c.b16 %v298, %v297
      %v331 = vpack.c.b16 %v300, %v299
      %v332 = vpack.c.b16 %v302, %v301
      %v333 = vpack.c.b16 %v304, %v303
      %v334 = vpack.c.b16 %v306, %v305
      %v335 = vpack.c.b16 %v308, %v307
      %v336 = vpack.c.b16 %v310, %v309
      %v337 = vpack.c.b16 %v312, %v311
      %v338 = vpack.c.b16 %v314, %v313
      %v339 = vpack.c.b16 %v316, %v315
      %v340 = vpack.c.b16 %v318, %v317
      %v341 = vpack.c.b16 %v320, %v319
      %v342 = vpack.c.b16 %v322, %v321
      %v343 = vpack.c.b16 %v324, %v323
      %v344 = vpack.c.b16 %v325, %v325
      %vm345 = vsmask.f32 7424
      %v347 = vshrl.u32 %v326, 16
      %v349 = vshll.u32 %v326, 16
      %v351 = vrot.slane %v349, 1
      %v352 = vor.u32 %v347, %v351
      %v354 = vshll.u32 %v327, 16
      %v356 = vrot.slane %v354, 1
      %v357 = vsel %vm345, %v352, %v356
      %v358 = vshrl.u32 %v327, 16
      %v360 = vor.u32 %v358, %v356
      %v362 = vshll.u32 %v328, 16
      %v364 = vrot.slane %v362, 1
      %v365 = vsel %vm345, %v360, %v364
      %v366 = vshrl.u32 %v328, 16
      %v368 = vor.u32 %v366, %v364
      %v370 = vshll.u32 %v329, 16
      %v372 = vrot.slane %v370, 1
      %v373 = vsel %vm345, %v368, %v372
      %v374 = vshrl.u32 %v329, 16
      %v376 = vor.u32 %v374, %v372
      %v378 = vshll.u32 %v330, 16
      %v380 = vrot.slane %v378, 1
      %v381 = vsel %vm345, %v376, %v380
      %v382 = vshrl.u32 %v330, 16
      %v384 = vor.u32 %v382, %v380
      %v386 = vshll.u32 %v331, 16
      %v388 = vrot.slane %v386, 1
      %v389 = vsel %vm345, %v384, %v388
      %v390 = vshrl.u32 %v331, 16
      %v392 = vor.u32 %v390, %v388
      %v394 = vshll.u32 %v332, 16
      %v396 = vrot.slane %v394, 1
      %v397 = vsel %vm345, %v392, %v396
      %v398 = vshrl.u32 %v332, 16
      %v400 = vor.u32 %v398, %v396
      %v402 = vshll.u32 %v333, 16
      %v404 = vrot.slane %v402, 1
      %v405 = vsel %vm345, %v400, %v404
      %v406 = vshrl.u32 %v333, 16
      %v408 = vor.u32 %v406, %v404
      %v410 = vshll.u32 %v334, 16
      %v412 = vrot.slane %v410, 1
      %v413 = vsel %vm345, %v408, %v412
      %v414 = vshrl.u32 %v334, 16
      %v416 = vor.u32 %v414, %v412
      %v418 = vshll.u32 %v335, 16
      %v420 = vrot.slane %v418, 1
      %v421 = vsel %vm345, %v416, %v420
      %v422 = vshrl.u32 %v335, 16
      %v424 = vor.u32 %v422, %v420
      %v426 = vshll.u32 %v336, 16
      %v428 = vrot.slane %v426, 1
      %v429 = vsel %vm345, %v424, %v428
      %v430 = vshrl.u32 %v336, 16
      %v432 = vor.u32 %v430, %v428
      %v434 = vshll.u32 %v337, 16
      %v436 = vrot.slane %v434, 1
      %v437 = vsel %vm345, %v432, %v436
      %v438 = vshrl.u32 %v337, 16
      %v440 = vor.u32 %v438, %v436
      %v442 = vshll.u32 %v338, 16
      %v444 = vrot.slane %v442, 1
      %v445 = vsel %vm345, %v440, %v444
      %v446 = vshrl.u32 %v338, 16
      %v448 = vor.u32 %v446, %v444
      %v450 = vshll.u32 %v339, 16
      %v452 = vrot.slane %v450, 1
      %v453 = vsel %vm345, %v448, %v452
      %v454 = vshrl.u32 %v339, 16
      %v456 = vor.u32 %v454, %v452
      %v458 = vshll.u32 %v340, 16
      %v460 = vrot.slane %v458, 1
      %v461 = vsel %vm345, %v456, %v460
      %v462 = vshrl.u32 %v340, 16
      %v464 = vor.u32 %v462, %v460
      %v466 = vshll.u32 %v341, 16
      %v468 = vrot.slane %v466, 1
      %v469 = vsel %vm345, %v464, %v468
      %v470 = vshrl.u32 %v341, 16
      %v472 = vor.u32 %v470, %v468
      %v474 = vshll.u32 %v342, 16
      %v476 = vrot.slane %v474, 1
      %v477 = vsel %vm345, %v472, %v476
      %v478 = vshrl.u32 %v342, 16
      %v480 = vor.u32 %v478, %v476
      %v482 = vshll.u32 %v343, 16
      %v484 = vrot.slane %v482, 1
      %v485 = vsel %vm345, %v480, %v484
      %v486 = vshrl.u32 %v343, 16
      %v488 = vor.u32 %v486, %v484
      %v490 = vshll.u32 %v344, 16
      %v492 = vrot.slane %v490, 1
      %v493 = vsel %vm345, %v488, %v492
      %vm494 = vcmask 23552
      %v496 = vsel %vm494, %v357, 0
      %v499 = vsel %vm494, %v365, 0
      %v502 = vsel %vm494, %v373, 0
      %v505 = vsel %vm494, %v381, 0
      %v508 = vsel %vm494, %v389, 0
      %v511 = vsel %vm494, %v397, 0
      %v514 = vsel %vm494, %v405, 0
      %v517 = vsel %vm494, %v413, 0
      %v520 = vsel %vm494, %v421, 0
      %v523 = vsel %vm494, %v429, 0
      %v526 = vsel %vm494, %v437, 0
      %v529 = vsel %vm494, %v445, 0
      %v532 = vsel %vm494, %v453, 0
      %v535 = vsel %vm494, %v461, 0
      %v538 = vsel %vm494, %v469, 0
      %v541 = vsel %vm494, %v477, 0
      %v544 = vsel %vm494, %v485, 0
      %v547 = vsel %vm494, %v493, 0
      %vm549 = vcmask 1040384
      %vm550 = vcmask 1041408
      %v551 = vsel %vm549, 4294967295, 65535
      %v552 = vsel %vm550, %v551, 0
      %v554 = vand.u32 %v251, %v552
      %556 = vmatprep.subr.bf16.mxu0 0
      %557 = vmatpush1.bf16.msra.mxu0 0
      %558 = vmatprep.subr.bf16.mxu0 0
      %559 = vmatpush1.bf16.msra.mxu0 0
      %560 = vmatprep.subr.bf16.mxu0 0
      %561 = vmatpush1.bf16.msra.mxu0 0
      %562 = vmatprep.subr.bf16.mxu0 0
      %563 = vmatpush1.bf16.msra.mxu0 0
      %564 = vmatprep.subr.bf16.mxu0 0
      %565 = vmatpush1.bf16.msra.mxu0 0
      %566 = vmatprep.subr.bf16.mxu0 0
      %567 = vmatpush1.bf16.msra.mxu0 0
      %568 = vmatprep.subr.bf16.mxu0 0
      %569 = vmatpush1.bf16.msra.mxu0 0
      %570 = vmatprep.subr.bf16.mxu0 0
      %571 = vmatpush1.bf16.msra.mxu0 %v554
      %572 = vmatprep.subr.bf16.mxu0 0
      %573 = vmatpush2.bf16.msra.mxu0 0
      %574 = vmatprep.subr.bf16.mxu0 0
      %575 = vmatpush2.bf16.msra.mxu0 0
      %576 = vmatprep.subr.bf16.mxu0 0
      %577 = vmatpush2.bf16.msra.mxu0 0
      %578 = vmatprep.subr.bf16.mxu0 0
      %579 = vmatpush2.bf16.msra.mxu0 0
      %580 = vmatprep.subr.bf16.mxu0 0
      %581 = vmatpush2.bf16.msra.mxu0 0
      %582 = vmatprep.subr.bf16.mxu0 0
      %583 = vmatpush2.bf16.msra.mxu0 0
      %584 = vmatprep.subr.bf16.mxu0 0
      %585 = vmatpush2.bf16.msra.mxu0 0
      %586 = vmatprep.subr.bf16.mxu0 0
      %587 = vmatpush2.bf16.msra.mxu0 0
      %588 = vmatprep.mubr.bf16.mxu0 0
      %589 = vmatmul.mubr.bf16.gmra.mxu0 %v496
      %v590 = vpop.f32.mrf.mxu0
      %v591 = vadd.f32 0.0, %v590
      %v592 = vpop.f32.mrf.mxu0
      %v593 = vpop.f32.mrf.mxu0
      %v594 = vadd.f32 0.0, %v593
      %v595 = vpop.f32.mrf.mxu0
      %596 = vmatprep.mubr.bf16.mxu0 0
      %597 = vmatmul.mubr.bf16.gmra.mxu0 %v499
      %v598 = vpop.f32.mrf.mxu0
      %v599 = vadd.f32 0.0, %v598
      %v600 = vpop.f32.mrf.mxu0
      %v601 = vpop.f32.mrf.mxu0
      %v602 = vadd.f32 0.0, %v601
      %v603 = vpop.f32.mrf.mxu0
      %604 = vmatprep.mubr.bf16.mxu0 0
      %605 = vmatmul.mubr.bf16.gmra.mxu0 %v502
      %v606 = vpop.f32.mrf.mxu0
      %v607 = vadd.f32 0.0, %v606
      %v608 = vpop.f32.mrf.mxu0
      %v609 = vpop.f32.mrf.mxu0
      %v610 = vadd.f32 0.0, %v609
      %v611 = vpop.f32.mrf.mxu0
      %612 = vmatprep.mubr.bf16.mxu0 0
      %613 = vmatmul.mubr.bf16.gmra.mxu0 %v505
      %v614 = vpop.f32.mrf.mxu0
      %v615 = vadd.f32 0.0, %v614
      %v616 = vpop.f32.mrf.mxu0
      %v617 = vpop.f32.mrf.mxu0
      %v618 = vadd.f32 0.0, %v617
      %v619 = vpop.f32.mrf.mxu0
      %620 = vmatprep.mubr.bf16.mxu0 0
      %621 = vmatmul.mubr.bf16.gmra.mxu0 %v508
      %v622 = vpop.f32.mrf.mxu0
      %v623 = vadd.f32 0.0, %v622
      %v624 = vpop.f32.mrf.mxu0
      %v625 = vpop.f32.mrf.mxu0
      %v626 = vadd.f32 0.0, %v625
      %v627 = vpop.f32.mrf.mxu0
      %628 = vmatprep.mubr.bf16.mxu0 0
      %629 = vmatmul.mubr.bf16.gmra.mxu0 %v511
      %v630 = vpop.f32.mrf.mxu0
      %v631 = vadd.f32 0.0, %v630
      %v632 = vpop.f32.mrf.mxu0
      %v633 = vpop.f32.mrf.mxu0
      %v634 = vadd.f32 0.0, %v633
      %v635 = vpop.f32.mrf.mxu0
      %636 = vmatprep.mubr.bf16.mxu0 0
      %637 = vmatmul.mubr.bf16.gmra.mxu0 %v514
      %v638 = vpop.f32.mrf.mxu0
      %v639 = vadd.f32 0.0, %v638
      %v640 = vpop.f32.mrf.mxu0
      %v641 = vpop.f32.mrf.mxu0
      %v642 = vadd.f32 0.0, %v641
      %v643 = vpop.f32.mrf.mxu0
      %644 = vmatprep.mubr.bf16.mxu0 0
      %645 = vmatmul.mubr.bf16.gmra.mxu0 %v517
      %v646 = vpop.f32.mrf.mxu0
      %v647 = vadd.f32 0.0, %v646
      %v648 = vpop.f32.mrf.mxu0
      %v649 = vpop.f32.mrf.mxu0
      %v650 = vadd.f32 0.0, %v649
      %v651 = vpop.f32.mrf.mxu0
      %652 = vmatprep.mubr.bf16.mxu0 0
      %653 = vmatmul.mubr.bf16.gmra.mxu0 %v520
      %v654 = vpop.f32.mrf.mxu0
      %v655 = vadd.f32 0.0, %v654
      %v656 = vpop.f32.mrf.mxu0
      %v657 = vpop.f32.mrf.mxu0
      %v658 = vadd.f32 0.0, %v657
      %v659 = vpop.f32.mrf.mxu0
      %660 = vmatprep.mubr.bf16.mxu0 0
      %661 = vmatmul.mubr.bf16.gmra.mxu0 %v523
      %v662 = vpop.f32.mrf.mxu0
      %v663 = vadd.f32 0.0, %v662
      %v664 = vpop.f32.mrf.mxu0
      %v665 = vpop.f32.mrf.mxu0
      %v666 = vadd.f32 0.0, %v665
      %v667 = vpop.f32.mrf.mxu0
      %668 = vmatprep.mubr.bf16.mxu0 0
      %669 = vmatmul.mubr.bf16.gmra.mxu0 %v526
      %v670 = vpop.f32.mrf.mxu0
      %v671 = vadd.f32 0.0, %v670
      %v672 = vpop.f32.mrf.mxu0
      %v673 = vpop.f32.mrf.mxu0
      %v674 = vadd.f32 0.0, %v673
      %v675 = vpop.f32.mrf.mxu0
      %676 = vmatprep.mubr.bf16.mxu0 0
      %677 = vmatmul.mubr.bf16.gmra.mxu0 %v529
      %v678 = vpop.f32.mrf.mxu0
      %v679 = vadd.f32 0.0, %v678
      %v680 = vpop.f32.mrf.mxu0
      %v681 = vpop.f32.mrf.mxu0
      %v682 = vadd.f32 0.0, %v681
      %v683 = vpop.f32.mrf.mxu0
      %684 = vmatprep.mubr.bf16.mxu0 0
      %685 = vmatmul.mubr.bf16.gmra.mxu0 %v532
      %v686 = vpop.f32.mrf.mxu0
      %v687 = vadd.f32 0.0, %v686
      %v688 = vpop.f32.mrf.mxu0
      %v689 = vpop.f32.mrf.mxu0
      %v690 = vadd.f32 0.0, %v689
      %v691 = vpop.f32.mrf.mxu0
      %692 = vmatprep.mubr.bf16.mxu0 0
      %693 = vmatmul.mubr.bf16.gmra.mxu0 %v535
      %v694 = vpop.f32.mrf.mxu0
      %v695 = vadd.f32 0.0, %v694
      %v696 = vpop.f32.mrf.mxu0
      %v697 = vpop.f32.mrf.mxu0
      %v698 = vadd.f32 0.0, %v697
      %v699 = vpop.f32.mrf.mxu0
      %700 = vmatprep.mubr.bf16.mxu0 0
      %701 = vmatmul.mubr.bf16.gmra.mxu0 %v538
      %v702 = vpop.f32.mrf.mxu0
      %v703 = vadd.f32 0.0, %v702
      %v704 = vpop.f32.mrf.mxu0
      %v705 = vpop.f32.mrf.mxu0
      %v706 = vadd.f32 0.0, %v705
      %v707 = vpop.f32.mrf.mxu0
      %708 = vmatprep.mubr.bf16.mxu0 0
      %709 = vmatmul.mubr.bf16.gmra.mxu0 %v541
      %v710 = vpop.f32.mrf.mxu0
      %v711 = vadd.f32 0.0, %v710
      %v712 = vpop.f32.mrf.mxu0
      %v713 = vpop.f32.mrf.mxu0
      %v714 = vadd.f32 0.0, %v713
      %v715 = vpop.f32.mrf.mxu0
      %716 = vmatprep.mubr.bf16.mxu0 0
      %717 = vmatmul.mubr.bf16.gmra.mxu0 %v544
      %v718 = vpop.f32.mrf.mxu0
      %v719 = vadd.f32 0.0, %v718
      %v720 = vpop.f32.mrf.mxu0
      %v721 = vpop.f32.mrf.mxu0
      %v722 = vadd.f32 0.0, %v721
      %v723 = vpop.f32.mrf.mxu0
      %724 = vmatprep.mubr.bf16.mxu0 0
      %725 = vmatmul.mubr.bf16.gmra.mxu0 %v547
      %v726 = vpop.f32.mrf.mxu0
      %v727 = vadd.f32 0.0, %v726
      %v728 = vpop.f32.mrf.mxu0
      %v729 = vpop.f32.mrf.mxu0
      %v730 = vadd.f32 0.0, %v729
      %v731 = vpop.f32.mrf.mxu0
      %732 = vdwg.mxu0
      %v733 = vsel %vm494, %v326, 0
      %v735 = vsel %vm494, %v327, 0
      %v737 = vsel %vm494, %v328, 0
      %v739 = vsel %vm494, %v329, 0
      %v741 = vsel %vm494, %v330, 0
      %v743 = vsel %vm494, %v331, 0
      %v745 = vsel %vm494, %v332, 0
      %v747 = vsel %vm494, %v333, 0
      %v749 = vsel %vm494, %v334, 0
      %v751 = vsel %vm494, %v335, 0
      %v753 = vsel %vm494, %v336, 0
      %v755 = vsel %vm494, %v337, 0
      %v757 = vsel %vm494, %v338, 0
      %v759 = vsel %vm494, %v339, 0
      %v761 = vsel %vm494, %v340, 0
      %v763 = vsel %vm494, %v341, 0
      %v765 = vsel %vm494, %v342, 0
      %v767 = vsel %vm494, %v343, 0
      %v770 = vand.u32 %v248, %v552
      %772 = vmatprep.subr.bf16.mxu0 0
      %773 = vmatpush1.bf16.msra.mxu0 0
      %774 = vmatprep.subr.bf16.mxu0 0
      %775 = vmatpush1.bf16.msra.mxu0 0
      %776 = vmatprep.subr.bf16.mxu0 0
      %777 = vmatpush1.bf16.msra.mxu0 0
      %778 = vmatprep.subr.bf16.mxu0 0
      %779 = vmatpush1.bf16.msra.mxu0 0
      %780 = vmatprep.subr.bf16.mxu0 0
      %781 = vmatpush1.bf16.msra.mxu0 0
      %782 = vmatprep.subr.bf16.mxu0 0
      %783 = vmatpush1.bf16.msra.mxu0 0
      %784 = vmatprep.subr.bf16.mxu0 0
      %785 = vmatpush1.bf16.msra.mxu0 0
      %786 = vmatprep.subr.bf16.mxu0 0
      %787 = vmatpush1.bf16.msra.mxu0 %v770
      %788 = vmatprep.subr.bf16.mxu0 0
      %789 = vmatpush2.bf16.msra.mxu0 0
      %790 = vmatprep.subr.bf16.mxu0 0
      %791 = vmatpush2.bf16.msra.mxu0 0
      %792 = vmatprep.subr.bf16.mxu0 0
      %793 = vmatpush2.bf16.msra.mxu0 0
      %794 = vmatprep.subr.bf16.mxu0 0
      %795 = vmatpush2.bf16.msra.mxu0 0
      %796 = vmatprep.subr.bf16.mxu0 0
      %797 = vmatpush2.bf16.msra.mxu0 0
      %798 = vmatprep.subr.bf16.mxu0 0
      %799 = vmatpush2.bf16.msra.mxu0 0
      %800 = vmatprep.subr.bf16.mxu0 0
      %801 = vmatpush2.bf16.msra.mxu0 0
      %802 = vmatprep.subr.bf16.mxu0 0
      %803 = vmatpush2.bf16.msra.mxu0 0
      %804 = vmatprep.mubr.bf16.mxu0 0
      %805 = vmatmul.mubr.bf16.gmra.mxu0 %v733
      %v806 = vpop.f32.mrf.mxu0
      %v807 = vadd.f32 %v591, %v806
      %v808 = vpop.f32.mrf.mxu0
      %v809 = vpop.f32.mrf.mxu0
      %v810 = vadd.f32 %v594, %v809
      %v811 = vpop.f32.mrf.mxu0
      %812 = vmatprep.mubr.bf16.mxu0 0
      %813 = vmatmul.mubr.bf16.gmra.mxu0 %v735
      %v814 = vpop.f32.mrf.mxu0
      %v815 = vadd.f32 %v599, %v814
      %v816 = vpop.f32.mrf.mxu0
      %v817 = vpop.f32.mrf.mxu0
      %v818 = vadd.f32 %v602, %v817
      %v819 = vpop.f32.mrf.mxu0
      %820 = vmatprep.mubr.bf16.mxu0 0
      %821 = vmatmul.mubr.bf16.gmra.mxu0 %v737
      %v822 = vpop.f32.mrf.mxu0
      %v823 = vadd.f32 %v607, %v822
      %v824 = vpop.f32.mrf.mxu0
      %v825 = vpop.f32.mrf.mxu0
      %v826 = vadd.f32 %v610, %v825
      %v827 = vpop.f32.mrf.mxu0
      %828 = vmatprep.mubr.bf16.mxu0 0
      %829 = vmatmul.mubr.bf16.gmra.mxu0 %v739
      %v830 = vpop.f32.mrf.mxu0
      %v831 = vadd.f32 %v615, %v830
      %v832 = vpop.f32.mrf.mxu0
      %v833 = vpop.f32.mrf.mxu0
      %v834 = vadd.f32 %v618, %v833
      %v835 = vpop.f32.mrf.mxu0
      %836 = vmatprep.mubr.bf16.mxu0 0
      %837 = vmatmul.mubr.bf16.gmra.mxu0 %v741
      %v838 = vpop.f32.mrf.mxu0
      %v839 = vadd.f32 %v623, %v838
      %v840 = vpop.f32.mrf.mxu0
      %v841 = vpop.f32.mrf.mxu0
      %v842 = vadd.f32 %v626, %v841
      %v843 = vpop.f32.mrf.mxu0
      %844 = vmatprep.mubr.bf16.mxu0 0
      %845 = vmatmul.mubr.bf16.gmra.mxu0 %v743
      %v846 = vpop.f32.mrf.mxu0
      %v847 = vadd.f32 %v631, %v846
      %v848 = vpop.f32.mrf.mxu0
      %v849 = vpop.f32.mrf.mxu0
      %v850 = vadd.f32 %v634, %v849
      %v851 = vpop.f32.mrf.mxu0
      %852 = vmatprep.mubr.bf16.mxu0 0
      %853 = vmatmul.mubr.bf16.gmra.mxu0 %v745
      %v854 = vpop.f32.mrf.mxu0
      %v855 = vadd.f32 %v639, %v854
      %v856 = vpop.f32.mrf.mxu0
      %v857 = vpop.f32.mrf.mxu0
      %v858 = vadd.f32 %v642, %v857
      %v859 = vpop.f32.mrf.mxu0
      %860 = vmatprep.mubr.bf16.mxu0 0
      %861 = vmatmul.mubr.bf16.gmra.mxu0 %v747
      %v862 = vpop.f32.mrf.mxu0
      %v863 = vadd.f32 %v647, %v862
      %v864 = vpop.f32.mrf.mxu0
      %v865 = vpop.f32.mrf.mxu0
      %v866 = vadd.f32 %v650, %v865
      %v867 = vpop.f32.mrf.mxu0
      %868 = vmatprep.mubr.bf16.mxu0 0
      %869 = vmatmul.mubr.bf16.gmra.mxu0 %v749
      %v870 = vpop.f32.mrf.mxu0
      %v871 = vadd.f32 %v655, %v870
      %v872 = vpop.f32.mrf.mxu0
      %v873 = vpop.f32.mrf.mxu0
      %v874 = vadd.f32 %v658, %v873
      %v875 = vpop.f32.mrf.mxu0
      %876 = vmatprep.mubr.bf16.mxu0 0
      %877 = vmatmul.mubr.bf16.gmra.mxu0 %v751
      %v878 = vpop.f32.mrf.mxu0
      %v879 = vadd.f32 %v663, %v878
      %v880 = vpop.f32.mrf.mxu0
      %v881 = vpop.f32.mrf.mxu0
      %v882 = vadd.f32 %v666, %v881
      %v883 = vpop.f32.mrf.mxu0
      %884 = vmatprep.mubr.bf16.mxu0 0
      %885 = vmatmul.mubr.bf16.gmra.mxu0 %v753
      %v886 = vpop.f32.mrf.mxu0
      %v887 = vadd.f32 %v671, %v886
      %v888 = vpop.f32.mrf.mxu0
      %v889 = vpop.f32.mrf.mxu0
      %v890 = vadd.f32 %v674, %v889
      %v891 = vpop.f32.mrf.mxu0
      %892 = vmatprep.mubr.bf16.mxu0 0
      %893 = vmatmul.mubr.bf16.gmra.mxu0 %v755
      %v894 = vpop.f32.mrf.mxu0
      %v895 = vadd.f32 %v679, %v894
      %v896 = vpop.f32.mrf.mxu0
      %v897 = vpop.f32.mrf.mxu0
      %v898 = vadd.f32 %v682, %v897
      %v899 = vpop.f32.mrf.mxu0
      %900 = vmatprep.mubr.bf16.mxu0 0
      %901 = vmatmul.mubr.bf16.gmra.mxu0 %v757
      %v902 = vpop.f32.mrf.mxu0
      %v903 = vadd.f32 %v687, %v902
      %v904 = vpop.f32.mrf.mxu0
      %v905 = vpop.f32.mrf.mxu0
      %v906 = vadd.f32 %v690, %v905
      %v907 = vpop.f32.mrf.mxu0
      %908 = vmatprep.mubr.bf16.mxu0 0
      %909 = vmatmul.mubr.bf16.gmra.mxu0 %v759
      %v910 = vpop.f32.mrf.mxu0
      %v911 = vadd.f32 %v695, %v910
      %v912 = vpop.f32.mrf.mxu0
      %v913 = vpop.f32.mrf.mxu0
      %v914 = vadd.f32 %v698, %v913
      %v915 = vpop.f32.mrf.mxu0
      %916 = vmatprep.mubr.bf16.mxu0 0
      %917 = vmatmul.mubr.bf16.gmra.mxu0 %v761
      %v918 = vpop.f32.mrf.mxu0
      %v919 = vadd.f32 %v703, %v918
      %v920 = vpop.f32.mrf.mxu0
      %v921 = vpop.f32.mrf.mxu0
      %v922 = vadd.f32 %v706, %v921
      %v923 = vpop.f32.mrf.mxu0
      %924 = vmatprep.mubr.bf16.mxu0 0
      %925 = vmatmul.mubr.bf16.gmra.mxu0 %v763
      %v926 = vpop.f32.mrf.mxu0
      %v927 = vadd.f32 %v711, %v926
      %v928 = vpop.f32.mrf.mxu0
      %v929 = vpop.f32.mrf.mxu0
      %v930 = vadd.f32 %v714, %v929
      %v931 = vpop.f32.mrf.mxu0
      %932 = vmatprep.mubr.bf16.mxu0 0
      %933 = vmatmul.mubr.bf16.gmra.mxu0 %v765
      %v934 = vpop.f32.mrf.mxu0
      %v935 = vadd.f32 %v719, %v934
      %v936 = vpop.f32.mrf.mxu0
      %v937 = vpop.f32.mrf.mxu0
      %v938 = vadd.f32 %v722, %v937
      %v939 = vpop.f32.mrf.mxu0
      %940 = vmatprep.mubr.bf16.mxu0 0
      %941 = vmatmul.mubr.bf16.gmra.mxu0 %v767
      %v942 = vpop.f32.mrf.mxu0
      %v943 = vadd.f32 %v727, %v942
      %v944 = vpop.f32.mrf.mxu0
      %v945 = vpop.f32.mrf.mxu0
      %v946 = vadd.f32 %v730, %v945
      %v947 = vpop.f32.mrf.mxu0
      %948 = vdwg.mxu0
      %v949 = vld [vmem:[%s200] sm:$0xe]
      %s950 = scalar_lea.vmem %s1, 4
      %v951 = vld [vmem:[%s950] sm:$0x3]
      %v953 = vunpack.c.l.b16 %v949
      %v954 = vpack.c.b16 %v290, %v953
      %vm955 = vcmask 1046528
      %v956 = vrot.slane %v954, 1
      %v957 = vrot.slane %v327, 1
      %v958 = vsel %vm955, %v956, %v957
      %v959 = vrot.slane %v328, 1
      %v960 = vsel %vm955, %v957, %v959
      %v961 = vrot.slane %v329, 1
      %v962 = vsel %vm955, %v959, %v961
      %v963 = vrot.slane %v330, 1
      %v964 = vsel %vm955, %v961, %v963
      %v965 = vrot.slane %v331, 1
      %v966 = vsel %vm955, %v963, %v965
      %v967 = vrot.slane %v332, 1
      %v968 = vsel %vm955, %v965, %v967
      %v969 = vrot.slane %v333, 1
      %v970 = vsel %vm955, %v967, %v969
      %v971 = vrot.slane %v334, 1
      %v972 = vsel %vm955, %v969, %v971
      %v973 = vrot.slane %v335, 1
      %v974 = vsel %vm955, %v971, %v973
      %v975 = vrot.slane %v336, 1
      %v976 = vsel %vm955, %v973, %v975
      %v977 = vrot.slane %v337, 1
      %v978 = vsel %vm955, %v975, %v977
      %v979 = vrot.slane %v338, 1
      %v980 = vsel %vm955, %v977, %v979
      %v981 = vrot.slane %v339, 1
      %v982 = vsel %vm955, %v979, %v981
      %v983 = vrot.slane %v340, 1
      %v984 = vsel %vm955, %v981, %v983
      %v985 = vrot.slane %v341, 1
      %v986 = vsel %vm955, %v983, %v985
      %v987 = vrot.slane %v342, 1
      %v988 = vsel %vm955, %v985, %v987
      %v989 = vrot.slane %v343, 1
      %v990 = vsel %vm955, %v987, %v989
      %v991 = vrot.slane %v344, 1
      %v992 = vsel %vm955, %v989, %v991
      %v994 = vsel %vm494, %v958, 0
      %v997 = vsel %vm494, %v960, 0
      %v1000 = vsel %vm494, %v962, 0
      %v1003 = vsel %vm494, %v964, 0
      %v1006 = vsel %vm494, %v966, 0
      %v1009 = vsel %vm494, %v968, 0
      %v1012 = vsel %vm494, %v970, 0
      %v1015 = vsel %vm494, %v972, 0
      %v1018 = vsel %vm494, %v974, 0
      %v1021 = vsel %vm494, %v976, 0
      %v1024 = vsel %vm494, %v978, 0
      %v1027 = vsel %vm494, %v980, 0
      %v1030 = vsel %vm494, %v982, 0
      %v1033 = vsel %vm494, %v984, 0
      %v1036 = vsel %vm494, %v986, 0
      %v1039 = vsel %vm494, %v988, 0
      %v1042 = vsel %vm494, %v990, 0
      %v1045 = vsel %vm494, %v992, 0
      %v1048 = vand.u32 %v951, %v552
      %1050 = vmatprep.subr.bf16.mxu0 0
      %1051 = vmatpush1.bf16.msra.mxu0 0
      %1052 = vmatprep.subr.bf16.mxu0 0
      %1053 = vmatpush1.bf16.msra.mxu0 0
      %1054 = vmatprep.subr.bf16.mxu0 0
      %1055 = vmatpush1.bf16.msra.mxu0 0
      %1056 = vmatprep.subr.bf16.mxu0 0
      %1057 = vmatpush1.bf16.msra.mxu0 0
      %1058 = vmatprep.subr.bf16.mxu0 0
      %1059 = vmatpush1.bf16.msra.mxu0 0
      %1060 = vmatprep.subr.bf16.mxu0 0
      %1061 = vmatpush1.bf16.msra.mxu0 0
      %1062 = vmatprep.subr.bf16.mxu0 0
      %1063 = vmatpush1.bf16.msra.mxu0 0
      %1064 = vmatprep.subr.bf16.mxu0 0
      %1065 = vmatpush1.bf16.msra.mxu0 %v1048
      %1066 = vmatprep.subr.bf16.mxu0 0
      %1067 = vmatpush2.bf16.msra.mxu0 0
      %1068 = vmatprep.subr.bf16.mxu0 0
      %1069 = vmatpush2.bf16.msra.mxu0 0
      %1070 = vmatprep.subr.bf16.mxu0 0
      %1071 = vmatpush2.bf16.msra.mxu0 0
      %1072 = vmatprep.subr.bf16.mxu0 0
      %1073 = vmatpush2.bf16.msra.mxu0 0
      %1074 = vmatprep.subr.bf16.mxu0 0
      %1075 = vmatpush2.bf16.msra.mxu0 0
      %1076 = vmatprep.subr.bf16.mxu0 0
      %1077 = vmatpush2.bf16.msra.mxu0 0
      %1078 = vmatprep.subr.bf16.mxu0 0
      %1079 = vmatpush2.bf16.msra.mxu0 0
      %1080 = vmatprep.subr.bf16.mxu0 0
      %1081 = vmatpush2.bf16.msra.mxu0 0
      %1082 = vmatprep.mubr.bf16.mxu0 0
      %1083 = vmatmul.mubr.bf16.gmra.mxu0 %v994
      %v1084 = vpop.f32.mrf.mxu0
      %v1085 = vadd.f32 0.0, %v1084
      %v1086 = vpop.f32.mrf.mxu0
      %v1087 = vpop.f32.mrf.mxu0
      %v1088 = vadd.f32 0.0, %v1087
      %v1089 = vpop.f32.mrf.mxu0
      %1090 = vmatprep.mubr.bf16.mxu0 0
      %1091 = vmatmul.mubr.bf16.gmra.mxu0 %v997
      %v1092 = vpop.f32.mrf.mxu0
      %v1093 = vadd.f32 0.0, %v1092
      %v1094 = vpop.f32.mrf.mxu0
      %v1095 = vpop.f32.mrf.mxu0
      %v1096 = vadd.f32 0.0, %v1095
      %v1097 = vpop.f32.mrf.mxu0
      %1098 = vmatprep.mubr.bf16.mxu0 0
      %1099 = vmatmul.mubr.bf16.gmra.mxu0 %v1000
      %v1100 = vpop.f32.mrf.mxu0
      %v1101 = vadd.f32 0.0, %v1100
      %v1102 = vpop.f32.mrf.mxu0
      %v1103 = vpop.f32.mrf.mxu0
      %v1104 = vadd.f32 0.0, %v1103
      %v1105 = vpop.f32.mrf.mxu0
      %1106 = vmatprep.mubr.bf16.mxu0 0
      %1107 = vmatmul.mubr.bf16.gmra.mxu0 %v1003
      %v1108 = vpop.f32.mrf.mxu0
      %v1109 = vadd.f32 0.0, %v1108
      %v1110 = vpop.f32.mrf.mxu0
      %v1111 = vpop.f32.mrf.mxu0
      %v1112 = vadd.f32 0.0, %v1111
      %v1113 = vpop.f32.mrf.mxu0
      %1114 = vmatprep.mubr.bf16.mxu0 0
      %1115 = vmatmul.mubr.bf16.gmra.mxu0 %v1006
      %v1116 = vpop.f32.mrf.mxu0
      %v1117 = vadd.f32 0.0, %v1116
      %v1118 = vpop.f32.mrf.mxu0
      %v1119 = vpop.f32.mrf.mxu0
      %v1120 = vadd.f32 0.0, %v1119
      %v1121 = vpop.f32.mrf.mxu0
      %1122 = vmatprep.mubr.bf16.mxu0 0
      %1123 = vmatmul.mubr.bf16.gmra.mxu0 %v1009
      %v1124 = vpop.f32.mrf.mxu0
      %v1125 = vadd.f32 0.0, %v1124
      %v1126 = vpop.f32.mrf.mxu0
      %v1127 = vpop.f32.mrf.mxu0
      %v1128 = vadd.f32 0.0, %v1127
      %v1129 = vpop.f32.mrf.mxu0
      %1130 = vmatprep.mubr.bf16.mxu0 0
      %1131 = vmatmul.mubr.bf16.gmra.mxu0 %v1012
      %v1132 = vpop.f32.mrf.mxu0
      %v1133 = vadd.f32 0.0, %v1132
      %v1134 = vpop.f32.mrf.mxu0
      %v1135 = vpop.f32.mrf.mxu0
      %v1136 = vadd.f32 0.0, %v1135
      %v1137 = vpop.f32.mrf.mxu0
      %1138 = vmatprep.mubr.bf16.mxu0 0
      %1139 = vmatmul.mubr.bf16.gmra.mxu0 %v1015
      %v1140 = vpop.f32.mrf.mxu0
      %v1141 = vadd.f32 0.0, %v1140
      %v1142 = vpop.f32.mrf.mxu0
      %v1143 = vpop.f32.mrf.mxu0
      %v1144 = vadd.f32 0.0, %v1143
      %v1145 = vpop.f32.mrf.mxu0
      %1146 = vmatprep.mubr.bf16.mxu0 0
      %1147 = vmatmul.mubr.bf16.gmra.mxu0 %v1018
      %v1148 = vpop.f32.mrf.mxu0
      %v1149 = vadd.f32 0.0, %v1148
      %v1150 = vpop.f32.mrf.mxu0
      %v1151 = vpop.f32.mrf.mxu0
      %v1152 = vadd.f32 0.0, %v1151
      %v1153 = vpop.f32.mrf.mxu0
      %1154 = vmatprep.mubr.bf16.mxu0 0
      %1155 = vmatmul.mubr.bf16.gmra.mxu0 %v1021
      %v1156 = vpop.f32.mrf.mxu0
      %v1157 = vadd.f32 0.0, %v1156
      %v1158 = vpop.f32.mrf.mxu0
      %v1159 = vpop.f32.mrf.mxu0
      %v1160 = vadd.f32 0.0, %v1159
      %v1161 = vpop.f32.mrf.mxu0
      %1162 = vmatprep.mubr.bf16.mxu0 0
      %1163 = vmatmul.mubr.bf16.gmra.mxu0 %v1024
      %v1164 = vpop.f32.mrf.mxu0
      %v1165 = vadd.f32 0.0, %v1164
      %v1166 = vpop.f32.mrf.mxu0
      %v1167 = vpop.f32.mrf.mxu0
      %v1168 = vadd.f32 0.0, %v1167
      %v1169 = vpop.f32.mrf.mxu0
      %1170 = vmatprep.mubr.bf16.mxu0 0
      %1171 = vmatmul.mubr.bf16.gmra.mxu0 %v1027
      %v1172 = vpop.f32.mrf.mxu0
      %v1173 = vadd.f32 0.0, %v1172
      %v1174 = vpop.f32.mrf.mxu0
      %v1175 = vpop.f32.mrf.mxu0
      %v1176 = vadd.f32 0.0, %v1175
      %v1177 = vpop.f32.mrf.mxu0
      %1178 = vmatprep.mubr.bf16.mxu0 0
      %1179 = vmatmul.mubr.bf16.gmra.mxu0 %v1030
      %v1180 = vpop.f32.mrf.mxu0
      %v1181 = vadd.f32 0.0, %v1180
      %v1182 = vpop.f32.mrf.mxu0
      %v1183 = vpop.f32.mrf.mxu0
      %v1184 = vadd.f32 0.0, %v1183
      %v1185 = vpop.f32.mrf.mxu0
      %1186 = vmatprep.mubr.bf16.mxu0 0
      %1187 = vmatmul.mubr.bf16.gmra.mxu0 %v1033
      %v1188 = vpop.f32.mrf.mxu0
      %v1189 = vadd.f32 0.0, %v1188
      %v1190 = vpop.f32.mrf.mxu0
      %v1191 = vpop.f32.mrf.mxu0
      %v1192 = vadd.f32 0.0, %v1191
      %v1193 = vpop.f32.mrf.mxu0
      %1194 = vmatprep.mubr.bf16.mxu0 0
      %1195 = vmatmul.mubr.bf16.gmra.mxu0 %v1036
      %v1196 = vpop.f32.mrf.mxu0
      %v1197 = vadd.f32 0.0, %v1196
      %v1198 = vpop.f32.mrf.mxu0
      %v1199 = vpop.f32.mrf.mxu0
      %v1200 = vadd.f32 0.0, %v1199
      %v1201 = vpop.f32.mrf.mxu0
      %1202 = vmatprep.mubr.bf16.mxu0 0
      %1203 = vmatmul.mubr.bf16.gmra.mxu0 %v1039
      %v1204 = vpop.f32.mrf.mxu0
      %v1205 = vadd.f32 0.0, %v1204
      %v1206 = vpop.f32.mrf.mxu0
      %v1207 = vpop.f32.mrf.mxu0
      %v1208 = vadd.f32 0.0, %v1207
      %v1209 = vpop.f32.mrf.mxu0
      %1210 = vmatprep.mubr.bf16.mxu0 0
      %1211 = vmatmul.mubr.bf16.gmra.mxu0 %v1042
      %v1212 = vpop.f32.mrf.mxu0
      %v1213 = vadd.f32 0.0, %v1212
      %v1214 = vpop.f32.mrf.mxu0
      %v1215 = vpop.f32.mrf.mxu0
      %v1216 = vadd.f32 0.0, %v1215
      %v1217 = vpop.f32.mrf.mxu0
      %1218 = vmatprep.mubr.bf16.mxu0 0
      %1219 = vmatmul.mubr.bf16.gmra.mxu0 %v1045
      %v1220 = vpop.f32.mrf.mxu0
      %v1221 = vadd.f32 0.0, %v1220
      %v1222 = vpop.f32.mrf.mxu0
      %v1223 = vpop.f32.mrf.mxu0
      %v1224 = vadd.f32 0.0, %v1223
      %v1225 = vpop.f32.mrf.mxu0
      %1226 = vdwg.mxu0
      %v1227 = vadd.f32 %v807, %v1085
      %v1228 = vadd.f32 %v810, %v1088
      %v1229 = vadd.f32 %v815, %v1093
      %v1230 = vadd.f32 %v818, %v1096
      %v1231 = vadd.f32 %v823, %v1101
      %v1232 = vadd.f32 %v826, %v1104
      %v1233 = vadd.f32 %v831, %v1109
      %v1234 = vadd.f32 %v834, %v1112
      %v1235 = vadd.f32 %v839, %v1117
      %v1236 = vadd.f32 %v842, %v1120
      %v1237 = vadd.f32 %v847, %v1125
      %v1238 = vadd.f32 %v850, %v1128
      %v1239 = vadd.f32 %v855, %v1133
      %v1240 = vadd.f32 %v858, %v1136
      %v1241 = vadd.f32 %v863, %v1141
      %v1242 = vadd.f32 %v866, %v1144
      %v1243 = vadd.f32 %v871, %v1149
      %v1244 = vadd.f32 %v874, %v1152
      %v1245 = vadd.f32 %v879, %v1157
      %v1246 = vadd.f32 %v882, %v1160
      %v1247 = vadd.f32 %v887, %v1165
      %v1248 = vadd.f32 %v890, %v1168
      %v1249 = vadd.f32 %v895, %v1173
      %v1250 = vadd.f32 %v898, %v1176
      %v1251 = vadd.f32 %v903, %v1181
      %v1252 = vadd.f32 %v906, %v1184
      %v1253 = vadd.f32 %v911, %v1189
      %v1254 = vadd.f32 %v914, %v1192
      %v1255 = vadd.f32 %v919, %v1197
      %v1256 = vadd.f32 %v922, %v1200
      %v1257 = vadd.f32 %v927, %v1205
      %v1258 = vadd.f32 %v930, %v1208
      %v1259 = vadd.f32 %v935, %v1213
      %v1260 = vadd.f32 %v938, %v1216
      %v1261 = vadd.f32 %v943, %v1221
      %v1262 = vadd.f32 %v946, %v1224
      %v1263 = vld [vmem:[%s200 + $0x8] sm:$0xe]
      %v1264 = vld [vmem:[%s200 + $0xc] sm:$0xf]
      %v1265 = vld [vmem:[%s200 + $0x10] sm:$0xf]
      %v1266 = vld [vmem:[%s200 + $0x14] sm:$0xf]
      %v1267 = vld [vmem:[%s200 + $0x18] sm:$0xf]
      %v1268 = vld [vmem:[%s200 + $0x1c] sm:$0xf]
      %v1269 = vld [vmem:[%s200 + $0x20] sm:$0xf]
      %v1270 = vld [vmem:[%s200 + $0x24] sm:$0xf]
      %v1271 = vld [vmem:[%s200 + $0x28] sm:$0xf]
      %v1272 = vld [vmem:[%s200 + $0x2c] sm:$0xf]
      %v1273 = vld [vmem:[%s200 + $0x30] sm:$0xf]
      %v1274 = vld [vmem:[%s200 + $0x34] sm:$0xf]
      %v1275 = vld [vmem:[%s200 + $0x38] sm:$0xf]
      %v1276 = vld [vmem:[%s200 + $0x3c] sm:$0xf]
      %v1277 = vld [vmem:[%s200 + $0x40] sm:$0xf]
      %v1278 = vld [vmem:[%s200 + $0x44] sm:$0xf]
      %v1279 = vld [vmem:[%s200 + $0x48] sm:$0xf]
      %v1280 = vld [vmem:[%s200 + $0x4c] sm:$0xf]
      %v1281 = vld [vmem:[%s200 + $0x50] sm:$0xf]
      %v1282 = vld [vmem:[%s200 + $0x54] sm:$0xf]
      %v1283 = vld [vmem:[%s200 + $0x58] sm:$0xf]
      %v1284 = vld [vmem:[%s200 + $0x5c] sm:$0xf]
      %v1285 = vld [vmem:[%s200 + $0x60] sm:$0xf]
      %v1286 = vld [vmem:[%s200 + $0x64] sm:$0xf]
      %v1287 = vld [vmem:[%s200 + $0x68] sm:$0xf]
      %v1288 = vld [vmem:[%s200 + $0x6c] sm:$0xf]
      %v1289 = vld [vmem:[%s200 + $0x70] sm:$0xf]
      %v1290 = vld [vmem:[%s200 + $0x74] sm:$0xf]
      %v1291 = vld [vmem:[%s200 + $0x78] sm:$0xf]
      %v1292 = vld [vmem:[%s200 + $0x7c] sm:$0xf]
      %v1293 = vld [vmem:[%s200 + $0x80] sm:$0xf]
      %v1294 = vld [vmem:[%s200 + $0x84] sm:$0xf]
      %v1295 = vld [vmem:[%s200 + $0x88] sm:$0xf]
      %v1296 = vld [vmem:[%s200 + $0x8c] sm:$0xf]
      %v1297 = vld [vmem:[%s200 + $0x90] sm:$0xf]
      %v1298 = vld [vmem:[%s200 + $0x94] sm:$0xf]
      %v1299 = vld [vmem:[%s200 + $0x98] sm:$0x1]
      %s1300 = scalar_lea.vmem %s1, 6
      %v1301 = vld [vmem:[%s1300] sm:$0x3]
      %v1339 = vunpack.c.l.b16 %v1263
      %v1340 = vunpack.c.l.b16 %v1264
      %v1341 = vunpack.c.l.b16 %v1265
      %v1342 = vunpack.c.l.b16 %v1266
      %v1343 = vunpack.c.l.b16 %v1267
      %v1344 = vunpack.c.l.b16 %v1268
      %v1345 = vunpack.c.l.b16 %v1269
      %v1346 = vunpack.c.l.b16 %v1270
      %v1347 = vunpack.c.l.b16 %v1271
      %v1348 = vunpack.c.l.b16 %v1272
      %v1349 = vunpack.c.l.b16 %v1273
      %v1350 = vunpack.c.l.b16 %v1274
      %v1351 = vunpack.c.l.b16 %v1275
      %v1352 = vunpack.c.l.b16 %v1276
      %v1353 = vunpack.c.l.b16 %v1277
      %v1354 = vunpack.c.l.b16 %v1278
      %v1355 = vunpack.c.l.b16 %v1279
      %v1356 = vunpack.c.l.b16 %v1280
      %v1357 = vunpack.c.l.b16 %v1281
      %v1358 = vunpack.c.l.b16 %v1282
      %v1359 = vunpack.c.l.b16 %v1283
      %v1360 = vunpack.c.l.b16 %v1284
      %v1361 = vunpack.c.l.b16 %v1285
      %v1362 = vunpack.c.l.b16 %v1286
      %v1363 = vunpack.c.l.b16 %v1287
      %v1364 = vunpack.c.l.b16 %v1288
      %v1365 = vunpack.c.l.b16 %v1289
      %v1366 = vunpack.c.l.b16 %v1290
      %v1367 = vunpack.c.l.b16 %v1291
      %v1368 = vunpack.c.l.b16 %v1292
      %v1369 = vunpack.c.l.b16 %v1293
      %v1370 = vunpack.c.l.b16 %v1294
      %v1371 = vunpack.c.l.b16 %v1295
      %v1372 = vunpack.c.l.b16 %v1296
      %v1373 = vunpack.c.l.b16 %v1297
      %v1374 = vunpack.c.l.b16 %v1298
      %v1375 = vunpack.c.l.b16 %v1299
      %v1376 = vpack.c.b16 %v1340, %v1339
      %v1377 = vpack.c.b16 %v1342, %v1341
      %v1378 = vpack.c.b16 %v1344, %v1343
      %v1379 = vpack.c.b16 %v1346, %v1345
      %v1380 = vpack.c.b16 %v1348, %v1347
      %v1381 = vpack.c.b16 %v1350, %v1349
      %v1382 = vpack.c.b16 %v1352, %v1351
      %v1383 = vpack.c.b16 %v1354, %v1353
      %v1384 = vpack.c.b16 %v1356, %v1355
      %v1385 = vpack.c.b16 %v1358, %v1357
      %v1386 = vpack.c.b16 %v1360, %v1359
      %v1387 = vpack.c.b16 %v1362, %v1361
      %v1388 = vpack.c.b16 %v1364, %v1363
      %v1389 = vpack.c.b16 %v1366, %v1365
      %v1390 = vpack.c.b16 %v1368, %v1367
      %v1391 = vpack.c.b16 %v1370, %v1369
      %v1392 = vpack.c.b16 %v1372, %v1371
      %v1393 = vpack.c.b16 %v1374, %v1373
      %v1394 = vpack.c.b16 %v1375, %v1375
      %v1395 = vrot.slane %v1376, 1
      %v1396 = vrot.slane %v1377, 1
      %v1397 = vsel %vm955, %v1395, %v1396
      %v1398 = vrot.slane %v1378, 1
      %v1399 = vsel %vm955, %v1396, %v1398
      %v1400 = vrot.slane %v1379, 1
      %v1401 = vsel %vm955, %v1398, %v1400
      %v1402 = vrot.slane %v1380, 1
      %v1403 = vsel %vm955, %v1400, %v1402
      %v1404 = vrot.slane %v1381, 1
      %v1405 = vsel %vm955, %v1402, %v1404
      %v1406 = vrot.slane %v1382, 1
      %v1407 = vsel %vm955, %v1404, %v1406
      %v1408 = vrot.slane %v1383, 1
      %v1409 = vsel %vm955, %v1406, %v1408
      %v1410 = vrot.slane %v1384, 1
      %v1411 = vsel %vm955, %v1408, %v1410
      %v1412 = vrot.slane %v1385, 1
      %v1413 = vsel %vm955, %v1410, %v1412
      %v1414 = vrot.slane %v1386, 1
      %v1415 = vsel %vm955, %v1412, %v1414
      %v1416 = vrot.slane %v1387, 1
      %v1417 = vsel %vm955, %v1414, %v1416
      %v1418 = vrot.slane %v1388, 1
      %v1419 = vsel %vm955, %v1416, %v1418
      %v1420 = vrot.slane %v1389, 1
      %v1421 = vsel %vm955, %v1418, %v1420
      %v1422 = vrot.slane %v1390, 1
      %v1423 = vsel %vm955, %v1420, %v1422
      %v1424 = vrot.slane %v1391, 1
      %v1425 = vsel %vm955, %v1422, %v1424
      %v1426 = vrot.slane %v1392, 1
      %v1427 = vsel %vm955, %v1424, %v1426
      %v1428 = vrot.slane %v1393, 1
      %v1429 = vsel %vm955, %v1426, %v1428
      %v1430 = vrot.slane %v1394, 1
      %v1431 = vsel %vm955, %v1428, %v1430
      %v1433 = vsel %vm494, %v1397, 0
      %v1436 = vsel %vm494, %v1399, 0
      %v1439 = vsel %vm494, %v1401, 0
      %v1442 = vsel %vm494, %v1403, 0
      %v1445 = vsel %vm494, %v1405, 0
      %v1448 = vsel %vm494, %v1407, 0
      %v1451 = vsel %vm494, %v1409, 0
      %v1454 = vsel %vm494, %v1411, 0
      %v1457 = vsel %vm494, %v1413, 0
      %v1460 = vsel %vm494, %v1415, 0
      %v1463 = vsel %vm494, %v1417, 0
      %v1466 = vsel %vm494, %v1419, 0
      %v1469 = vsel %vm494, %v1421, 0
      %v1472 = vsel %vm494, %v1423, 0
      %v1475 = vsel %vm494, %v1425, 0
      %v1478 = vsel %vm494, %v1427, 0
      %v1481 = vsel %vm494, %v1429, 0
      %v1484 = vsel %vm494, %v1431, 0
      %v1487 = vand.u32 %v1301, %v552
      %1489 = vmatprep.subr.bf16.mxu0 0
      %1490 = vmatpush1.bf16.msra.mxu0 0
      %1491 = vmatprep.subr.bf16.mxu0 0
      %1492 = vmatpush1.bf16.msra.mxu0 0
      %1493 = vmatprep.subr.bf16.mxu0 0
      %1494 = vmatpush1.bf16.msra.mxu0 0
      %1495 = vmatprep.subr.bf16.mxu0 0
      %1496 = vmatpush1.bf16.msra.mxu0 0
      %1497 = vmatprep.subr.bf16.mxu0 0
      %1498 = vmatpush1.bf16.msra.mxu0 0
      %1499 = vmatprep.subr.bf16.mxu0 0
      %1500 = vmatpush1.bf16.msra.mxu0 0
      %1501 = vmatprep.subr.bf16.mxu0 0
      %1502 = vmatpush1.bf16.msra.mxu0 0
      %1503 = vmatprep.subr.bf16.mxu0 0
      %1504 = vmatpush1.bf16.msra.mxu0 %v1487
      %1505 = vmatprep.subr.bf16.mxu0 0
      %1506 = vmatpush2.bf16.msra.mxu0 0
      %1507 = vmatprep.subr.bf16.mxu0 0
      %1508 = vmatpush2.bf16.msra.mxu0 0
      %1509 = vmatprep.subr.bf16.mxu0 0
      %1510 = vmatpush2.bf16.msra.mxu0 0
      %1511 = vmatprep.subr.bf16.mxu0 0
      %1512 = vmatpush2.bf16.msra.mxu0 0
      %1513 = vmatprep.subr.bf16.mxu0 0
      %1514 = vmatpush2.bf16.msra.mxu0 0
      %1515 = vmatprep.subr.bf16.mxu0 0
      %1516 = vmatpush2.bf16.msra.mxu0 0
      %1517 = vmatprep.subr.bf16.mxu0 0
      %1518 = vmatpush2.bf16.msra.mxu0 0
      %1519 = vmatprep.subr.bf16.mxu0 0
      %1520 = vmatpush2.bf16.msra.mxu0 0
      %1521 = vmatprep.mubr.bf16.mxu0 0
      %1522 = vmatmul.mubr.bf16.gmra.mxu0 %v1433
      %v1523 = vpop.f32.mrf.mxu0
      %v1524 = vadd.f32 0.0, %v1523
      %v1525 = vpop.f32.mrf.mxu0
      %v1526 = vpop.f32.mrf.mxu0
      %v1527 = vadd.f32 0.0, %v1526
      %v1528 = vpop.f32.mrf.mxu0
      %1529 = vmatprep.mubr.bf16.mxu0 0
      %1530 = vmatmul.mubr.bf16.gmra.mxu0 %v1436
      %v1531 = vpop.f32.mrf.mxu0
      %v1532 = vadd.f32 0.0, %v1531
      %v1533 = vpop.f32.mrf.mxu0
      %v1534 = vpop.f32.mrf.mxu0
      %v1535 = vadd.f32 0.0, %v1534
      %v1536 = vpop.f32.mrf.mxu0
      %1537 = vmatprep.mubr.bf16.mxu0 0
      %1538 = vmatmul.mubr.bf16.gmra.mxu0 %v1439
      %v1539 = vpop.f32.mrf.mxu0
      %v1540 = vadd.f32 0.0, %v1539
      %v1541 = vpop.f32.mrf.mxu0
      %v1542 = vpop.f32.mrf.mxu0
      %v1543 = vadd.f32 0.0, %v1542
      %v1544 = vpop.f32.mrf.mxu0
      %1545 = vmatprep.mubr.bf16.mxu0 0
      %1546 = vmatmul.mubr.bf16.gmra.mxu0 %v1442
      %v1547 = vpop.f32.mrf.mxu0
      %v1548 = vadd.f32 0.0, %v1547
      %v1549 = vpop.f32.mrf.mxu0
      %v1550 = vpop.f32.mrf.mxu0
      %v1551 = vadd.f32 0.0, %v1550
      %v1552 = vpop.f32.mrf.mxu0
      %1553 = vmatprep.mubr.bf16.mxu0 0
      %1554 = vmatmul.mubr.bf16.gmra.mxu0 %v1445
      %v1555 = vpop.f32.mrf.mxu0
      %v1556 = vadd.f32 0.0, %v1555
      %v1557 = vpop.f32.mrf.mxu0
      %v1558 = vpop.f32.mrf.mxu0
      %v1559 = vadd.f32 0.0, %v1558
      %v1560 = vpop.f32.mrf.mxu0
      %1561 = vmatprep.mubr.bf16.mxu0 0
      %1562 = vmatmul.mubr.bf16.gmra.mxu0 %v1448
      %v1563 = vpop.f32.mrf.mxu0
      %v1564 = vadd.f32 0.0, %v1563
      %v1565 = vpop.f32.mrf.mxu0
      %v1566 = vpop.f32.mrf.mxu0
      %v1567 = vadd.f32 0.0, %v1566
      %v1568 = vpop.f32.mrf.mxu0
      %1569 = vmatprep.mubr.bf16.mxu0 0
      %1570 = vmatmul.mubr.bf16.gmra.mxu0 %v1451
      %v1571 = vpop.f32.mrf.mxu0
      %v1572 = vadd.f32 0.0, %v1571
      %v1573 = vpop.f32.mrf.mxu0
      %v1574 = vpop.f32.mrf.mxu0
      %v1575 = vadd.f32 0.0, %v1574
      %v1576 = vpop.f32.mrf.mxu0
      %1577 = vmatprep.mubr.bf16.mxu0 0
      %1578 = vmatmul.mubr.bf16.gmra.mxu0 %v1454
      %v1579 = vpop.f32.mrf.mxu0
      %v1580 = vadd.f32 0.0, %v1579
      %v1581 = vpop.f32.mrf.mxu0
      %v1582 = vpop.f32.mrf.mxu0
      %v1583 = vadd.f32 0.0, %v1582
      %v1584 = vpop.f32.mrf.mxu0
      %1585 = vmatprep.mubr.bf16.mxu0 0
      %1586 = vmatmul.mubr.bf16.gmra.mxu0 %v1457
      %v1587 = vpop.f32.mrf.mxu0
      %v1588 = vadd.f32 0.0, %v1587
      %v1589 = vpop.f32.mrf.mxu0
      %v1590 = vpop.f32.mrf.mxu0
      %v1591 = vadd.f32 0.0, %v1590
      %v1592 = vpop.f32.mrf.mxu0
      %1593 = vmatprep.mubr.bf16.mxu0 0
      %1594 = vmatmul.mubr.bf16.gmra.mxu0 %v1460
      %v1595 = vpop.f32.mrf.mxu0
      %v1596 = vadd.f32 0.0, %v1595
      %v1597 = vpop.f32.mrf.mxu0
      %v1598 = vpop.f32.mrf.mxu0
      %v1599 = vadd.f32 0.0, %v1598
      %v1600 = vpop.f32.mrf.mxu0
      %1601 = vmatprep.mubr.bf16.mxu0 0
      %1602 = vmatmul.mubr.bf16.gmra.mxu0 %v1463
      %v1603 = vpop.f32.mrf.mxu0
      %v1604 = vadd.f32 0.0, %v1603
      %v1605 = vpop.f32.mrf.mxu0
      %v1606 = vpop.f32.mrf.mxu0
      %v1607 = vadd.f32 0.0, %v1606
      %v1608 = vpop.f32.mrf.mxu0
      %1609 = vmatprep.mubr.bf16.mxu0 0
      %1610 = vmatmul.mubr.bf16.gmra.mxu0 %v1466
      %v1611 = vpop.f32.mrf.mxu0
      %v1612 = vadd.f32 0.0, %v1611
      %v1613 = vpop.f32.mrf.mxu0
      %v1614 = vpop.f32.mrf.mxu0
      %v1615 = vadd.f32 0.0, %v1614
      %v1616 = vpop.f32.mrf.mxu0
      %1617 = vmatprep.mubr.bf16.mxu0 0
      %1618 = vmatmul.mubr.bf16.gmra.mxu0 %v1469
      %v1619 = vpop.f32.mrf.mxu0
      %v1620 = vadd.f32 0.0, %v1619
      %v1621 = vpop.f32.mrf.mxu0
      %v1622 = vpop.f32.mrf.mxu0
      %v1623 = vadd.f32 0.0, %v1622
      %v1624 = vpop.f32.mrf.mxu0
      %1625 = vmatprep.mubr.bf16.mxu0 0
      %1626 = vmatmul.mubr.bf16.gmra.mxu0 %v1472
      %v1627 = vpop.f32.mrf.mxu0
      %v1628 = vadd.f32 0.0, %v1627
      %v1629 = vpop.f32.mrf.mxu0
      %v1630 = vpop.f32.mrf.mxu0
      %v1631 = vadd.f32 0.0, %v1630
      %v1632 = vpop.f32.mrf.mxu0
      %1633 = vmatprep.mubr.bf16.mxu0 0
      %1634 = vmatmul.mubr.bf16.gmra.mxu0 %v1475
      %v1635 = vpop.f32.mrf.mxu0
      %v1636 = vadd.f32 0.0, %v1635
      %v1637 = vpop.f32.mrf.mxu0
      %v1638 = vpop.f32.mrf.mxu0
      %v1639 = vadd.f32 0.0, %v1638
      %v1640 = vpop.f32.mrf.mxu0
      %1641 = vmatprep.mubr.bf16.mxu0 0
      %1642 = vmatmul.mubr.bf16.gmra.mxu0 %v1478
      %v1643 = vpop.f32.mrf.mxu0
      %v1644 = vadd.f32 0.0, %v1643
      %v1645 = vpop.f32.mrf.mxu0
      %v1646 = vpop.f32.mrf.mxu0
      %v1647 = vadd.f32 0.0, %v1646
      %v1648 = vpop.f32.mrf.mxu0
      %1649 = vmatprep.mubr.bf16.mxu0 0
      %1650 = vmatmul.mubr.bf16.gmra.mxu0 %v1481
      %v1651 = vpop.f32.mrf.mxu0
      %v1652 = vadd.f32 0.0, %v1651
      %v1653 = vpop.f32.mrf.mxu0
      %v1654 = vpop.f32.mrf.mxu0
      %v1655 = vadd.f32 0.0, %v1654
      %v1656 = vpop.f32.mrf.mxu0
      %1657 = vmatprep.mubr.bf16.mxu0 0
      %1658 = vmatmul.mubr.bf16.gmra.mxu0 %v1484
      %v1659 = vpop.f32.mrf.mxu0
      %v1660 = vadd.f32 0.0, %v1659
      %v1661 = vpop.f32.mrf.mxu0
      %v1662 = vpop.f32.mrf.mxu0
      %v1663 = vadd.f32 0.0, %v1662
      %v1664 = vpop.f32.mrf.mxu0
      %1665 = vdwg.mxu0
      %v1666 = vadd.f32 %v1227, %v1524
      %v1667 = vadd.f32 %v1228, %v1527
      %v1668 = vadd.f32 %v1229, %v1532
      %v1669 = vadd.f32 %v1230, %v1535
      %v1670 = vadd.f32 %v1231, %v1540
      %v1671 = vadd.f32 %v1232, %v1543
      %v1672 = vadd.f32 %v1233, %v1548
      %v1673 = vadd.f32 %v1234, %v1551
      %v1674 = vadd.f32 %v1235, %v1556
      %v1675 = vadd.f32 %v1236, %v1559
      %v1676 = vadd.f32 %v1237, %v1564
      %v1677 = vadd.f32 %v1238, %v1567
      %v1678 = vadd.f32 %v1239, %v1572
      %v1679 = vadd.f32 %v1240, %v1575
      %v1680 = vadd.f32 %v1241, %v1580
      %v1681 = vadd.f32 %v1242, %v1583
      %v1682 = vadd.f32 %v1243, %v1588
      %v1683 = vadd.f32 %v1244, %v1591
      %v1684 = vadd.f32 %v1245, %v1596
      %v1685 = vadd.f32 %v1246, %v1599
      %v1686 = vadd.f32 %v1247, %v1604
      %v1687 = vadd.f32 %v1248, %v1607
      %v1688 = vadd.f32 %v1249, %v1612
      %v1689 = vadd.f32 %v1250, %v1615
      %v1690 = vadd.f32 %v1251, %v1620
      %v1691 = vadd.f32 %v1252, %v1623
      %v1692 = vadd.f32 %v1253, %v1628
      %v1693 = vadd.f32 %v1254, %v1631
      %v1694 = vadd.f32 %v1255, %v1636
      %v1695 = vadd.f32 %v1256, %v1639
      %v1696 = vadd.f32 %v1257, %v1644
      %v1697 = vadd.f32 %v1258, %v1647
      %v1698 = vadd.f32 %v1259, %v1652
      %v1699 = vadd.f32 %v1260, %v1655
      %v1700 = vadd.f32 %v1261, %v1660
      %v1701 = vadd.f32 %v1262, %v1663
      %v1702 = vld [vmem:[%s200 + $0x98] sm:$0x3]
      %s1703 = scalar_lea.vmem %s1, 8
      %v1704 = vld [vmem:[%s1703] sm:$0x3]
      %v1706 = vunpack.c.l.b16 %v1702
      %v1707 = vpack.c.b16 %v1706, %v1706
      %vm1708 = vsmask.f32 6400
      %v1710 = vshrl.u32 %v1376, 16
      %v1712 = vrot.slane %v1710, 1
      %v1713 = vshll.u32 %v1376, 16
      %v1715 = vrot.slane %v1713, 2
      %v1716 = vor.u32 %v1712, %v1715
      %v1718 = vshrl.u32 %v1377, 16
      %v1720 = vrot.slane %v1718, 1
      %v1721 = vshll.u32 %v1377, 16
      %v1723 = vrot.slane %v1721, 2
      %v1724 = vor.u32 %v1720, %v1723
      %v1725 = vsel %vm1708, %v1716, %v1724
      %v1727 = vshrl.u32 %v1378, 16
      %v1729 = vrot.slane %v1727, 1
      %v1730 = vshll.u32 %v1378, 16
      %v1732 = vrot.slane %v1730, 2
      %v1733 = vor.u32 %v1729, %v1732
      %v1734 = vsel %vm1708, %v1724, %v1733
      %v1736 = vshrl.u32 %v1379, 16
      %v1738 = vrot.slane %v1736, 1
      %v1739 = vshll.u32 %v1379, 16
      %v1741 = vrot.slane %v1739, 2
      %v1742 = vor.u32 %v1738, %v1741
      %v1743 = vsel %vm1708, %v1733, %v1742
      %v1745 = vshrl.u32 %v1380, 16
      %v1747 = vrot.slane %v1745, 1
      %v1748 = vshll.u32 %v1380, 16
      %v1750 = vrot.slane %v1748, 2
      %v1751 = vor.u32 %v1747, %v1750
      %v1752 = vsel %vm1708, %v1742, %v1751
      %v1754 = vshrl.u32 %v1381, 16
      %v1756 = vrot.slane %v1754, 1
      %v1757 = vshll.u32 %v1381, 16
      %v1759 = vrot.slane %v1757, 2
      %v1760 = vor.u32 %v1756, %v1759
      %v1761 = vsel %vm1708, %v1751, %v1760
      %v1763 = vshrl.u32 %v1382, 16
      %v1765 = vrot.slane %v1763, 1
      %v1766 = vshll.u32 %v1382, 16
      %v1768 = vrot.slane %v1766, 2
      %v1769 = vor.u32 %v1765, %v1768
      %v1770 = vsel %vm1708, %v1760, %v1769
      %v1772 = vshrl.u32 %v1383, 16
      %v1774 = vrot.slane %v1772, 1
      %v1775 = vshll.u32 %v1383, 16
      %v1777 = vrot.slane %v1775, 2
      %v1778 = vor.u32 %v1774, %v1777
      %v1779 = vsel %vm1708, %v1769, %v1778
      %v1781 = vshrl.u32 %v1384, 16
      %v1783 = vrot.slane %v1781, 1
      %v1784 = vshll.u32 %v1384, 16
      %v1786 = vrot.slane %v1784, 2
      %v1787 = vor.u32 %v1783, %v1786
      %v1788 = vsel %vm1708, %v1778, %v1787
      %v1790 = vshrl.u32 %v1385, 16
      %v1792 = vrot.slane %v1790, 1
      %v1793 = vshll.u32 %v1385, 16
      %v1795 = vrot.slane %v1793, 2
      %v1796 = vor.u32 %v1792, %v1795
      %v1797 = vsel %vm1708, %v1787, %v1796
      %v1799 = vshrl.u32 %v1386, 16
      %v1801 = vrot.slane %v1799, 1
      %v1802 = vshll.u32 %v1386, 16
      %v1804 = vrot.slane %v1802, 2
      %v1805 = vor.u32 %v1801, %v1804
      %v1806 = vsel %vm1708, %v1796, %v1805
      %v1808 = vshrl.u32 %v1387, 16
      %v1810 = vrot.slane %v1808, 1
      %v1811 = vshll.u32 %v1387, 16
      %v1813 = vrot.slane %v1811, 2
      %v1814 = vor.u32 %v1810, %v1813
      %v1815 = vsel %vm1708, %v1805, %v1814
      %v1817 = vshrl.u32 %v1388, 16
      %v1819 = vrot.slane %v1817, 1
      %v1820 = vshll.u32 %v1388, 16
      %v1822 = vrot.slane %v1820, 2
      %v1823 = vor.u32 %v1819, %v1822
      %v1824 = vsel %vm1708, %v1814, %v1823
      %v1826 = vshrl.u32 %v1389, 16
      %v1828 = vrot.slane %v1826, 1
      %v1829 = vshll.u32 %v1389, 16
      %v1831 = vrot.slane %v1829, 2
      %v1832 = vor.u32 %v1828, %v1831
      %v1833 = vsel %vm1708, %v1823, %v1832
      %v1835 = vshrl.u32 %v1390, 16
      %v1837 = vrot.slane %v1835, 1
      %v1838 = vshll.u32 %v1390, 16
      %v1840 = vrot.slane %v1838, 2
      %v1841 = vor.u32 %v1837, %v1840
      %v1842 = vsel %vm1708, %v1832, %v1841
      %v1844 = vshrl.u32 %v1391, 16
      %v1846 = vrot.slane %v1844, 1
      %v1847 = vshll.u32 %v1391, 16
      %v1849 = vrot.slane %v1847, 2
      %v1850 = vor.u32 %v1846, %v1849
      %v1851 = vsel %vm1708, %v1841, %v1850
      %v1853 = vshrl.u32 %v1392, 16
      %v1855 = vrot.slane %v1853, 1
      %v1856 = vshll.u32 %v1392, 16
      %v1858 = vrot.slane %v1856, 2
      %v1859 = vor.u32 %v1855, %v1858
      %v1860 = vsel %vm1708, %v1850, %v1859
      %v1862 = vshrl.u32 %v1393, 16
      %v1864 = vrot.slane %v1862, 1
      %v1865 = vshll.u32 %v1393, 16
      %v1867 = vrot.slane %v1865, 2
      %v1868 = vor.u32 %v1864, %v1867
      %v1869 = vsel %vm1708, %v1859, %v1868
      %v1871 = vshrl.u32 %v1707, 16
      %v1873 = vrot.slane %v1871, 1
      %v1874 = vshll.u32 %v1707, 16
      %v1876 = vrot.slane %v1874, 2
      %v1877 = vor.u32 %v1873, %v1876
      %v1878 = vsel %vm1708, %v1868, %v1877
      %v1880 = vsel %vm494, %v1725, 0
      %v1883 = vsel %vm494, %v1734, 0
      %v1886 = vsel %vm494, %v1743, 0
      %v1889 = vsel %vm494, %v1752, 0
      %v1892 = vsel %vm494, %v1761, 0
      %v1895 = vsel %vm494, %v1770, 0
      %v1898 = vsel %vm494, %v1779, 0
      %v1901 = vsel %vm494, %v1788, 0
      %v1904 = vsel %vm494, %v1797, 0
      %v1907 = vsel %vm494, %v1806, 0
      %v1910 = vsel %vm494, %v1815, 0
      %v1913 = vsel %vm494, %v1824, 0
      %v1916 = vsel %vm494, %v1833, 0
      %v1919 = vsel %vm494, %v1842, 0
      %v1922 = vsel %vm494, %v1851, 0
      %v1925 = vsel %vm494, %v1860, 0
      %v1928 = vsel %vm494, %v1869, 0
      %v1931 = vsel %vm494, %v1878, 0
      %v1934 = vand.u32 %v1704, %v552
      %1936 = vmatprep.subr.bf16.mxu0 0
      %1937 = vmatpush1.bf16.msra.mxu0 0
      %1938 = vmatprep.subr.bf16.mxu0 0
      %1939 = vmatpush1.bf16.msra.mxu0 0
      %1940 = vmatprep.subr.bf16.mxu0 0
      %1941 = vmatpush1.bf16.msra.mxu0 0
      %1942 = vmatprep.subr.bf16.mxu0 0
      %1943 = vmatpush1.bf16.msra.mxu0 0
      %1944 = vmatprep.subr.bf16.mxu0 0
      %1945 = vmatpush1.bf16.msra.mxu0 0
      %1946 = vmatprep.subr.bf16.mxu0 0
      %1947 = vmatpush1.bf16.msra.mxu0 0
      %1948 = vmatprep.subr.bf16.mxu0 0
      %1949 = vmatpush1.bf16.msra.mxu0 0
      %1950 = vmatprep.subr.bf16.mxu0 0
      %1951 = vmatpush1.bf16.msra.mxu0 %v1934
      %1952 = vmatprep.subr.bf16.mxu0 0
      %1953 = vmatpush2.bf16.msra.mxu0 0
      %1954 = vmatprep.subr.bf16.mxu0 0
      %1955 = vmatpush2.bf16.msra.mxu0 0
      %1956 = vmatprep.subr.bf16.mxu0 0
      %1957 = vmatpush2.bf16.msra.mxu0 0
      %1958 = vmatprep.subr.bf16.mxu0 0
      %1959 = vmatpush2.bf16.msra.mxu0 0
      %1960 = vmatprep.subr.bf16.mxu0 0
      %1961 = vmatpush2.bf16.msra.mxu0 0
      %1962 = vmatprep.subr.bf16.mxu0 0
      %1963 = vmatpush2.bf16.msra.mxu0 0
      %1964 = vmatprep.subr.bf16.mxu0 0
      %1965 = vmatpush2.bf16.msra.mxu0 0
      %1966 = vmatprep.subr.bf16.mxu0 0
      %1967 = vmatpush2.bf16.msra.mxu0 0
      %1968 = vmatprep.mubr.bf16.mxu0 0
      %1969 = vmatmul.mubr.bf16.gmra.mxu0 %v1880
      %v1970 = vpop.f32.mrf.mxu0
      %v1971 = vadd.f32 0.0, %v1970
      %v1972 = vpop.f32.mrf.mxu0
      %v1973 = vpop.f32.mrf.mxu0
      %v1974 = vadd.f32 0.0, %v1973
      %v1975 = vpop.f32.mrf.mxu0
      %1976 = vmatprep.mubr.bf16.mxu0 0
      %1977 = vmatmul.mubr.bf16.gmra.mxu0 %v1883
      %v1978 = vpop.f32.mrf.mxu0
      %v1979 = vadd.f32 0.0, %v1978
      %v1980 = vpop.f32.mrf.mxu0
      %v1981 = vpop.f32.mrf.mxu0
      %v1982 = vadd.f32 0.0, %v1981
      %v1983 = vpop.f32.mrf.mxu0
      %1984 = vmatprep.mubr.bf16.mxu0 0
      %1985 = vmatmul.mubr.bf16.gmra.mxu0 %v1886
      %v1986 = vpop.f32.mrf.mxu0
      %v1987 = vadd.f32 0.0, %v1986
      %v1988 = vpop.f32.mrf.mxu0
      %v1989 = vpop.f32.mrf.mxu0
      %v1990 = vadd.f32 0.0, %v1989
      %v1991 = vpop.f32.mrf.mxu0
      %1992 = vmatprep.mubr.bf16.mxu0 0
      %1993 = vmatmul.mubr.bf16.gmra.mxu0 %v1889
      %v1994 = vpop.f32.mrf.mxu0
      %v1995 = vadd.f32 0.0, %v1994
      %v1996 = vpop.f32.mrf.mxu0
      %v1997 = vpop.f32.mrf.mxu0
      %v1998 = vadd.f32 0.0, %v1997
      %v1999 = vpop.f32.mrf.mxu0
      %2000 = vmatprep.mubr.bf16.mxu0 0
      %2001 = vmatmul.mubr.bf16.gmra.mxu0 %v1892
      %v2002 = vpop.f32.mrf.mxu0
      %v2003 = vadd.f32 0.0, %v2002
      %v2004 = vpop.f32.mrf.mxu0
      %v2005 = vpop.f32.mrf.mxu0
      %v2006 = vadd.f32 0.0, %v2005
      %v2007 = vpop.f32.mrf.mxu0
      %2008 = vmatprep.mubr.bf16.mxu0 0
      %2009 = vmatmul.mubr.bf16.gmra.mxu0 %v1895
      %v2010 = vpop.f32.mrf.mxu0
      %v2011 = vadd.f32 0.0, %v2010
      %v2012 = vpop.f32.mrf.mxu0
      %v2013 = vpop.f32.mrf.mxu0
      %v2014 = vadd.f32 0.0, %v2013
      %v2015 = vpop.f32.mrf.mxu0
      %2016 = vmatprep.mubr.bf16.mxu0 0
      %2017 = vmatmul.mubr.bf16.gmra.mxu0 %v1898
      %v2018 = vpop.f32.mrf.mxu0
      %v2019 = vadd.f32 0.0, %v2018
      %v2020 = vpop.f32.mrf.mxu0
      %v2021 = vpop.f32.mrf.mxu0
      %v2022 = vadd.f32 0.0, %v2021
      %v2023 = vpop.f32.mrf.mxu0
      %2024 = vmatprep.mubr.bf16.mxu0 0
      %2025 = vmatmul.mubr.bf16.gmra.mxu0 %v1901
      %v2026 = vpop.f32.mrf.mxu0
      %v2027 = vadd.f32 0.0, %v2026
      %v2028 = vpop.f32.mrf.mxu0
      %v2029 = vpop.f32.mrf.mxu0
      %v2030 = vadd.f32 0.0, %v2029
      %v2031 = vpop.f32.mrf.mxu0
      %2032 = vmatprep.mubr.bf16.mxu0 0
      %2033 = vmatmul.mubr.bf16.gmra.mxu0 %v1904
      %v2034 = vpop.f32.mrf.mxu0
      %v2035 = vadd.f32 0.0, %v2034
      %v2036 = vpop.f32.mrf.mxu0
      %v2037 = vpop.f32.mrf.mxu0
      %v2038 = vadd.f32 0.0, %v2037
      %v2039 = vpop.f32.mrf.mxu0
      %2040 = vmatprep.mubr.bf16.mxu0 0
      %2041 = vmatmul.mubr.bf16.gmra.mxu0 %v1907
      %v2042 = vpop.f32.mrf.mxu0
      %v2043 = vadd.f32 0.0, %v2042
      %v2044 = vpop.f32.mrf.mxu0
      %v2045 = vpop.f32.mrf.mxu0
      %v2046 = vadd.f32 0.0, %v2045
      %v2047 = vpop.f32.mrf.mxu0
      %2048 = vmatprep.mubr.bf16.mxu0 0
      %2049 = vmatmul.mubr.bf16.gmra.mxu0 %v1910
      %v2050 = vpop.f32.mrf.mxu0
      %v2051 = vadd.f32 0.0, %v2050
      %v2052 = vpop.f32.mrf.mxu0
      %v2053 = vpop.f32.mrf.mxu0
      %v2054 = vadd.f32 0.0, %v2053
      %v2055 = vpop.f32.mrf.mxu0
      %2056 = vmatprep.mubr.bf16.mxu0 0
      %2057 = vmatmul.mubr.bf16.gmra.mxu0 %v1913
      %v2058 = vpop.f32.mrf.mxu0
      %v2059 = vadd.f32 0.0, %v2058
      %v2060 = vpop.f32.mrf.mxu0
      %v2061 = vpop.f32.mrf.mxu0
      %v2062 = vadd.f32 0.0, %v2061
      %v2063 = vpop.f32.mrf.mxu0
      %2064 = vmatprep.mubr.bf16.mxu0 0
      %2065 = vmatmul.mubr.bf16.gmra.mxu0 %v1916
      %v2066 = vpop.f32.mrf.mxu0
      %v2067 = vadd.f32 0.0, %v2066
      %v2068 = vpop.f32.mrf.mxu0
      %v2069 = vpop.f32.mrf.mxu0
      %v2070 = vadd.f32 0.0, %v2069
      %v2071 = vpop.f32.mrf.mxu0
      %2072 = vmatprep.mubr.bf16.mxu0 0
      %2073 = vmatmul.mubr.bf16.gmra.mxu0 %v1919
      %v2074 = vpop.f32.mrf.mxu0
      %v2075 = vadd.f32 0.0, %v2074
      %v2076 = vpop.f32.mrf.mxu0
      %v2077 = vpop.f32.mrf.mxu0
      %v2078 = vadd.f32 0.0, %v2077
      %v2079 = vpop.f32.mrf.mxu0
      %2080 = vmatprep.mubr.bf16.mxu0 0
      %2081 = vmatmul.mubr.bf16.gmra.mxu0 %v1922
      %v2082 = vpop.f32.mrf.mxu0
      %v2083 = vadd.f32 0.0, %v2082
      %v2084 = vpop.f32.mrf.mxu0
      %v2085 = vpop.f32.mrf.mxu0
      %v2086 = vadd.f32 0.0, %v2085
      %v2087 = vpop.f32.mrf.mxu0
      %2088 = vmatprep.mubr.bf16.mxu0 0
      %2089 = vmatmul.mubr.bf16.gmra.mxu0 %v1925
      %v2090 = vpop.f32.mrf.mxu0
      %v2091 = vadd.f32 0.0, %v2090
      %v2092 = vpop.f32.mrf.mxu0
      %v2093 = vpop.f32.mrf.mxu0
      %v2094 = vadd.f32 0.0, %v2093
      %v2095 = vpop.f32.mrf.mxu0
      %2096 = vmatprep.mubr.bf16.mxu0 0
      %2097 = vmatmul.mubr.bf16.gmra.mxu0 %v1928
      %v2098 = vpop.f32.mrf.mxu0
      %v2099 = vadd.f32 0.0, %v2098
      %v2100 = vpop.f32.mrf.mxu0
      %v2101 = vpop.f32.mrf.mxu0
      %v2102 = vadd.f32 0.0, %v2101
      %v2103 = vpop.f32.mrf.mxu0
      %2104 = vmatprep.mubr.bf16.mxu0 0
      %2105 = vmatmul.mubr.bf16.gmra.mxu0 %v1931
      %v2106 = vpop.f32.mrf.mxu0
      %v2107 = vadd.f32 0.0, %v2106
      %v2108 = vpop.f32.mrf.mxu0
      %v2109 = vpop.f32.mrf.mxu0
      %v2110 = vadd.f32 0.0, %v2109
      %v2111 = vpop.f32.mrf.mxu0
      %2112 = vdwg.mxu0
      %v2113 = vadd.f32 %v1666, %v1971
      %v2114 = vadd.f32 %v1667, %v1974
      %v2115 = vadd.f32 %v1668, %v1979
      %v2116 = vadd.f32 %v1669, %v1982
      %v2117 = vadd.f32 %v1670, %v1987
      %v2118 = vadd.f32 %v1671, %v1990
      %v2119 = vadd.f32 %v1672, %v1995
      %v2120 = vadd.f32 %v1673, %v1998
      %v2121 = vadd.f32 %v1674, %v2003
      %v2122 = vadd.f32 %v1675, %v2006
      %v2123 = vadd.f32 %v1676, %v2011
      %v2124 = vadd.f32 %v1677, %v2014
      %v2125 = vadd.f32 %v1678, %v2019
      %v2126 = vadd.f32 %v1679, %v2022
      %v2127 = vadd.f32 %v1680, %v2027
      %v2128 = vadd.f32 %v1681, %v2030
      %v2129 = vadd.f32 %v1682, %v2035
      %v2130 = vadd.f32 %v1683, %v2038
      %v2131 = vadd.f32 %v1684, %v2043
      %v2132 = vadd.f32 %v1685, %v2046
      %v2133 = vadd.f32 %v1686, %v2051
      %v2134 = vadd.f32 %v1687, %v2054
      %v2135 = vadd.f32 %v1688, %v2059
      %v2136 = vadd.f32 %v1689, %v2062
      %v2137 = vadd.f32 %v1690, %v2067
      %v2138 = vadd.f32 %v1691, %v2070
      %v2139 = vadd.f32 %v1692, %v2075
      %v2140 = vadd.f32 %v1693, %v2078
      %v2141 = vadd.f32 %v1694, %v2083
      %v2142 = vadd.f32 %v1695, %v2086
      %v2143 = vadd.f32 %v1696, %v2091
      %v2144 = vadd.f32 %v1697, %v2094
      %v2145 = vadd.f32 %v1698, %v2099
      %v2146 = vadd.f32 %v1699, %v2102
      %v2147 = vadd.f32 %v1700, %v2107
      %v2148 = vadd.f32 %v1701, %v2110
      %v2149 = vld [vmem:[%s200 + $0x8] sm:$0xc]
      %s2150 = scalar_lea.vmem %s1, 10
      %v2151 = vld [vmem:[%s2150] sm:$0x3]
      %v2153 = vunpack.c.l.b16 %v2149
      %v2154 = vpack.c.b16 %v1340, %v2153
      %vm2155 = vcmask 1045504
      %v2156 = vrot.slane %v2154, 2
      %v2157 = vrot.slane %v1377, 2
      %v2158 = vsel %vm2155, %v2156, %v2157
      %v2159 = vrot.slane %v1378, 2
      %v2160 = vsel %vm2155, %v2157, %v2159
      %v2161 = vrot.slane %v1379, 2
      %v2162 = vsel %vm2155, %v2159, %v2161
      %v2163 = vrot.slane %v1380, 2
      %v2164 = vsel %vm2155, %v2161, %v2163
      %v2165 = vrot.slane %v1381, 2
      %v2166 = vsel %vm2155, %v2163, %v2165
      %v2167 = vrot.slane %v1382, 2
      %v2168 = vsel %vm2155, %v2165, %v2167
      %v2169 = vrot.slane %v1383, 2
      %v2170 = vsel %vm2155, %v2167, %v2169
      %v2171 = vrot.slane %v1384, 2
      %v2172 = vsel %vm2155, %v2169, %v2171
      %v2173 = vrot.slane %v1385, 2
      %v2174 = vsel %vm2155, %v2171, %v2173
      %v2175 = vrot.slane %v1386, 2
      %v2176 = vsel %vm2155, %v2173, %v2175
      %v2177 = vrot.slane %v1387, 2
      %v2178 = vsel %vm2155, %v2175, %v2177
      %v2179 = vrot.slane %v1388, 2
      %v2180 = vsel %vm2155, %v2177, %v2179
      %v2181 = vrot.slane %v1389, 2
      %v2182 = vsel %vm2155, %v2179, %v2181
      %v2183 = vrot.slane %v1390, 2
      %v2184 = vsel %vm2155, %v2181, %v2183
      %v2185 = vrot.slane %v1391, 2
      %v2186 = vsel %vm2155, %v2183, %v2185
      %v2187 = vrot.slane %v1392, 2
      %v2188 = vsel %vm2155, %v2185, %v2187
      %v2189 = vrot.slane %v1393, 2
      %v2190 = vsel %vm2155, %v2187, %v2189
      %v2191 = vrot.slane %v1707, 2
      %v2192 = vsel %vm2155, %v2189, %v2191
      %v2194 = vsel %vm494, %v2158, 0
      %v2197 = vsel %vm494, %v2160, 0
      %v2200 = vsel %vm494, %v2162, 0
      %v2203 = vsel %vm494, %v2164, 0
      %v2206 = vsel %vm494, %v2166, 0
      %v2209 = vsel %vm494, %v2168, 0
      %v2212 = vsel %vm494, %v2170, 0
      %v2215 = vsel %vm494, %v2172, 0
      %v2218 = vsel %vm494, %v2174, 0
      %v2221 = vsel %vm494, %v2176, 0
      %v2224 = vsel %vm494, %v2178, 0
      %v2227 = vsel %vm494, %v2180, 0
      %v2230 = vsel %vm494, %v2182, 0
      %v2233 = vsel %vm494, %v2184, 0
      %v2236 = vsel %vm494, %v2186, 0
      %v2239 = vsel %vm494, %v2188, 0
      %v2242 = vsel %vm494, %v2190, 0
      %v2245 = vsel %vm494, %v2192, 0
      %v2248 = vand.u32 %v2151, %v552
      %2250 = vmatprep.subr.bf16.mxu0 0
      %2251 = vmatpush1.bf16.msra.mxu0 0
      %2252 = vmatprep.subr.bf16.mxu0 0
      %2253 = vmatpush1.bf16.msra.mxu0 0
      %2254 = vmatprep.subr.bf16.mxu0 0
      %2255 = vmatpush1.bf16.msra.mxu0 0
      %2256 = vmatprep.subr.bf16.mxu0 0
      %2257 = vmatpush1.bf16.msra.mxu0 0
      %2258 = vmatprep.subr.bf16.mxu0 0
      %2259 = vmatpush1.bf16.msra.mxu0 0
      %2260 = vmatprep.subr.bf16.mxu0 0
      %2261 = vmatpush1.bf16.msra.mxu0 0
      %2262 = vmatprep.subr.bf16.mxu0 0
      %2263 = vmatpush1.bf16.msra.mxu0 0
      %2264 = vmatprep.subr.bf16.mxu0 0
      %2265 = vmatpush1.bf16.msra.mxu0 %v2248
      %2266 = vmatprep.subr.bf16.mxu0 0
      %2267 = vmatpush2.bf16.msra.mxu0 0
      %2268 = vmatprep.subr.bf16.mxu0 0
      %2269 = vmatpush2.bf16.msra.mxu0 0
      %2270 = vmatprep.subr.bf16.mxu0 0
      %2271 = vmatpush2.bf16.msra.mxu0 0
      %2272 = vmatprep.subr.bf16.mxu0 0
      %2273 = vmatpush2.bf16.msra.mxu0 0
      %2274 = vmatprep.subr.bf16.mxu0 0
      %2275 = vmatpush2.bf16.msra.mxu0 0
      %2276 = vmatprep.subr.bf16.mxu0 0
      %2277 = vmatpush2.bf16.msra.mxu0 0
      %2278 = vmatprep.subr.bf16.mxu0 0
      %2279 = vmatpush2.bf16.msra.mxu0 0
      %2280 = vmatprep.subr.bf16.mxu0 0
      %2281 = vmatpush2.bf16.msra.mxu0 0
      %2282 = vmatprep.mubr.bf16.mxu0 0
      %2283 = vmatmul.mubr.bf16.gmra.mxu0 %v2194
      %v2284 = vpop.f32.mrf.mxu0
      %v2285 = vadd.f32 0.0, %v2284
      %v2286 = vpop.f32.mrf.mxu0
      %v2287 = vpop.f32.mrf.mxu0
      %v2288 = vadd.f32 0.0, %v2287
      %v2289 = vpop.f32.mrf.mxu0
      %2290 = vmatprep.mubr.bf16.mxu0 0
      %2291 = vmatmul.mubr.bf16.gmra.mxu0 %v2197
      %v2292 = vpop.f32.mrf.mxu0
      %v2293 = vadd.f32 0.0, %v2292
      %v2294 = vpop.f32.mrf.mxu0
      %v2295 = vpop.f32.mrf.mxu0
      %v2296 = vadd.f32 0.0, %v2295
      %v2297 = vpop.f32.mrf.mxu0
      %2298 = vmatprep.mubr.bf16.mxu0 0
      %2299 = vmatmul.mubr.bf16.gmra.mxu0 %v2200
      %v2300 = vpop.f32.mrf.mxu0
      %v2301 = vadd.f32 0.0, %v2300
      %v2302 = vpop.f32.mrf.mxu0
      %v2303 = vpop.f32.mrf.mxu0
      %v2304 = vadd.f32 0.0, %v2303
      %v2305 = vpop.f32.mrf.mxu0
      %2306 = vmatprep.mubr.bf16.mxu0 0
      %2307 = vmatmul.mubr.bf16.gmra.mxu0 %v2203
      %v2308 = vpop.f32.mrf.mxu0
      %v2309 = vadd.f32 0.0, %v2308
      %v2310 = vpop.f32.mrf.mxu0
      %v2311 = vpop.f32.mrf.mxu0
      %v2312 = vadd.f32 0.0, %v2311
      %v2313 = vpop.f32.mrf.mxu0
      %2314 = vmatprep.mubr.bf16.mxu0 0
      %2315 = vmatmul.mubr.bf16.gmra.mxu0 %v2206
      %v2316 = vpop.f32.mrf.mxu0
      %v2317 = vadd.f32 0.0, %v2316
      %v2318 = vpop.f32.mrf.mxu0
      %v2319 = vpop.f32.mrf.mxu0
      %v2320 = vadd.f32 0.0, %v2319
      %v2321 = vpop.f32.mrf.mxu0
      %2322 = vmatprep.mubr.bf16.mxu0 0
      %2323 = vmatmul.mubr.bf16.gmra.mxu0 %v2209
      %v2324 = vpop.f32.mrf.mxu0
      %v2325 = vadd.f32 0.0, %v2324
      %v2326 = vpop.f32.mrf.mxu0
      %v2327 = vpop.f32.mrf.mxu0
      %v2328 = vadd.f32 0.0, %v2327
      %v2329 = vpop.f32.mrf.mxu0
      %2330 = vmatprep.mubr.bf16.mxu0 0
      %2331 = vmatmul.mubr.bf16.gmra.mxu0 %v2212
      %v2332 = vpop.f32.mrf.mxu0
      %v2333 = vadd.f32 0.0, %v2332
      %v2334 = vpop.f32.mrf.mxu0
      %v2335 = vpop.f32.mrf.mxu0
      %v2336 = vadd.f32 0.0, %v2335
      %v2337 = vpop.f32.mrf.mxu0
      %2338 = vmatprep.mubr.bf16.mxu0 0
      %2339 = vmatmul.mubr.bf16.gmra.mxu0 %v2215
      %v2340 = vpop.f32.mrf.mxu0
      %v2341 = vadd.f32 0.0, %v2340
      %v2342 = vpop.f32.mrf.mxu0
      %v2343 = vpop.f32.mrf.mxu0
      %v2344 = vadd.f32 0.0, %v2343
      %v2345 = vpop.f32.mrf.mxu0
      %2346 = vmatprep.mubr.bf16.mxu0 0
      %2347 = vmatmul.mubr.bf16.gmra.mxu0 %v2218
      %v2348 = vpop.f32.mrf.mxu0
      %v2349 = vadd.f32 0.0, %v2348
      %v2350 = vpop.f32.mrf.mxu0
      %v2351 = vpop.f32.mrf.mxu0
      %v2352 = vadd.f32 0.0, %v2351
      %v2353 = vpop.f32.mrf.mxu0
      %2354 = vmatprep.mubr.bf16.mxu0 0
      %2355 = vmatmul.mubr.bf16.gmra.mxu0 %v2221
      %v2356 = vpop.f32.mrf.mxu0
      %v2357 = vadd.f32 0.0, %v2356
      %v2358 = vpop.f32.mrf.mxu0
      %v2359 = vpop.f32.mrf.mxu0
      %v2360 = vadd.f32 0.0, %v2359
      %v2361 = vpop.f32.mrf.mxu0
      %2362 = vmatprep.mubr.bf16.mxu0 0
      %2363 = vmatmul.mubr.bf16.gmra.mxu0 %v2224
      %v2364 = vpop.f32.mrf.mxu0
      %v2365 = vadd.f32 0.0, %v2364
      %v2366 = vpop.f32.mrf.mxu0
      %v2367 = vpop.f32.mrf.mxu0
      %v2368 = vadd.f32 0.0, %v2367
      %v2369 = vpop.f32.mrf.mxu0
      %2370 = vmatprep.mubr.bf16.mxu0 0
      %2371 = vmatmul.mubr.bf16.gmra.mxu0 %v2227
      %v2372 = vpop.f32.mrf.mxu0
      %v2373 = vadd.f32 0.0, %v2372
      %v2374 = vpop.f32.mrf.mxu0
      %v2375 = vpop.f32.mrf.mxu0
      %v2376 = vadd.f32 0.0, %v2375
      %v2377 = vpop.f32.mrf.mxu0
      %2378 = vmatprep.mubr.bf16.mxu0 0
      %2379 = vmatmul.mubr.bf16.gmra.mxu0 %v2230
      %v2380 = vpop.f32.mrf.mxu0
      %v2381 = vadd.f32 0.0, %v2380
      %v2382 = vpop.f32.mrf.mxu0
      %v2383 = vpop.f32.mrf.mxu0
      %v2384 = vadd.f32 0.0, %v2383
      %v2385 = vpop.f32.mrf.mxu0
      %2386 = vmatprep.mubr.bf16.mxu0 0
      %2387 = vmatmul.mubr.bf16.gmra.mxu0 %v2233
      %v2388 = vpop.f32.mrf.mxu0
      %v2389 = vadd.f32 0.0, %v2388
      %v2390 = vpop.f32.mrf.mxu0
      %v2391 = vpop.f32.mrf.mxu0
      %v2392 = vadd.f32 0.0, %v2391
      %v2393 = vpop.f32.mrf.mxu0
      %2394 = vmatprep.mubr.bf16.mxu0 0
      %2395 = vmatmul.mubr.bf16.gmra.mxu0 %v2236
      %v2396 = vpop.f32.mrf.mxu0
      %v2397 = vadd.f32 0.0, %v2396
      %v2398 = vpop.f32.mrf.mxu0
      %v2399 = vpop.f32.mrf.mxu0
      %v2400 = vadd.f32 0.0, %v2399
      %v2401 = vpop.f32.mrf.mxu0
      %2402 = vmatprep.mubr.bf16.mxu0 0
      %2403 = vmatmul.mubr.bf16.gmra.mxu0 %v2239
      %v2404 = vpop.f32.mrf.mxu0
      %v2405 = vadd.f32 0.0, %v2404
      %v2406 = vpop.f32.mrf.mxu0
      %v2407 = vpop.f32.mrf.mxu0
      %v2408 = vadd.f32 0.0, %v2407
      %v2409 = vpop.f32.mrf.mxu0
      %2410 = vmatprep.mubr.bf16.mxu0 0
      %2411 = vmatmul.mubr.bf16.gmra.mxu0 %v2242
      %v2412 = vpop.f32.mrf.mxu0
      %v2413 = vadd.f32 0.0, %v2412
      %v2414 = vpop.f32.mrf.mxu0
      %v2415 = vpop.f32.mrf.mxu0
      %v2416 = vadd.f32 0.0, %v2415
      %v2417 = vpop.f32.mrf.mxu0
      %2418 = vmatprep.mubr.bf16.mxu0 0
      %2419 = vmatmul.mubr.bf16.gmra.mxu0 %v2245
      %v2420 = vpop.f32.mrf.mxu0
      %v2421 = vadd.f32 0.0, %v2420
      %v2422 = vpop.f32.mrf.mxu0
      %v2423 = vpop.f32.mrf.mxu0
      %v2424 = vadd.f32 0.0, %v2423
      %v2425 = vpop.f32.mrf.mxu0
      %2426 = vdwg.mxu0
      %v2427 = vadd.f32 %v2113, %v2285
      %v2428 = vadd.f32 %v2114, %v2288
      %v2429 = vadd.f32 %v2115, %v2293
      %v2430 = vadd.f32 %v2116, %v2296
      %v2431 = vadd.f32 %v2117, %v2301
      %v2432 = vadd.f32 %v2118, %v2304
      %v2433 = vadd.f32 %v2119, %v2309
      %v2434 = vadd.f32 %v2120, %v2312
      %v2435 = vadd.f32 %v2121, %v2317
      %v2436 = vadd.f32 %v2122, %v2320
      %v2437 = vadd.f32 %v2123, %v2325
      %v2438 = vadd.f32 %v2124, %v2328
      %v2439 = vadd.f32 %v2125, %v2333
      %v2440 = vadd.f32 %v2126, %v2336
      %v2441 = vadd.f32 %v2127, %v2341
      %v2442 = vadd.f32 %v2128, %v2344
      %v2443 = vadd.f32 %v2129, %v2349
      %v2444 = vadd.f32 %v2130, %v2352
      %v2445 = vadd.f32 %v2131, %v2357
      %v2446 = vadd.f32 %v2132, %v2360
      %v2447 = vadd.f32 %v2133, %v2365
      %v2448 = vadd.f32 %v2134, %v2368
      %v2449 = vadd.f32 %v2135, %v2373
      %v2450 = vadd.f32 %v2136, %v2376
      %v2451 = vadd.f32 %v2137, %v2381
      %v2452 = vadd.f32 %v2138, %v2384
      %v2453 = vadd.f32 %v2139, %v2389
      %v2454 = vadd.f32 %v2140, %v2392
      %v2455 = vadd.f32 %v2141, %v2397
      %v2456 = vadd.f32 %v2142, %v2400
      %v2457 = vadd.f32 %v2143, %v2405
      %v2458 = vadd.f32 %v2144, %v2408
      %v2459 = vadd.f32 %v2145, %v2413
      %v2460 = vadd.f32 %v2146, %v2416
      %v2461 = vadd.f32 %v2147, %v2421
      %v2462 = vadd.f32 %v2148, %v2424
      %v2463 = vld [vmem:[%s200 + $0x10] sm:$0xc]
      %v2464 = vld [vmem:[%s200 + $0x14] sm:$0xf]
      %v2465 = vld [vmem:[%s200 + $0x18] sm:$0xf]
      %v2466 = vld [vmem:[%s200 + $0x1c] sm:$0xf]
      %v2467 = vld [vmem:[%s200 + $0x20] sm:$0xf]
      %v2468 = vld [vmem:[%s200 + $0x24] sm:$0xf]
      %v2469 = vld [vmem:[%s200 + $0x28] sm:$0xf]
      %v2470 = vld [vmem:[%s200 + $0x2c] sm:$0xf]
      %v2471 = vld [vmem:[%s200 + $0x30] sm:$0xf]
      %v2472 = vld [vmem:[%s200 + $0x34] sm:$0xf]
      %v2473 = vld [vmem:[%s200 + $0x38] sm:$0xf]
      %v2474 = vld [vmem:[%s200 + $0x3c] sm:$0xf]
      %v2475 = vld [vmem:[%s200 + $0x40] sm:$0xf]
      %v2476 = vld [vmem:[%s200 + $0x44] sm:$0xf]
      %v2477 = vld [vmem:[%s200 + $0x48] sm:$0xf]
      %v2478 = vld [vmem:[%s200 + $0x4c] sm:$0xf]
      %v2479 = vld [vmem:[%s200 + $0x50] sm:$0xf]
      %v2480 = vld [vmem:[%s200 + $0x54] sm:$0xf]
      %v2481 = vld [vmem:[%s200 + $0x58] sm:$0xf]
      %v2482 = vld [vmem:[%s200 + $0x5c] sm:$0xf]
      %v2483 = vld [vmem:[%s200 + $0x60] sm:$0xf]
      %v2484 = vld [vmem:[%s200 + $0x64] sm:$0xf]
      %v2485 = vld [vmem:[%s200 + $0x68] sm:$0xf]
      %v2486 = vld [vmem:[%s200 + $0x6c] sm:$0xf]
      %v2487 = vld [vmem:[%s200 + $0x70] sm:$0xf]
      %v2488 = vld [vmem:[%s200 + $0x74] sm:$0xf]
      %v2489 = vld [vmem:[%s200 + $0x78] sm:$0xf]
      %v2490 = vld [vmem:[%s200 + $0x7c] sm:$0xf]
      %v2491 = vld [vmem:[%s200 + $0x80] sm:$0xf]
      %v2492 = vld [vmem:[%s200 + $0x84] sm:$0xf]
      %v2493 = vld [vmem:[%s200 + $0x88] sm:$0xf]
      %v2494 = vld [vmem:[%s200 + $0x8c] sm:$0xf]
      %v2495 = vld [vmem:[%s200 + $0x90] sm:$0xf]
      %v2496 = vld [vmem:[%s200 + $0x94] sm:$0xf]
      %v2497 = vld [vmem:[%s200 + $0x98] sm:$0xf]
      %v2498 = vld [vmem:[%s200 + $0x9c] sm:$0xf]
      %v2499 = vld [vmem:[%s200 + $0xa0] sm:$0x3]
      %s2500 = scalar_lea.vmem %s1, 12
      %v2501 = vld [vmem:[%s2500] sm:$0x3]
      %v2539 = vunpack.c.l.b16 %v2463
      %v2540 = vunpack.c.l.b16 %v2464
      %v2541 = vunpack.c.l.b16 %v2465
      %v2542 = vunpack.c.l.b16 %v2466
      %v2543 = vunpack.c.l.b16 %v2467
      %v2544 = vunpack.c.l.b16 %v2468
      %v2545 = vunpack.c.l.b16 %v2469
      %v2546 = vunpack.c.l.b16 %v2470
      %v2547 = vunpack.c.l.b16 %v2471
      %v2548 = vunpack.c.l.b16 %v2472
      %v2549 = vunpack.c.l.b16 %v2473
      %v2550 = vunpack.c.l.b16 %v2474
      %v2551 = vunpack.c.l.b16 %v2475
      %v2552 = vunpack.c.l.b16 %v2476
      %v2553 = vunpack.c.l.b16 %v2477
      %v2554 = vunpack.c.l.b16 %v2478
      %v2555 = vunpack.c.l.b16 %v2479
      %v2556 = vunpack.c.l.b16 %v2480
      %v2557 = vunpack.c.l.b16 %v2481
      %v2558 = vunpack.c.l.b16 %v2482
      %v2559 = vunpack.c.l.b16 %v2483
      %v2560 = vunpack.c.l.b16 %v2484
      %v2561 = vunpack.c.l.b16 %v2485
      %v2562 = vunpack.c.l.b16 %v2486
      %v2563 = vunpack.c.l.b16 %v2487
      %v2564 = vunpack.c.l.b16 %v2488
      %v2565 = vunpack.c.l.b16 %v2489
      %v2566 = vunpack.c.l.b16 %v2490
      %v2567 = vunpack.c.l.b16 %v2491
      %v2568 = vunpack.c.l.b16 %v2492
      %v2569 = vunpack.c.l.b16 %v2493
      %v2570 = vunpack.c.l.b16 %v2494
      %v2571 = vunpack.c.l.b16 %v2495
      %v2572 = vunpack.c.l.b16 %v2496
      %v2573 = vunpack.c.l.b16 %v2497
      %v2574 = vunpack.c.l.b16 %v2498
      %v2575 = vunpack.c.l.b16 %v2499
      %v2576 = vpack.c.b16 %v2540, %v2539
      %v2577 = vpack.c.b16 %v2542, %v2541
      %v2578 = vpack.c.b16 %v2544, %v2543
      %v2579 = vpack.c.b16 %v2546, %v2545
      %v2580 = vpack.c.b16 %v2548, %v2547
      %v2581 = vpack.c.b16 %v2550, %v2549
      %v2582 = vpack.c.b16 %v2552, %v2551
      %v2583 = vpack.c.b16 %v2554, %v2553
      %v2584 = vpack.c.b16 %v2556, %v2555
      %v2585 = vpack.c.b16 %v2558, %v2557
      %v2586 = vpack.c.b16 %v2560, %v2559
      %v2587 = vpack.c.b16 %v2562, %v2561
      %v2588 = vpack.c.b16 %v2564, %v2563
      %v2589 = vpack.c.b16 %v2566, %v2565
      %v2590 = vpack.c.b16 %v2568, %v2567
      %v2591 = vpack.c.b16 %v2570, %v2569
      %v2592 = vpack.c.b16 %v2572, %v2571
      %v2593 = vpack.c.b16 %v2574, %v2573
      %v2594 = vpack.c.b16 %v2575, %v2575
      %v2595 = vrot.slane %v2576, 2
      %v2596 = vrot.slane %v2577, 2
      %v2597 = vsel %vm2155, %v2595, %v2596
      %v2598 = vrot.slane %v2578, 2
      %v2599 = vsel %vm2155, %v2596, %v2598
      %v2600 = vrot.slane %v2579, 2
      %v2601 = vsel %vm2155, %v2598, %v2600
      %v2602 = vrot.slane %v2580, 2
      %v2603 = vsel %vm2155, %v2600, %v2602
      %v2604 = vrot.slane %v2581, 2
      %v2605 = vsel %vm2155, %v2602, %v2604
      %v2606 = vrot.slane %v2582, 2
      %v2607 = vsel %vm2155, %v2604, %v2606
      %v2608 = vrot.slane %v2583, 2
      %v2609 = vsel %vm2155, %v2606, %v2608
      %v2610 = vrot.slane %v2584, 2
      %v2611 = vsel %vm2155, %v2608, %v2610
      %v2612 = vrot.slane %v2585, 2
      %v2613 = vsel %vm2155, %v2610, %v2612
      %v2614 = vrot.slane %v2586, 2
      %v2615 = vsel %vm2155, %v2612, %v2614
      %v2616 = vrot.slane %v2587, 2
      %v2617 = vsel %vm2155, %v2614, %v2616
      %v2618 = vrot.slane %v2588, 2
      %v2619 = vsel %vm2155, %v2616, %v2618
      %v2620 = vrot.slane %v2589, 2
      %v2621 = vsel %vm2155, %v2618, %v2620
      %v2622 = vrot.slane %v2590, 2
      %v2623 = vsel %vm2155, %v2620, %v2622
      %v2624 = vrot.slane %v2591, 2
      %v2625 = vsel %vm2155, %v2622, %v2624
      %v2626 = vrot.slane %v2592, 2
      %v2627 = vsel %vm2155, %v2624, %v2626
      %v2628 = vrot.slane %v2593, 2
      %v2629 = vsel %vm2155, %v2626, %v2628
      %v2630 = vrot.slane %v2594, 2
      %v2631 = vsel %vm2155, %v2628, %v2630
      %v2633 = vsel %vm494, %v2597, 0
      %v2636 = vsel %vm494, %v2599, 0
      %v2639 = vsel %vm494, %v2601, 0
      %v2642 = vsel %vm494, %v2603, 0
      %v2645 = vsel %vm494, %v2605, 0
      %v2648 = vsel %vm494, %v2607, 0
      %v2651 = vsel %vm494, %v2609, 0
      %v2654 = vsel %vm494, %v2611, 0
      %v2657 = vsel %vm494, %v2613, 0
      %v2660 = vsel %vm494, %v2615, 0
      %v2663 = vsel %vm494, %v2617, 0
      %v2666 = vsel %vm494, %v2619, 0
      %v2669 = vsel %vm494, %v2621, 0
      %v2672 = vsel %vm494, %v2623, 0
      %v2675 = vsel %vm494, %v2625, 0
      %v2678 = vsel %vm494, %v2627, 0
      %v2681 = vsel %vm494, %v2629, 0
      %v2684 = vsel %vm494, %v2631, 0
      %v2687 = vand.u32 %v2501, %v552
      %2689 = vmatprep.subr.bf16.mxu0 0
      %2690 = vmatpush1.bf16.msra.mxu0 0
      %2691 = vmatprep.subr.bf16.mxu0 0
      %2692 = vmatpush1.bf16.msra.mxu0 0
      %2693 = vmatprep.subr.bf16.mxu0 0
      %2694 = vmatpush1.bf16.msra.mxu0 0
      %2695 = vmatprep.subr.bf16.mxu0 0
      %2696 = vmatpush1.bf16.msra.mxu0 0
      %2697 = vmatprep.subr.bf16.mxu0 0
      %2698 = vmatpush1.bf16.msra.mxu0 0
      %2699 = vmatprep.subr.bf16.mxu0 0
      %2700 = vmatpush1.bf16.msra.mxu0 0
      %2701 = vmatprep.subr.bf16.mxu0 0
      %2702 = vmatpush1.bf16.msra.mxu0 0
      %2703 = vmatprep.subr.bf16.mxu0 0
      %2704 = vmatpush1.bf16.msra.mxu0 %v2687
      %2705 = vmatprep.subr.bf16.mxu0 0
      %2706 = vmatpush2.bf16.msra.mxu0 0
      %2707 = vmatprep.subr.bf16.mxu0 0
      %2708 = vmatpush2.bf16.msra.mxu0 0
      %2709 = vmatprep.subr.bf16.mxu0 0
      %2710 = vmatpush2.bf16.msra.mxu0 0
      %2711 = vmatprep.subr.bf16.mxu0 0
      %2712 = vmatpush2.bf16.msra.mxu0 0
      %2713 = vmatprep.subr.bf16.mxu0 0
      %2714 = vmatpush2.bf16.msra.mxu0 0
      %2715 = vmatprep.subr.bf16.mxu0 0
      %2716 = vmatpush2.bf16.msra.mxu0 0
      %2717 = vmatprep.subr.bf16.mxu0 0
      %2718 = vmatpush2.bf16.msra.mxu0 0
      %2719 = vmatprep.subr.bf16.mxu0 0
      %2720 = vmatpush2.bf16.msra.mxu0 0
      %2721 = vmatprep.mubr.bf16.mxu0 0
      %2722 = vmatmul.mubr.bf16.gmra.mxu0 %v2633
      %v2723 = vpop.f32.mrf.mxu0
      %v2724 = vadd.f32 0.0, %v2723
      %v2725 = vpop.f32.mrf.mxu0
      %v2726 = vpop.f32.mrf.mxu0
      %v2727 = vadd.f32 0.0, %v2726
      %v2728 = vpop.f32.mrf.mxu0
      %2729 = vmatprep.mubr.bf16.mxu0 0
      %2730 = vmatmul.mubr.bf16.gmra.mxu0 %v2636
      %v2731 = vpop.f32.mrf.mxu0
      %v2732 = vadd.f32 0.0, %v2731
      %v2733 = vpop.f32.mrf.mxu0
      %v2734 = vpop.f32.mrf.mxu0
      %v2735 = vadd.f32 0.0, %v2734
      %v2736 = vpop.f32.mrf.mxu0
      %2737 = vmatprep.mubr.bf16.mxu0 0
      %2738 = vmatmul.mubr.bf16.gmra.mxu0 %v2639
      %v2739 = vpop.f32.mrf.mxu0
      %v2740 = vadd.f32 0.0, %v2739
      %v2741 = vpop.f32.mrf.mxu0
      %v2742 = vpop.f32.mrf.mxu0
      %v2743 = vadd.f32 0.0, %v2742
      %v2744 = vpop.f32.mrf.mxu0
      %2745 = vmatprep.mubr.bf16.mxu0 0
      %2746 = vmatmul.mubr.bf16.gmra.mxu0 %v2642
      %v2747 = vpop.f32.mrf.mxu0
      %v2748 = vadd.f32 0.0, %v2747
      %v2749 = vpop.f32.mrf.mxu0
      %v2750 = vpop.f32.mrf.mxu0
      %v2751 = vadd.f32 0.0, %v2750
      %v2752 = vpop.f32.mrf.mxu0
      %2753 = vmatprep.mubr.bf16.mxu0 0
      %2754 = vmatmul.mubr.bf16.gmra.mxu0 %v2645
      %v2755 = vpop.f32.mrf.mxu0
      %v2756 = vadd.f32 0.0, %v2755
      %v2757 = vpop.f32.mrf.mxu0
      %v2758 = vpop.f32.mrf.mxu0
      %v2759 = vadd.f32 0.0, %v2758
      %v2760 = vpop.f32.mrf.mxu0
      %2761 = vmatprep.mubr.bf16.mxu0 0
      %2762 = vmatmul.mubr.bf16.gmra.mxu0 %v2648
      %v2763 = vpop.f32.mrf.mxu0
      %v2764 = vadd.f32 0.0, %v2763
      %v2765 = vpop.f32.mrf.mxu0
      %v2766 = vpop.f32.mrf.mxu0
      %v2767 = vadd.f32 0.0, %v2766
      %v2768 = vpop.f32.mrf.mxu0
      %2769 = vmatprep.mubr.bf16.mxu0 0
      %2770 = vmatmul.mubr.bf16.gmra.mxu0 %v2651
      %v2771 = vpop.f32.mrf.mxu0
      %v2772 = vadd.f32 0.0, %v2771
      %v2773 = vpop.f32.mrf.mxu0
      %v2774 = vpop.f32.mrf.mxu0
      %v2775 = vadd.f32 0.0, %v2774
      %v2776 = vpop.f32.mrf.mxu0
      %2777 = vmatprep.mubr.bf16.mxu0 0
      %2778 = vmatmul.mubr.bf16.gmra.mxu0 %v2654
      %v2779 = vpop.f32.mrf.mxu0
      %v2780 = vadd.f32 0.0, %v2779
      %v2781 = vpop.f32.mrf.mxu0
      %v2782 = vpop.f32.mrf.mxu0
      %v2783 = vadd.f32 0.0, %v2782
      %v2784 = vpop.f32.mrf.mxu0
      %2785 = vmatprep.mubr.bf16.mxu0 0
      %2786 = vmatmul.mubr.bf16.gmra.mxu0 %v2657
      %v2787 = vpop.f32.mrf.mxu0
      %v2788 = vadd.f32 0.0, %v2787
      %v2789 = vpop.f32.mrf.mxu0
      %v2790 = vpop.f32.mrf.mxu0
      %v2791 = vadd.f32 0.0, %v2790
      %v2792 = vpop.f32.mrf.mxu0
      %2793 = vmatprep.mubr.bf16.mxu0 0
      %2794 = vmatmul.mubr.bf16.gmra.mxu0 %v2660
      %v2795 = vpop.f32.mrf.mxu0
      %v2796 = vadd.f32 0.0, %v2795
      %v2797 = vpop.f32.mrf.mxu0
      %v2798 = vpop.f32.mrf.mxu0
      %v2799 = vadd.f32 0.0, %v2798
      %v2800 = vpop.f32.mrf.mxu0
      %2801 = vmatprep.mubr.bf16.mxu0 0
      %2802 = vmatmul.mubr.bf16.gmra.mxu0 %v2663
      %v2803 = vpop.f32.mrf.mxu0
      %v2804 = vadd.f32 0.0, %v2803
      %v2805 = vpop.f32.mrf.mxu0
      %v2806 = vpop.f32.mrf.mxu0
      %v2807 = vadd.f32 0.0, %v2806
      %v2808 = vpop.f32.mrf.mxu0
      %2809 = vmatprep.mubr.bf16.mxu0 0
      %2810 = vmatmul.mubr.bf16.gmra.mxu0 %v2666
      %v2811 = vpop.f32.mrf.mxu0
      %v2812 = vadd.f32 0.0, %v2811
      %v2813 = vpop.f32.mrf.mxu0
      %v2814 = vpop.f32.mrf.mxu0
      %v2815 = vadd.f32 0.0, %v2814
      %v2816 = vpop.f32.mrf.mxu0
      %2817 = vmatprep.mubr.bf16.mxu0 0
      %2818 = vmatmul.mubr.bf16.gmra.mxu0 %v2669
      %v2819 = vpop.f32.mrf.mxu0
      %v2820 = vadd.f32 0.0, %v2819
      %v2821 = vpop.f32.mrf.mxu0
      %v2822 = vpop.f32.mrf.mxu0
      %v2823 = vadd.f32 0.0, %v2822
      %v2824 = vpop.f32.mrf.mxu0
      %2825 = vmatprep.mubr.bf16.mxu0 0
      %2826 = vmatmul.mubr.bf16.gmra.mxu0 %v2672
      %v2827 = vpop.f32.mrf.mxu0
      %v2828 = vadd.f32 0.0, %v2827
      %v2829 = vpop.f32.mrf.mxu0
      %v2830 = vpop.f32.mrf.mxu0
      %v2831 = vadd.f32 0.0, %v2830
      %v2832 = vpop.f32.mrf.mxu0
      %2833 = vmatprep.mubr.bf16.mxu0 0
      %2834 = vmatmul.mubr.bf16.gmra.mxu0 %v2675
      %v2835 = vpop.f32.mrf.mxu0
      %v2836 = vadd.f32 0.0, %v2835
      %v2837 = vpop.f32.mrf.mxu0
      %v2838 = vpop.f32.mrf.mxu0
      %v2839 = vadd.f32 0.0, %v2838
      %v2840 = vpop.f32.mrf.mxu0
      %2841 = vmatprep.mubr.bf16.mxu0 0
      %2842 = vmatmul.mubr.bf16.gmra.mxu0 %v2678
      %v2843 = vpop.f32.mrf.mxu0
      %v2844 = vadd.f32 0.0, %v2843
      %v2845 = vpop.f32.mrf.mxu0
      %v2846 = vpop.f32.mrf.mxu0
      %v2847 = vadd.f32 0.0, %v2846
      %v2848 = vpop.f32.mrf.mxu0
      %2849 = vmatprep.mubr.bf16.mxu0 0
      %2850 = vmatmul.mubr.bf16.gmra.mxu0 %v2681
      %v2851 = vpop.f32.mrf.mxu0
      %v2852 = vadd.f32 0.0, %v2851
      %v2853 = vpop.f32.mrf.mxu0
      %v2854 = vpop.f32.mrf.mxu0
      %v2855 = vadd.f32 0.0, %v2854
      %v2856 = vpop.f32.mrf.mxu0
      %2857 = vmatprep.mubr.bf16.mxu0 0
      %2858 = vmatmul.mubr.bf16.gmra.mxu0 %v2684
      %v2859 = vpop.f32.mrf.mxu0
      %v2860 = vadd.f32 0.0, %v2859
      %v2861 = vpop.f32.mrf.mxu0
      %v2862 = vpop.f32.mrf.mxu0
      %v2863 = vadd.f32 0.0, %v2862
      %v2864 = vpop.f32.mrf.mxu0
      %2865 = vdwg.mxu0
      %v2866 = vadd.f32 %v2427, %v2724
      %v2867 = vadd.f32 %v2428, %v2727
      %v2868 = vadd.f32 %v2429, %v2732
      %v2869 = vadd.f32 %v2430, %v2735
      %v2870 = vadd.f32 %v2431, %v2740
      %v2871 = vadd.f32 %v2432, %v2743
      %v2872 = vadd.f32 %v2433, %v2748
      %v2873 = vadd.f32 %v2434, %v2751
      %v2874 = vadd.f32 %v2435, %v2756
      %v2875 = vadd.f32 %v2436, %v2759
      %v2876 = vadd.f32 %v2437, %v2764
      %v2877 = vadd.f32 %v2438, %v2767
      %v2878 = vadd.f32 %v2439, %v2772
      %v2879 = vadd.f32 %v2440, %v2775
      %v2880 = vadd.f32 %v2441, %v2780
      %v2881 = vadd.f32 %v2442, %v2783
      %v2882 = vadd.f32 %v2443, %v2788
      %v2883 = vadd.f32 %v2444, %v2791
      %v2884 = vadd.f32 %v2445, %v2796
      %v2885 = vadd.f32 %v2446, %v2799
      %v2886 = vadd.f32 %v2447, %v2804
      %v2887 = vadd.f32 %v2448, %v2807
      %v2888 = vadd.f32 %v2449, %v2812
      %v2889 = vadd.f32 %v2450, %v2815
      %v2890 = vadd.f32 %v2451, %v2820
      %v2891 = vadd.f32 %v2452, %v2823
      %v2892 = vadd.f32 %v2453, %v2828
      %v2893 = vadd.f32 %v2454, %v2831
      %v2894 = vadd.f32 %v2455, %v2836
      %v2895 = vadd.f32 %v2456, %v2839
      %v2896 = vadd.f32 %v2457, %v2844
      %v2897 = vadd.f32 %v2458, %v2847
      %v2898 = vadd.f32 %v2459, %v2852
      %v2899 = vadd.f32 %v2460, %v2855
      %v2900 = vadd.f32 %v2461, %v2860
      %v2901 = vadd.f32 %v2462, %v2863
      %v2902 = vld [vmem:[%s200 + $0xa0] sm:$0x7]
      %s2903 = scalar_lea.vmem %s1, 14
      %v2904 = vld [vmem:[%s2903] sm:$0x3]
      %v2906 = vunpack.c.l.b16 %v2902
      %v2907 = vpack.c.b16 %v2906, %v2906
      %vm2908 = vsmask.f32 5376
      %v2910 = vshrl.u32 %v2576, 16
      %v2912 = vrot.slane %v2910, 2
      %v2913 = vshll.u32 %v2576, 16
      %v2915 = vrot.slane %v2913, 3
      %v2916 = vor.u32 %v2912, %v2915
      %v2918 = vshrl.u32 %v2577, 16
      %v2920 = vrot.slane %v2918, 2
      %v2921 = vshll.u32 %v2577, 16
      %v2923 = vrot.slane %v2921, 3
      %v2924 = vor.u32 %v2920, %v2923
      %v2925 = vsel %vm2908, %v2916, %v2924
      %v2927 = vshrl.u32 %v2578, 16
      %v2929 = vrot.slane %v2927, 2
      %v2930 = vshll.u32 %v2578, 16
      %v2932 = vrot.slane %v2930, 3
      %v2933 = vor.u32 %v2929, %v2932
      %v2934 = vsel %vm2908, %v2924, %v2933
      %v2936 = vshrl.u32 %v2579, 16
      %v2938 = vrot.slane %v2936, 2
      %v2939 = vshll.u32 %v2579, 16
      %v2941 = vrot.slane %v2939, 3
      %v2942 = vor.u32 %v2938, %v2941
      %v2943 = vsel %vm2908, %v2933, %v2942
      %v2945 = vshrl.u32 %v2580, 16
      %v2947 = vrot.slane %v2945, 2
      %v2948 = vshll.u32 %v2580, 16
      %v2950 = vrot.slane %v2948, 3
      %v2951 = vor.u32 %v2947, %v2950
      %v2952 = vsel %vm2908, %v2942, %v2951
      %v2954 = vshrl.u32 %v2581, 16
      %v2956 = vrot.slane %v2954, 2
      %v2957 = vshll.u32 %v2581, 16
      %v2959 = vrot.slane %v2957, 3
      %v2960 = vor.u32 %v2956, %v2959
      %v2961 = vsel %vm2908, %v2951, %v2960
      %v2963 = vshrl.u32 %v2582, 16
      %v2965 = vrot.slane %v2963, 2
      %v2966 = vshll.u32 %v2582, 16
      %v2968 = vrot.slane %v2966, 3
      %v2969 = vor.u32 %v2965, %v2968
      %v2970 = vsel %vm2908, %v2960, %v2969
      %v2972 = vshrl.u32 %v2583, 16
      %v2974 = vrot.slane %v2972, 2
      %v2975 = vshll.u32 %v2583, 16
      %v2977 = vrot.slane %v2975, 3
      %v2978 = vor.u32 %v2974, %v2977
      %v2979 = vsel %vm2908, %v2969, %v2978
      %v2981 = vshrl.u32 %v2584, 16
      %v2983 = vrot.slane %v2981, 2
      %v2984 = vshll.u32 %v2584, 16
      %v2986 = vrot.slane %v2984, 3
      %v2987 = vor.u32 %v2983, %v2986
      %v2988 = vsel %vm2908, %v2978, %v2987
      %v2990 = vshrl.u32 %v2585, 16
      %v2992 = vrot.slane %v2990, 2
      %v2993 = vshll.u32 %v2585, 16
      %v2995 = vrot.slane %v2993, 3
      %v2996 = vor.u32 %v2992, %v2995
      %v2997 = vsel %vm2908, %v2987, %v2996
      %v2999 = vshrl.u32 %v2586, 16
      %v3001 = vrot.slane %v2999, 2
      %v3002 = vshll.u32 %v2586, 16
      %v3004 = vrot.slane %v3002, 3
      %v3005 = vor.u32 %v3001, %v3004
      %v3006 = vsel %vm2908, %v2996, %v3005
      %v3008 = vshrl.u32 %v2587, 16
      %v3010 = vrot.slane %v3008, 2
      %v3011 = vshll.u32 %v2587, 16
      %v3013 = vrot.slane %v3011, 3
      %v3014 = vor.u32 %v3010, %v3013
      %v3015 = vsel %vm2908, %v3005, %v3014
      %v3017 = vshrl.u32 %v2588, 16
      %v3019 = vrot.slane %v3017, 2
      %v3020 = vshll.u32 %v2588, 16
      %v3022 = vrot.slane %v3020, 3
      %v3023 = vor.u32 %v3019, %v3022
      %v3024 = vsel %vm2908, %v3014, %v3023
      %v3026 = vshrl.u32 %v2589, 16
      %v3028 = vrot.slane %v3026, 2
      %v3029 = vshll.u32 %v2589, 16
      %v3031 = vrot.slane %v3029, 3
      %v3032 = vor.u32 %v3028, %v3031
      %v3033 = vsel %vm2908, %v3023, %v3032
      %v3035 = vshrl.u32 %v2590, 16
      %v3037 = vrot.slane %v3035, 2
      %v3038 = vshll.u32 %v2590, 16
      %v3040 = vrot.slane %v3038, 3
      %v3041 = vor.u32 %v3037, %v3040
      %v3042 = vsel %vm2908, %v3032, %v3041
      %v3044 = vshrl.u32 %v2591, 16
      %v3046 = vrot.slane %v3044, 2
      %v3047 = vshll.u32 %v2591, 16
      %v3049 = vrot.slane %v3047, 3
      %v3050 = vor.u32 %v3046, %v3049
      %v3051 = vsel %vm2908, %v3041, %v3050
      %v3053 = vshrl.u32 %v2592, 16
      %v3055 = vrot.slane %v3053, 2
      %v3056 = vshll.u32 %v2592, 16
      %v3058 = vrot.slane %v3056, 3
      %v3059 = vor.u32 %v3055, %v3058
      %v3060 = vsel %vm2908, %v3050, %v3059
      %v3062 = vshrl.u32 %v2593, 16
      %v3064 = vrot.slane %v3062, 2
      %v3065 = vshll.u32 %v2593, 16
      %v3067 = vrot.slane %v3065, 3
      %v3068 = vor.u32 %v3064, %v3067
      %v3069 = vsel %vm2908, %v3059, %v3068
      %v3071 = vshrl.u32 %v2907, 16
      %v3073 = vrot.slane %v3071, 2
      %v3074 = vshll.u32 %v2907, 16
      %v3076 = vrot.slane %v3074, 3
      %v3077 = vor.u32 %v3073, %v3076
      %v3078 = vsel %vm2908, %v3068, %v3077
      %v3080 = vsel %vm494, %v2925, 0
      %v3083 = vsel %vm494, %v2934, 0
      %v3086 = vsel %vm494, %v2943, 0
      %v3089 = vsel %vm494, %v2952, 0
      %v3092 = vsel %vm494, %v2961, 0
      %v3095 = vsel %vm494, %v2970, 0
      %v3098 = vsel %vm494, %v2979, 0
      %v3101 = vsel %vm494, %v2988, 0
      %v3104 = vsel %vm494, %v2997, 0
      %v3107 = vsel %vm494, %v3006, 0
      %v3110 = vsel %vm494, %v3015, 0
      %v3113 = vsel %vm494, %v3024, 0
      %v3116 = vsel %vm494, %v3033, 0
      %v3119 = vsel %vm494, %v3042, 0
      %v3122 = vsel %vm494, %v3051, 0
      %v3125 = vsel %vm494, %v3060, 0
      %v3128 = vsel %vm494, %v3069, 0
      %v3131 = vsel %vm494, %v3078, 0
      %v3134 = vand.u32 %v2904, %v552
      %3136 = vmatprep.subr.bf16.mxu0 0
      %3137 = vmatpush1.bf16.msra.mxu0 0
      %3138 = vmatprep.subr.bf16.mxu0 0
      %3139 = vmatpush1.bf16.msra.mxu0 0
      %3140 = vmatprep.subr.bf16.mxu0 0
      %3141 = vmatpush1.bf16.msra.mxu0 0
      %3142 = vmatprep.subr.bf16.mxu0 0
      %3143 = vmatpush1.bf16.msra.mxu0 0
      %3144 = vmatprep.subr.bf16.mxu0 0
      %3145 = vmatpush1.bf16.msra.mxu0 0
      %3146 = vmatprep.subr.bf16.mxu0 0
      %3147 = vmatpush1.bf16.msra.mxu0 0
      %3148 = vmatprep.subr.bf16.mxu0 0
      %3149 = vmatpush1.bf16.msra.mxu0 0
      %3150 = vmatprep.subr.bf16.mxu0 0
      %3151 = vmatpush1.bf16.msra.mxu0 %v3134
      %3152 = vmatprep.subr.bf16.mxu0 0
      %3153 = vmatpush2.bf16.msra.mxu0 0
      %3154 = vmatprep.subr.bf16.mxu0 0
      %3155 = vmatpush2.bf16.msra.mxu0 0
      %3156 = vmatprep.subr.bf16.mxu0 0
      %3157 = vmatpush2.bf16.msra.mxu0 0
      %3158 = vmatprep.subr.bf16.mxu0 0
      %3159 = vmatpush2.bf16.msra.mxu0 0
      %3160 = vmatprep.subr.bf16.mxu0 0
      %3161 = vmatpush2.bf16.msra.mxu0 0
      %3162 = vmatprep.subr.bf16.mxu0 0
      %3163 = vmatpush2.bf16.msra.mxu0 0
      %3164 = vmatprep.subr.bf16.mxu0 0
      %3165 = vmatpush2.bf16.msra.mxu0 0
      %3166 = vmatprep.subr.bf16.mxu0 0
      %3167 = vmatpush2.bf16.msra.mxu0 0
      %3168 = vmatprep.mubr.bf16.mxu0 0
      %3169 = vmatmul.mubr.bf16.gmra.mxu0 %v3080
      %v3170 = vpop.f32.mrf.mxu0
      %v3171 = vadd.f32 0.0, %v3170
      %v3172 = vpop.f32.mrf.mxu0
      %v3173 = vpop.f32.mrf.mxu0
      %v3174 = vadd.f32 0.0, %v3173
      %v3175 = vpop.f32.mrf.mxu0
      %3176 = vmatprep.mubr.bf16.mxu0 0
      %3177 = vmatmul.mubr.bf16.gmra.mxu0 %v3083
      %v3178 = vpop.f32.mrf.mxu0
      %v3179 = vadd.f32 0.0, %v3178
      %v3180 = vpop.f32.mrf.mxu0
      %v3181 = vpop.f32.mrf.mxu0
      %v3182 = vadd.f32 0.0, %v3181
      %v3183 = vpop.f32.mrf.mxu0
      %3184 = vmatprep.mubr.bf16.mxu0 0
      %3185 = vmatmul.mubr.bf16.gmra.mxu0 %v3086
      %v3186 = vpop.f32.mrf.mxu0
      %v3187 = vadd.f32 0.0, %v3186
      %v3188 = vpop.f32.mrf.mxu0
      %v3189 = vpop.f32.mrf.mxu0
      %v3190 = vadd.f32 0.0, %v3189
      %v3191 = vpop.f32.mrf.mxu0
      %3192 = vmatprep.mubr.bf16.mxu0 0
      %3193 = vmatmul.mubr.bf16.gmra.mxu0 %v3089
      %v3194 = vpop.f32.mrf.mxu0
      %v3195 = vadd.f32 0.0, %v3194
      %v3196 = vpop.f32.mrf.mxu0
      %v3197 = vpop.f32.mrf.mxu0
      %v3198 = vadd.f32 0.0, %v3197
      %v3199 = vpop.f32.mrf.mxu0
      %3200 = vmatprep.mubr.bf16.mxu0 0
      %3201 = vmatmul.mubr.bf16.gmra.mxu0 %v3092
      %v3202 = vpop.f32.mrf.mxu0
      %v3203 = vadd.f32 0.0, %v3202
      %v3204 = vpop.f32.mrf.mxu0
      %v3205 = vpop.f32.mrf.mxu0
      %v3206 = vadd.f32 0.0, %v3205
      %v3207 = vpop.f32.mrf.mxu0
      %3208 = vmatprep.mubr.bf16.mxu0 0
      %3209 = vmatmul.mubr.bf16.gmra.mxu0 %v3095
      %v3210 = vpop.f32.mrf.mxu0
      %v3211 = vadd.f32 0.0, %v3210
      %v3212 = vpop.f32.mrf.mxu0
      %v3213 = vpop.f32.mrf.mxu0
      %v3214 = vadd.f32 0.0, %v3213
      %v3215 = vpop.f32.mrf.mxu0
      %3216 = vmatprep.mubr.bf16.mxu0 0
      %3217 = vmatmul.mubr.bf16.gmra.mxu0 %v3098
      %v3218 = vpop.f32.mrf.mxu0
      %v3219 = vadd.f32 0.0, %v3218
      %v3220 = vpop.f32.mrf.mxu0
      %v3221 = vpop.f32.mrf.mxu0
      %v3222 = vadd.f32 0.0, %v3221
      %v3223 = vpop.f32.mrf.mxu0
      %3224 = vmatprep.mubr.bf16.mxu0 0
      %3225 = vmatmul.mubr.bf16.gmra.mxu0 %v3101
      %v3226 = vpop.f32.mrf.mxu0
      %v3227 = vadd.f32 0.0, %v3226
      %v3228 = vpop.f32.mrf.mxu0
      %v3229 = vpop.f32.mrf.mxu0
      %v3230 = vadd.f32 0.0, %v3229
      %v3231 = vpop.f32.mrf.mxu0
      %3232 = vmatprep.mubr.bf16.mxu0 0
      %3233 = vmatmul.mubr.bf16.gmra.mxu0 %v3104
      %v3234 = vpop.f32.mrf.mxu0
      %v3235 = vadd.f32 0.0, %v3234
      %v3236 = vpop.f32.mrf.mxu0
      %v3237 = vpop.f32.mrf.mxu0
      %v3238 = vadd.f32 0.0, %v3237
      %v3239 = vpop.f32.mrf.mxu0
      %3240 = vmatprep.mubr.bf16.mxu0 0
      %3241 = vmatmul.mubr.bf16.gmra.mxu0 %v3107
      %v3242 = vpop.f32.mrf.mxu0
      %v3243 = vadd.f32 0.0, %v3242
      %v3244 = vpop.f32.mrf.mxu0
      %v3245 = vpop.f32.mrf.mxu0
      %v3246 = vadd.f32 0.0, %v3245
      %v3247 = vpop.f32.mrf.mxu0
      %3248 = vmatprep.mubr.bf16.mxu0 0
      %3249 = vmatmul.mubr.bf16.gmra.mxu0 %v3110
      %v3250 = vpop.f32.mrf.mxu0
      %v3251 = vadd.f32 0.0, %v3250
      %v3252 = vpop.f32.mrf.mxu0
      %v3253 = vpop.f32.mrf.mxu0
      %v3254 = vadd.f32 0.0, %v3253
      %v3255 = vpop.f32.mrf.mxu0
      %3256 = vmatprep.mubr.bf16.mxu0 0
      %3257 = vmatmul.mubr.bf16.gmra.mxu0 %v3113
      %v3258 = vpop.f32.mrf.mxu0
      %v3259 = vadd.f32 0.0, %v3258
      %v3260 = vpop.f32.mrf.mxu0
      %v3261 = vpop.f32.mrf.mxu0
      %v3262 = vadd.f32 0.0, %v3261
      %v3263 = vpop.f32.mrf.mxu0
      %3264 = vmatprep.mubr.bf16.mxu0 0
      %3265 = vmatmul.mubr.bf16.gmra.mxu0 %v3116
      %v3266 = vpop.f32.mrf.mxu0
      %v3267 = vadd.f32 0.0, %v3266
      %v3268 = vpop.f32.mrf.mxu0
      %v3269 = vpop.f32.mrf.mxu0
      %v3270 = vadd.f32 0.0, %v3269
      %v3271 = vpop.f32.mrf.mxu0
      %3272 = vmatprep.mubr.bf16.mxu0 0
      %3273 = vmatmul.mubr.bf16.gmra.mxu0 %v3119
      %v3274 = vpop.f32.mrf.mxu0
      %v3275 = vadd.f32 0.0, %v3274
      %v3276 = vpop.f32.mrf.mxu0
      %v3277 = vpop.f32.mrf.mxu0
      %v3278 = vadd.f32 0.0, %v3277
      %v3279 = vpop.f32.mrf.mxu0
      %3280 = vmatprep.mubr.bf16.mxu0 0
      %3281 = vmatmul.mubr.bf16.gmra.mxu0 %v3122
      %v3282 = vpop.f32.mrf.mxu0
      %v3283 = vadd.f32 0.0, %v3282
      %v3284 = vpop.f32.mrf.mxu0
      %v3285 = vpop.f32.mrf.mxu0
      %v3286 = vadd.f32 0.0, %v3285
      %v3287 = vpop.f32.mrf.mxu0
      %3288 = vmatprep.mubr.bf16.mxu0 0
      %3289 = vmatmul.mubr.bf16.gmra.mxu0 %v3125
      %v3290 = vpop.f32.mrf.mxu0
      %v3291 = vadd.f32 0.0, %v3290
      %v3292 = vpop.f32.mrf.mxu0
      %v3293 = vpop.f32.mrf.mxu0
      %v3294 = vadd.f32 0.0, %v3293
      %v3295 = vpop.f32.mrf.mxu0
      %3296 = vmatprep.mubr.bf16.mxu0 0
      %3297 = vmatmul.mubr.bf16.gmra.mxu0 %v3128
      %v3298 = vpop.f32.mrf.mxu0
      %v3299 = vadd.f32 0.0, %v3298
      %v3300 = vpop.f32.mrf.mxu0
      %v3301 = vpop.f32.mrf.mxu0
      %v3302 = vadd.f32 0.0, %v3301
      %v3303 = vpop.f32.mrf.mxu0
      %3304 = vmatprep.mubr.bf16.mxu0 0
      %3305 = vmatmul.mubr.bf16.gmra.mxu0 %v3131
      %v3306 = vpop.f32.mrf.mxu0
      %v3307 = vadd.f32 0.0, %v3306
      %v3308 = vpop.f32.mrf.mxu0
      %v3309 = vpop.f32.mrf.mxu0
      %v3310 = vadd.f32 0.0, %v3309
      %v3311 = vpop.f32.mrf.mxu0
      %3312 = vdwg.mxu0
      %v3313 = vadd.f32 %v2866, %v3171
      %v3314 = vadd.f32 %v2867, %v3174
      %v3315 = vadd.f32 %v2868, %v3179
      %v3316 = vadd.f32 %v2869, %v3182
      %v3317 = vadd.f32 %v2870, %v3187
      %v3318 = vadd.f32 %v2871, %v3190
      %v3319 = vadd.f32 %v2872, %v3195
      %v3320 = vadd.f32 %v2873, %v3198
      %v3321 = vadd.f32 %v2874, %v3203
      %v3322 = vadd.f32 %v2875, %v3206
      %v3323 = vadd.f32 %v2876, %v3211
      %v3324 = vadd.f32 %v2877, %v3214
      %v3325 = vadd.f32 %v2878, %v3219
      %v3326 = vadd.f32 %v2879, %v3222
      %v3327 = vadd.f32 %v2880, %v3227
      %v3328 = vadd.f32 %v2881, %v3230
      %v3329 = vadd.f32 %v2882, %v3235
      %v3330 = vadd.f32 %v2883, %v3238
      %v3331 = vadd.f32 %v2884, %v3243
      %v3332 = vadd.f32 %v2885, %v3246
      %v3333 = vadd.f32 %v2886, %v3251
      %v3334 = vadd.f32 %v2887, %v3254
      %v3335 = vadd.f32 %v2888, %v3259
      %v3336 = vadd.f32 %v2889, %v3262
      %v3337 = vadd.f32 %v2890, %v3267
      %v3338 = vadd.f32 %v2891, %v3270
      %v3339 = vadd.f32 %v2892, %v3275
      %v3340 = vadd.f32 %v2893, %v3278
      %v3341 = vadd.f32 %v2894, %v3283
      %v3342 = vadd.f32 %v2895, %v3286
      %v3343 = vadd.f32 %v2896, %v3291
      %v3344 = vadd.f32 %v2897, %v3294
      %v3345 = vadd.f32 %v2898, %v3299
      %v3346 = vadd.f32 %v2899, %v3302
      %v3347 = vadd.f32 %v2900, %v3307
      %v3348 = vadd.f32 %v2901, %v3310
      %v3349 = vld [vmem:[%s200 + $0x10] sm:$0x8]
      %s3350 = scalar_lea.vmem %s1, 16
      %v3351 = vld [vmem:[%s3350] sm:$0x3]
      %v3353 = vunpack.c.l.b16 %v3349
      %v3354 = vpack.c.b16 %v2540, %v3353
      %vm3355 = vcmask 1044480
      %v3356 = vrot.slane %v3354, 3
      %v3357 = vrot.slane %v2577, 3
      %v3358 = vsel %vm3355, %v3356, %v3357
      %v3359 = vrot.slane %v2578, 3
      %v3360 = vsel %vm3355, %v3357, %v3359
      %v3361 = vrot.slane %v2579, 3
      %v3362 = vsel %vm3355, %v3359, %v3361
      %v3363 = vrot.slane %v2580, 3
      %v3364 = vsel %vm3355, %v3361, %v3363
      %v3365 = vrot.slane %v2581, 3
      %v3366 = vsel %vm3355, %v3363, %v3365
      %v3367 = vrot.slane %v2582, 3
      %v3368 = vsel %vm3355, %v3365, %v3367
      %v3369 = vrot.slane %v2583, 3
      %v3370 = vsel %vm3355, %v3367, %v3369
      %v3371 = vrot.slane %v2584, 3
      %v3372 = vsel %vm3355, %v3369, %v3371
      %v3373 = vrot.slane %v2585, 3
      %v3374 = vsel %vm3355, %v3371, %v3373
      %v3375 = vrot.slane %v2586, 3
      %v3376 = vsel %vm3355, %v3373, %v3375
      %v3377 = vrot.slane %v2587, 3
      %v3378 = vsel %vm3355, %v3375, %v3377
      %v3379 = vrot.slane %v2588, 3
      %v3380 = vsel %vm3355, %v3377, %v3379
      %v3381 = vrot.slane %v2589, 3
      %v3382 = vsel %vm3355, %v3379, %v3381
      %v3383 = vrot.slane %v2590, 3
      %v3384 = vsel %vm3355, %v3381, %v3383
      %v3385 = vrot.slane %v2591, 3
      %v3386 = vsel %vm3355, %v3383, %v3385
      %v3387 = vrot.slane %v2592, 3
      %v3388 = vsel %vm3355, %v3385, %v3387
      %v3389 = vrot.slane %v2593, 3
      %v3390 = vsel %vm3355, %v3387, %v3389
      %v3391 = vrot.slane %v2907, 3
      %v3392 = vsel %vm3355, %v3389, %v3391
      %v3394 = vsel %vm494, %v3358, 0
      %v3397 = vsel %vm494, %v3360, 0
      %v3400 = vsel %vm494, %v3362, 0
      %v3403 = vsel %vm494, %v3364, 0
      %v3406 = vsel %vm494, %v3366, 0
      %v3409 = vsel %vm494, %v3368, 0
      %v3412 = vsel %vm494, %v3370, 0
      %v3415 = vsel %vm494, %v3372, 0
      %v3418 = vsel %vm494, %v3374, 0
      %v3421 = vsel %vm494, %v3376, 0
      %v3424 = vsel %vm494, %v3378, 0
      %v3427 = vsel %vm494, %v3380, 0
      %v3430 = vsel %vm494, %v3382, 0
      %v3433 = vsel %vm494, %v3384, 0
      %v3436 = vsel %vm494, %v3386, 0
      %v3439 = vsel %vm494, %v3388, 0
      %v3442 = vsel %vm494, %v3390, 0
      %v3445 = vsel %vm494, %v3392, 0
      %v3448 = vand.u32 %v3351, %v552
      %3450 = vmatprep.subr.bf16.mxu0 0
      %3451 = vmatpush1.bf16.msra.mxu0 0
      %3452 = vmatprep.subr.bf16.mxu0 0
      %3453 = vmatpush1.bf16.msra.mxu0 0
      %3454 = vmatprep.subr.bf16.mxu0 0
      %3455 = vmatpush1.bf16.msra.mxu0 0
      %3456 = vmatprep.subr.bf16.mxu0 0
      %3457 = vmatpush1.bf16.msra.mxu0 0
      %3458 = vmatprep.subr.bf16.mxu0 0
      %3459 = vmatpush1.bf16.msra.mxu0 0
      %3460 = vmatprep.subr.bf16.mxu0 0
      %3461 = vmatpush1.bf16.msra.mxu0 0
      %3462 = vmatprep.subr.bf16.mxu0 0
      %3463 = vmatpush1.bf16.msra.mxu0 0
      %3464 = vmatprep.subr.bf16.mxu0 0
      %3465 = vmatpush1.bf16.msra.mxu0 %v3448
      %3466 = vmatprep.subr.bf16.mxu0 0
      %3467 = vmatpush2.bf16.msra.mxu0 0
      %3468 = vmatprep.subr.bf16.mxu0 0
      %3469 = vmatpush2.bf16.msra.mxu0 0
      %3470 = vmatprep.subr.bf16.mxu0 0
      %3471 = vmatpush2.bf16.msra.mxu0 0
      %3472 = vmatprep.subr.bf16.mxu0 0
      %3473 = vmatpush2.bf16.msra.mxu0 0
      %3474 = vmatprep.subr.bf16.mxu0 0
      %3475 = vmatpush2.bf16.msra.mxu0 0
      %3476 = vmatprep.subr.bf16.mxu0 0
      %3477 = vmatpush2.bf16.msra.mxu0 0
      %3478 = vmatprep.subr.bf16.mxu0 0
      %3479 = vmatpush2.bf16.msra.mxu0 0
      %3480 = vmatprep.subr.bf16.mxu0 0
      %3481 = vmatpush2.bf16.msra.mxu0 0
      %3482 = vmatprep.mubr.bf16.mxu0 0
      %3483 = vmatmul.mubr.bf16.gmra.mxu0 %v3394
      %v3484 = vpop.f32.mrf.mxu0
      %v3485 = vadd.f32 0.0, %v3484
      %v3486 = vpop.f32.mrf.mxu0
      %v3487 = vpop.f32.mrf.mxu0
      %v3488 = vadd.f32 0.0, %v3487
      %v3489 = vpop.f32.mrf.mxu0
      %3490 = vmatprep.mubr.bf16.mxu0 0
      %3491 = vmatmul.mubr.bf16.gmra.mxu0 %v3397
      %v3492 = vpop.f32.mrf.mxu0
      %v3493 = vadd.f32 0.0, %v3492
      %v3494 = vpop.f32.mrf.mxu0
      %v3495 = vpop.f32.mrf.mxu0
      %v3496 = vadd.f32 0.0, %v3495
      %v3497 = vpop.f32.mrf.mxu0
      %3498 = vmatprep.mubr.bf16.mxu0 0
      %3499 = vmatmul.mubr.bf16.gmra.mxu0 %v3400
      %v3500 = vpop.f32.mrf.mxu0
      %v3501 = vadd.f32 0.0, %v3500
      %v3502 = vpop.f32.mrf.mxu0
      %v3503 = vpop.f32.mrf.mxu0
      %v3504 = vadd.f32 0.0, %v3503
      %v3505 = vpop.f32.mrf.mxu0
      %3506 = vmatprep.mubr.bf16.mxu0 0
      %3507 = vmatmul.mubr.bf16.gmra.mxu0 %v3403
      %v3508 = vpop.f32.mrf.mxu0
      %v3509 = vadd.f32 0.0, %v3508
      %v3510 = vpop.f32.mrf.mxu0
      %v3511 = vpop.f32.mrf.mxu0
      %v3512 = vadd.f32 0.0, %v3511
      %v3513 = vpop.f32.mrf.mxu0
      %3514 = vmatprep.mubr.bf16.mxu0 0
      %3515 = vmatmul.mubr.bf16.gmra.mxu0 %v3406
      %v3516 = vpop.f32.mrf.mxu0
      %v3517 = vadd.f32 0.0, %v3516
      %v3518 = vpop.f32.mrf.mxu0
      %v3519 = vpop.f32.mrf.mxu0
      %v3520 = vadd.f32 0.0, %v3519
      %v3521 = vpop.f32.mrf.mxu0
      %3522 = vmatprep.mubr.bf16.mxu0 0
      %3523 = vmatmul.mubr.bf16.gmra.mxu0 %v3409
      %v3524 = vpop.f32.mrf.mxu0
      %v3525 = vadd.f32 0.0, %v3524
      %v3526 = vpop.f32.mrf.mxu0
      %v3527 = vpop.f32.mrf.mxu0
      %v3528 = vadd.f32 0.0, %v3527
      %v3529 = vpop.f32.mrf.mxu0
      %3530 = vmatprep.mubr.bf16.mxu0 0
      %3531 = vmatmul.mubr.bf16.gmra.mxu0 %v3412
      %v3532 = vpop.f32.mrf.mxu0
      %v3533 = vadd.f32 0.0, %v3532
      %v3534 = vpop.f32.mrf.mxu0
      %v3535 = vpop.f32.mrf.mxu0
      %v3536 = vadd.f32 0.0, %v3535
      %v3537 = vpop.f32.mrf.mxu0
      %3538 = vmatprep.mubr.bf16.mxu0 0
      %3539 = vmatmul.mubr.bf16.gmra.mxu0 %v3415
      %v3540 = vpop.f32.mrf.mxu0
      %v3541 = vadd.f32 0.0, %v3540
      %v3542 = vpop.f32.mrf.mxu0
      %v3543 = vpop.f32.mrf.mxu0
      %v3544 = vadd.f32 0.0, %v3543
      %v3545 = vpop.f32.mrf.mxu0
      %3546 = vmatprep.mubr.bf16.mxu0 0
      %3547 = vmatmul.mubr.bf16.gmra.mxu0 %v3418
      %v3548 = vpop.f32.mrf.mxu0
      %v3549 = vadd.f32 0.0, %v3548
      %v3550 = vpop.f32.mrf.mxu0
      %v3551 = vpop.f32.mrf.mxu0
      %v3552 = vadd.f32 0.0, %v3551
      %v3553 = vpop.f32.mrf.mxu0
      %3554 = vmatprep.mubr.bf16.mxu0 0
      %3555 = vmatmul.mubr.bf16.gmra.mxu0 %v3421
      %v3556 = vpop.f32.mrf.mxu0
      %v3557 = vadd.f32 0.0, %v3556
      %v3558 = vpop.f32.mrf.mxu0
      %v3559 = vpop.f32.mrf.mxu0
      %v3560 = vadd.f32 0.0, %v3559
      %v3561 = vpop.f32.mrf.mxu0
      %3562 = vmatprep.mubr.bf16.mxu0 0
      %3563 = vmatmul.mubr.bf16.gmra.mxu0 %v3424
      %v3564 = vpop.f32.mrf.mxu0
      %v3565 = vadd.f32 0.0, %v3564
      %v3566 = vpop.f32.mrf.mxu0
      %v3567 = vpop.f32.mrf.mxu0
      %v3568 = vadd.f32 0.0, %v3567
      %v3569 = vpop.f32.mrf.mxu0
      %3570 = vmatprep.mubr.bf16.mxu0 0
      %3571 = vmatmul.mubr.bf16.gmra.mxu0 %v3427
      %v3572 = vpop.f32.mrf.mxu0
      %v3573 = vadd.f32 0.0, %v3572
      %v3574 = vpop.f32.mrf.mxu0
      %v3575 = vpop.f32.mrf.mxu0
      %v3576 = vadd.f32 0.0, %v3575
      %v3577 = vpop.f32.mrf.mxu0
      %3578 = vmatprep.mubr.bf16.mxu0 0
      %3579 = vmatmul.mubr.bf16.gmra.mxu0 %v3430
      %v3580 = vpop.f32.mrf.mxu0
      %v3581 = vadd.f32 0.0, %v3580
      %v3582 = vpop.f32.mrf.mxu0
      %v3583 = vpop.f32.mrf.mxu0
      %v3584 = vadd.f32 0.0, %v3583
      %v3585 = vpop.f32.mrf.mxu0
      %3586 = vmatprep.mubr.bf16.mxu0 0
      %3587 = vmatmul.mubr.bf16.gmra.mxu0 %v3433
      %v3588 = vpop.f32.mrf.mxu0
      %v3589 = vadd.f32 0.0, %v3588
      %v3590 = vpop.f32.mrf.mxu0
      %v3591 = vpop.f32.mrf.mxu0
      %v3592 = vadd.f32 0.0, %v3591
      %v3593 = vpop.f32.mrf.mxu0
      %3594 = vmatprep.mubr.bf16.mxu0 0
      %3595 = vmatmul.mubr.bf16.gmra.mxu0 %v3436
      %v3596 = vpop.f32.mrf.mxu0
      %v3597 = vadd.f32 0.0, %v3596
      %v3598 = vpop.f32.mrf.mxu0
      %v3599 = vpop.f32.mrf.mxu0
      %v3600 = vadd.f32 0.0, %v3599
      %v3601 = vpop.f32.mrf.mxu0
      %3602 = vmatprep.mubr.bf16.mxu0 0
      %3603 = vmatmul.mubr.bf16.gmra.mxu0 %v3439
      %v3604 = vpop.f32.mrf.mxu0
      %v3605 = vadd.f32 0.0, %v3604
      %v3606 = vpop.f32.mrf.mxu0
      %v3607 = vpop.f32.mrf.mxu0
      %v3608 = vadd.f32 0.0, %v3607
      %v3609 = vpop.f32.mrf.mxu0
      %3610 = vmatprep.mubr.bf16.mxu0 0
      %3611 = vmatmul.mubr.bf16.gmra.mxu0 %v3442
      %v3612 = vpop.f32.mrf.mxu0
      %v3613 = vadd.f32 0.0, %v3612
      %v3614 = vpop.f32.mrf.mxu0
      %v3615 = vpop.f32.mrf.mxu0
      %v3616 = vadd.f32 0.0, %v3615
      %v3617 = vpop.f32.mrf.mxu0
      %3618 = vmatprep.mubr.bf16.mxu0 0
      %3619 = vmatmul.mubr.bf16.gmra.mxu0 %v3445
      %v3620 = vpop.f32.mrf.mxu0
      %v3621 = vadd.f32 0.0, %v3620
      %v3622 = vpop.f32.mrf.mxu0
      %v3623 = vpop.f32.mrf.mxu0
      %v3624 = vadd.f32 0.0, %v3623
      %v3625 = vpop.f32.mrf.mxu0
      %3626 = vdwg.mxu0
      %v3627 = vadd.f32 %v3313, %v3485
      %v3628 = vadd.f32 %v3314, %v3488
      %v3629 = vadd.f32 %v3315, %v3493
      %v3630 = vadd.f32 %v3316, %v3496
      %v3631 = vadd.f32 %v3317, %v3501
      %v3632 = vadd.f32 %v3318, %v3504
      %v3633 = vadd.f32 %v3319, %v3509
      %v3634 = vadd.f32 %v3320, %v3512
      %v3635 = vadd.f32 %v3321, %v3517
      %v3636 = vadd.f32 %v3322, %v3520
      %v3637 = vadd.f32 %v3323, %v3525
      %v3638 = vadd.f32 %v3324, %v3528
      %v3639 = vadd.f32 %v3325, %v3533
      %v3640 = vadd.f32 %v3326, %v3536
      %v3641 = vadd.f32 %v3327, %v3541
      %v3642 = vadd.f32 %v3328, %v3544
      %v3643 = vadd.f32 %v3329, %v3549
      %v3644 = vadd.f32 %v3330, %v3552
      %v3645 = vadd.f32 %v3331, %v3557
      %v3646 = vadd.f32 %v3332, %v3560
      %v3647 = vadd.f32 %v3333, %v3565
      %v3648 = vadd.f32 %v3334, %v3568
      %v3649 = vadd.f32 %v3335, %v3573
      %v3650 = vadd.f32 %v3336, %v3576
      %v3651 = vadd.f32 %v3337, %v3581
      %v3652 = vadd.f32 %v3338, %v3584
      %v3653 = vadd.f32 %v3339, %v3589
      %v3654 = vadd.f32 %v3340, %v3592
      %v3655 = vadd.f32 %v3341, %v3597
      %v3656 = vadd.f32 %v3342, %v3600
      %v3657 = vadd.f32 %v3343, %v3605
      %v3658 = vadd.f32 %v3344, %v3608
      %v3659 = vadd.f32 %v3345, %v3613
      %v3660 = vadd.f32 %v3346, %v3616
      %v3661 = vadd.f32 %v3347, %v3621
      %v3662 = vadd.f32 %v3348, %v3624
      %v3663 = vld [vmem:[%s2] sm:$0x1]
      %v3665 = vlaneseq
      %v3666 = vshrl.u32 %v3665, 7
      %v3667 = vsub.s32 0, %v3666
      %v3668 = vrot.slane %v3663, %v3667
      %v3670 = vadd.f32 %v3627, %v3668
      %v3671 = vadd.f32 %v3628, %v3668
      %v3672 = vadd.f32 %v3629, %v3668
      %v3673 = vadd.f32 %v3630, %v3668
      %v3674 = vadd.f32 %v3631, %v3668
      %v3675 = vadd.f32 %v3632, %v3668
      %v3676 = vadd.f32 %v3633, %v3668
      %v3677 = vadd.f32 %v3634, %v3668
      %v3678 = vadd.f32 %v3635, %v3668
      %v3679 = vadd.f32 %v3636, %v3668
      %v3680 = vadd.f32 %v3637, %v3668
      %v3681 = vadd.f32 %v3638, %v3668
      %v3682 = vadd.f32 %v3639, %v3668
      %v3683 = vadd.f32 %v3640, %v3668
      %v3684 = vadd.f32 %v3641, %v3668
      %v3685 = vadd.f32 %v3642, %v3668
      %v3686 = vadd.f32 %v3643, %v3668
      %v3687 = vadd.f32 %v3644, %v3668
      %v3688 = vadd.f32 %v3645, %v3668
      %v3689 = vadd.f32 %v3646, %v3668
      %v3690 = vadd.f32 %v3647, %v3668
      %v3691 = vadd.f32 %v3648, %v3668
      %v3692 = vadd.f32 %v3649, %v3668
      %v3693 = vadd.f32 %v3650, %v3668
      %v3694 = vadd.f32 %v3651, %v3668
      %v3695 = vadd.f32 %v3652, %v3668
      %v3696 = vadd.f32 %v3653, %v3668
      %v3697 = vadd.f32 %v3654, %v3668
      %v3698 = vadd.f32 %v3655, %v3668
      %v3699 = vadd.f32 %v3656, %v3668
      %v3700 = vadd.f32 %v3657, %v3668
      %v3701 = vadd.f32 %v3658, %v3668
      %v3702 = vadd.f32 %v3659, %v3668
      %v3703 = vadd.f32 %v3660, %v3668
      %v3704 = vadd.f32 %v3661, %v3668
      %v3705 = vadd.f32 %v3662, %v3668
      %vm3706 = vcmask 523264
      %3707 = vst.msk [vmem:[%s205] sm:$0xff] %vm3706, %v3670
      %3708 = vst.msk [vmem:[%s205 + $0x8] sm:$0xff] %vm3706, %v3671
      %3709 = vst.msk [vmem:[%s205 + $0x10] sm:$0xff] %vm3706, %v3672
      %3710 = vst.msk [vmem:[%s205 + $0x18] sm:$0xff] %vm3706, %v3673
      %3711 = vst.msk [vmem:[%s205 + $0x20] sm:$0xff] %vm3706, %v3674
      %3712 = vst.msk [vmem:[%s205 + $0x28] sm:$0xff] %vm3706, %v3675
      %3713 = vst.msk [vmem:[%s205 + $0x30] sm:$0xff] %vm3706, %v3676
      %3714 = vst.msk [vmem:[%s205 + $0x38] sm:$0xff] %vm3706, %v3677
      %3715 = vst.msk [vmem:[%s205 + $0x40] sm:$0xff] %vm3706, %v3678
      %3716 = vst.msk [vmem:[%s205 + $0x48] sm:$0xff] %vm3706, %v3679
      %3717 = vst.msk [vmem:[%s205 + $0x50] sm:$0xff] %vm3706, %v3680
      %3718 = vst.msk [vmem:[%s205 + $0x58] sm:$0xff] %vm3706, %v3681
      %3719 = vst.msk [vmem:[%s205 + $0x60] sm:$0xff] %vm3706, %v3682
      %3720 = vst.msk [vmem:[%s205 + $0x68] sm:$0xff] %vm3706, %v3683
      %3721 = vst.msk [vmem:[%s205 + $0x70] sm:$0xff] %vm3706, %v3684
      %3722 = vst.msk [vmem:[%s205 + $0x78] sm:$0xff] %vm3706, %v3685
      %3723 = vst.msk [vmem:[%s205 + $0x80] sm:$0xff] %vm3706, %v3686
      %3724 = vst.msk [vmem:[%s205 + $0x88] sm:$0xff] %vm3706, %v3687
      %3725 = vst.msk [vmem:[%s205 + $0x90] sm:$0xff] %vm3706, %v3688
      %3726 = vst.msk [vmem:[%s205 + $0x98] sm:$0xff] %vm3706, %v3689
      %3727 = vst.msk [vmem:[%s205 + $0xa0] sm:$0xff] %vm3706, %v3690
      %3728 = vst.msk [vmem:[%s205 + $0xa8] sm:$0xff] %vm3706, %v3691
      %3729 = vst.msk [vmem:[%s205 + $0xb0] sm:$0xff] %vm3706, %v3692
      %3730 = vst.msk [vmem:[%s205 + $0xb8] sm:$0xff] %vm3706, %v3693
      %3731 = vst.msk [vmem:[%s205 + $0xc0] sm:$0xff] %vm3706, %v3694
      %3732 = vst.msk [vmem:[%s205 + $0xc8] sm:$0xff] %vm3706, %v3695
      %3733 = vst.msk [vmem:[%s205 + $0xd0] sm:$0xff] %vm3706, %v3696
      %3734 = vst.msk [vmem:[%s205 + $0xd8] sm:$0xff] %vm3706, %v3697
      %3735 = vst.msk [vmem:[%s205 + $0xe0] sm:$0xff] %vm3706, %v3698
      %3736 = vst.msk [vmem:[%s205 + $0xe8] sm:$0xff] %vm3706, %v3699
      %3737 = vst.msk [vmem:[%s205 + $0xf0] sm:$0xff] %vm3706, %v3700
      %3738 = vst.msk [vmem:[%s205 + $0xf8] sm:$0xff] %vm3706, %v3701
      %3739 = vst.msk [vmem:[%s205 + $0x100] sm:$0xff] %vm3706, %v3702
      %3740 = vst.msk [vmem:[%s205 + $0x108] sm:$0xff] %vm3706, %v3703
      %3741 = vst.msk [vmem:[%s205 + $0x110] sm:$0xff] %vm3706, %v3704
      %3742 = vst.msk [vmem:[%s205 + $0x118] sm:$0xff] %vm3706, %v3705
      %v3743 = vmax.f32 %v3670, 0.0
      %v3744 = vmax.f32 %v3671, 0.0
      %v3745 = vmax.f32 %v3672, 0.0
      %v3746 = vmax.f32 %v3673, 0.0
      %v3747 = vmax.f32 %v3674, 0.0
      %v3748 = vmax.f32 %v3675, 0.0
      %v3749 = vmax.f32 %v3676, 0.0
      %v3750 = vmax.f32 %v3677, 0.0
      %v3751 = vmax.f32 %v3678, 0.0
      %v3752 = vmax.f32 %v3679, 0.0
      %v3753 = vmax.f32 %v3680, 0.0
      %v3754 = vmax.f32 %v3681, 0.0
      %v3755 = vmax.f32 %v3682, 0.0
      %v3756 = vmax.f32 %v3683, 0.0
      %v3757 = vmax.f32 %v3684, 0.0
      %v3758 = vmax.f32 %v3685, 0.0
      %v3759 = vmax.f32 %v3686, 0.0
      %v3760 = vmax.f32 %v3687, 0.0
      %v3761 = vmax.f32 %v3688, 0.0
      %v3762 = vmax.f32 %v3689, 0.0
      %v3763 = vmax.f32 %v3690, 0.0
      %v3764 = vmax.f32 %v3691, 0.0
      %v3765 = vmax.f32 %v3692, 0.0
      %v3766 = vmax.f32 %v3693, 0.0
      %v3767 = vmax.f32 %v3694, 0.0
      %v3768 = vmax.f32 %v3695, 0.0
      %v3769 = vmax.f32 %v3696, 0.0
      %v3770 = vmax.f32 %v3697, 0.0
      %v3771 = vmax.f32 %v3698, 0.0
      %v3772 = vmax.f32 %v3699, 0.0
      %v3773 = vmax.f32 %v3700, 0.0
      %v3774 = vmax.f32 %v3701, 0.0
      %v3775 = vmax.f32 %v3702, 0.0
      %v3776 = vmax.f32 %v3703, 0.0
      %v3777 = vmax.f32 %v3704, 0.0
      %v3778 = vmax.f32 %v3705, 0.0
      %v3779 = vpack.c.bf16 %v3744, %v3743
      %v3780 = vpack.c.bf16 %v3746, %v3745
      %v3781 = vpack.c.bf16 %v3748, %v3747
      %v3782 = vpack.c.bf16 %v3750, %v3749
      %v3783 = vpack.c.bf16 %v3752, %v3751
      %v3784 = vpack.c.bf16 %v3754, %v3753
      %v3785 = vpack.c.bf16 %v3756, %v3755
      %v3786 = vpack.c.bf16 %v3758, %v3757
      %v3787 = vpack.c.bf16 %v3760, %v3759
      %v3788 = vpack.c.bf16 %v3762, %v3761
      %v3789 = vpack.c.bf16 %v3764, %v3763
      %v3790 = vpack.c.bf16 %v3766, %v3765
      %v3791 = vpack.c.bf16 %v3768, %v3767
      %v3792 = vpack.c.bf16 %v3770, %v3769
      %v3793 = vpack.c.bf16 %v3772, %v3771
      %v3794 = vpack.c.bf16 %v3774, %v3773
      %v3795 = vpack.c.bf16 %v3776, %v3775
      %v3796 = vpack.c.bf16 %v3778, %v3777
      %v3815 = vunpack.c.l.b16 %v3779
      %v3816 = vunpack.c.h.b16 %v3779
      %v3817 = vunpack.c.l.b16 %v3780
      %v3818 = vunpack.c.h.b16 %v3780
      %v3819 = vunpack.c.l.b16 %v3781
      %v3820 = vunpack.c.h.b16 %v3781
      %v3821 = vunpack.c.l.b16 %v3782
      %v3822 = vunpack.c.h.b16 %v3782
      %v3823 = vunpack.c.l.b16 %v3783
      %v3824 = vunpack.c.h.b16 %v3783
      %v3825 = vunpack.c.l.b16 %v3784
      %v3826 = vunpack.c.h.b16 %v3784
      %v3827 = vunpack.c.l.b16 %v3785
      %v3828 = vunpack.c.h.b16 %v3785
      %v3829 = vunpack.c.l.b16 %v3786
      %v3830 = vunpack.c.h.b16 %v3786
      %v3831 = vunpack.c.l.b16 %v3787
      %v3832 = vunpack.c.h.b16 %v3787
      %v3833 = vunpack.c.l.b16 %v3788
      %v3834 = vunpack.c.h.b16 %v3788
      %v3835 = vunpack.c.l.b16 %v3789
      %v3836 = vunpack.c.h.b16 %v3789
      %v3837 = vunpack.c.l.b16 %v3790
      %v3838 = vunpack.c.h.b16 %v3790
      %v3839 = vunpack.c.l.b16 %v3791
      %v3840 = vunpack.c.h.b16 %v3791
      %v3841 = vunpack.c.l.b16 %v3792
      %v3842 = vunpack.c.h.b16 %v3792
      %v3843 = vunpack.c.l.b16 %v3793
      %v3844 = vunpack.c.h.b16 %v3793
      %v3845 = vunpack.c.l.b16 %v3794
      %v3846 = vunpack.c.h.b16 %v3794
      %v3847 = vunpack.c.l.b16 %v3795
      %v3848 = vunpack.c.h.b16 %v3795
      %v3849 = vunpack.c.l.b16 %v3796
      %v3850 = vunpack.c.h.b16 %v3796
      %v3851 = vpack.c.b16 %v3815, %v3815
      %v3852 = vpack.c.b16 %v3816, %v3816
      %v3853 = vpack.c.b16 %v3817, %v3817
      %v3854 = vpack.c.b16 %v3818, %v3818
      %v3855 = vpack.c.b16 %v3819, %v3819
      %v3856 = vpack.c.b16 %v3820, %v3820
      %v3857 = vpack.c.b16 %v3821, %v3821
      %v3858 = vpack.c.b16 %v3822, %v3822
      %v3859 = vpack.c.b16 %v3823, %v3823
      %v3860 = vpack.c.b16 %v3824, %v3824
      %v3861 = vpack.c.b16 %v3825, %v3825
      %v3862 = vpack.c.b16 %v3826, %v3826
      %v3863 = vpack.c.b16 %v3827, %v3827
      %v3864 = vpack.c.b16 %v3828, %v3828
      %v3865 = vpack.c.b16 %v3829, %v3829
      %v3866 = vpack.c.b16 %v3830, %v3830
      %v3867 = vpack.c.b16 %v3831, %v3831
      %v3868 = vpack.c.b16 %v3832, %v3832
      %v3869 = vpack.c.b16 %v3833, %v3833
      %v3870 = vpack.c.b16 %v3834, %v3834
      %v3871 = vpack.c.b16 %v3835, %v3835
      %v3872 = vpack.c.b16 %v3836, %v3836
      %v3873 = vpack.c.b16 %v3837, %v3837
      %v3874 = vpack.c.b16 %v3838, %v3838
      %v3875 = vpack.c.b16 %v3839, %v3839
      %v3876 = vpack.c.b16 %v3840, %v3840
      %v3877 = vpack.c.b16 %v3841, %v3841
      %v3878 = vpack.c.b16 %v3842, %v3842
      %v3879 = vpack.c.b16 %v3843, %v3843
      %v3880 = vpack.c.b16 %v3844, %v3844
      %v3881 = vpack.c.b16 %v3845, %v3845
      %v3882 = vpack.c.b16 %v3846, %v3846
      %v3883 = vpack.c.b16 %v3847, %v3847
      %v3884 = vpack.c.b16 %v3848, %v3848
      %v3885 = vpack.c.b16 %v3849, %v3849
      %v3886 = vpack.c.b16 %v3850, %v3850
      %vm3923 = vcmask 519168
      %3924 = vst.msk [vmem:[%s210] sm:$0xf] %vm3923, %v3851
      %3925 = vst.msk [vmem:[%s210 + $0x4] sm:$0xf] %vm3923, %v3852
      %3926 = vst.msk [vmem:[%s210 + $0x8] sm:$0xf] %vm3923, %v3853
      %3927 = vst.msk [vmem:[%s210 + $0xc] sm:$0xf] %vm3923, %v3854
      %3928 = vst.msk [vmem:[%s210 + $0x10] sm:$0xf] %vm3923, %v3855
      %3929 = vst.msk [vmem:[%s210 + $0x14] sm:$0xf] %vm3923, %v3856
      %3930 = vst.msk [vmem:[%s210 + $0x18] sm:$0xf] %vm3923, %v3857
      %3931 = vst.msk [vmem:[%s210 + $0x1c] sm:$0xf] %vm3923, %v3858
      %3932 = vst.msk [vmem:[%s210 + $0x20] sm:$0xf] %vm3923, %v3859
      %3933 = vst.msk [vmem:[%s210 + $0x24] sm:$0xf] %vm3923, %v3860
      %3934 = vst.msk [vmem:[%s210 + $0x28] sm:$0xf] %vm3923, %v3861
      %3935 = vst.msk [vmem:[%s210 + $0x2c] sm:$0xf] %vm3923, %v3862
      %3936 = vst.msk [vmem:[%s210 + $0x30] sm:$0xf] %vm3923, %v3863
      %3937 = vst.msk [vmem:[%s210 + $0x34] sm:$0xf] %vm3923, %v3864
      %3938 = vst.msk [vmem:[%s210 + $0x38] sm:$0xf] %vm3923, %v3865
      %3939 = vst.msk [vmem:[%s210 + $0x3c] sm:$0xf] %vm3923, %v3866
      %3940 = vst.msk [vmem:[%s210 + $0x40] sm:$0xf] %vm3923, %v3867
      %3941 = vst.msk [vmem:[%s210 + $0x44] sm:$0xf] %vm3923, %v3868
      %3942 = vst.msk [vmem:[%s210 + $0x48] sm:$0xf] %vm3923, %v3869
      %3943 = vst.msk [vmem:[%s210 + $0x4c] sm:$0xf] %vm3923, %v3870
      %3944 = vst.msk [vmem:[%s210 + $0x50] sm:$0xf] %vm3923, %v3871
      %3945 = vst.msk [vmem:[%s210 + $0x54] sm:$0xf] %vm3923, %v3872
      %3946 = vst.msk [vmem:[%s210 + $0x58] sm:$0xf] %vm3923, %v3873
      %3947 = vst.msk [vmem:[%s210 + $0x5c] sm:$0xf] %vm3923, %v3874
      %3948 = vst.msk [vmem:[%s210 + $0x60] sm:$0xf] %vm3923, %v3875
      %3949 = vst.msk [vmem:[%s210 + $0x64] sm:$0xf] %vm3923, %v3876
      %3950 = vst.msk [vmem:[%s210 + $0x68] sm:$0xf] %vm3923, %v3877
      %3951 = vst.msk [vmem:[%s210 + $0x6c] sm:$0xf] %vm3923, %v3878
      %3952 = vst.msk [vmem:[%s210 + $0x70] sm:$0xf] %vm3923, %v3879
      %3953 = vst.msk [vmem:[%s210 + $0x74] sm:$0xf] %vm3923, %v3880
      %3954 = vst.msk [vmem:[%s210 + $0x78] sm:$0xf] %vm3923, %v3881
      %3955 = vst.msk [vmem:[%s210 + $0x7c] sm:$0xf] %vm3923, %v3882
      %3956 = vst.msk [vmem:[%s210 + $0x80] sm:$0xf] %vm3923, %v3883
      %3957 = vst.msk [vmem:[%s210 + $0x84] sm:$0xf] %vm3923, %v3884
      %3958 = vst.msk [vmem:[%s210 + $0x88] sm:$0xf] %vm3923, %v3885
      %3959 = vst.msk [vmem:[%s210 + $0x8c] sm:$0xf] %vm3923, %v3886
      %p3960 = scmp.lt.s32.totalorder %s16, 1
      %s3961 = scalar_select %p3960, %s16, 1
      %s3962 = smul.addr %s3961, 36
      %s3963 = smul.addr %s3962, 8
      %s3964 = scalar_lea.vmem %s3, %s3963
      %p3965 = scmp.lt.s32.totalorder %s16, 1
      %s3966 = scalar_select %p3965, %s16, 1
      %s3967 = smul.addr %s3966, 36
      %s3968 = smul.addr %s3967, 4
      %s3969 = scalar_lea.vmem %s4, %s3968
      // Predicated region
      $region33: #{tpu_custom_call.1} parent=31 // pred_check
        %p3970 = pneg %p102
      $region34: #{tpu_custom_call.1} parent=31 // pred_check_branch
        %3972 = sbr.rel (%p3970) target = $region36
      $region35: #{tpu_custom_call.1} parent=31 // pred_region
        _
      $region36: #{tpu_custom_call.1} parent=31 // pred_fallthru
        _
      // Predicated region
      $region37: #{tpu_custom_call.1} parent=31 // pred_check
        %p3973 = pneg %p128
      $region38: #{tpu_custom_call.1} parent=31 // pred_check_branch
        %3975 = sbr.rel (%p3973) target = $region40
      $region39: #{tpu_custom_call.1} parent=31 // pred_region
        _
      $region40: #{tpu_custom_call.1} parent=31 // pred_fallthru
        _
    $region32: #{tpu_custom_call.1} parent=5 // pred_fallthru
      _
    %p3976 = scmp.le.s32.totalorder 2, %s11
    // Predicated region
    $region41: #{tpu_custom_call.1} parent=5 // pred_check
      %p3977 = pneg %p3976
    $region42: #{tpu_custom_call.1} parent=5 // pred_check_branch
      %3979 = sbr.rel (%p3977) target = $region44
    $region43: #{tpu_custom_call.1} parent=5 // pred_region
      %s3980 = ssub.s32 %s11, 2
      // Predicated region
      $region45: #{tpu_custom_call.1} parent=43 // pred_check
        %p3981 = pneg %p108
      $region46: #{tpu_custom_call.1} parent=43 // pred_check_branch
        %3983 = sbr.rel (%p3981) target = $region48
      $region47: #{tpu_custom_call.1} parent=43 // pred_region
        %p3984 = scmp.lt.s32.totalorder %s17, 1
        %s3985 = scalar_select %p3984, %s17, 1
        %s3986 = smul.addr %s3985, 36
        %s3987 = smul.addr %s3986, 8
        %s3988 = scalar_lea.vmem %s3, %s3987
      $region48: #{tpu_custom_call.1} parent=43 // pred_fallthru
        _
      // Predicated region
      $region49: #{tpu_custom_call.1} parent=43 // pred_check
        %p3989 = pneg %p134
      $region50: #{tpu_custom_call.1} parent=43 // pred_check_branch
        %3991 = sbr.rel (%p3989) target = $region52
      $region51: #{tpu_custom_call.1} parent=43 // pred_region
        %p3992 = scmp.lt.s32.totalorder %s17, 1
        %s3993 = scalar_select %p3992, %s17, 1
        %s3994 = smul.addr %s3993, 36
        %s3995 = smul.addr %s3994, 4
        %s3996 = scalar_lea.vmem %s4, %s3995
      $region52: #{tpu_custom_call.1} parent=43 // pred_fallthru
        _
    $region44: #{tpu_custom_call.1} parent=5 // pred_fallthru
      _
  $region6: #{tpu_custom_call.1} parent=0 // loop_footer
    %s15 = sadd.s32 1, %s11
  $region7: #{tpu_custom_call.1} parent=0 // loop_footer_branch
    %10 = sbr.rel target = $region3
  $region8: #{tpu_custom_call.1} parent=0 // loop_exit
    _

</llo_original>
